<compile_context>
chip_gen: v5e
topology: v5e:2x2
jax: 0.10.0
libtpu: 0.0.40
codegen_flags: <defaults>
</compile_context>

<pallas_src>
import jax
import jax.numpy as jnp
from jax.experimental import pallas as pl
from jax.experimental.pallas import tpu as pltpu

M = 3            # point dimension
K = 2            # kronecker order k
C = 32           # input_in_channel
OUT = 16         # model out_channel
NEG_SLOPE = 0.2  # relu_args.negative_slope
EPS = 1e-6       # relu_args.eps


def _make_params(key):
    ks = jax.random.split(key, 10)
    s = 1.0 / (C ** 0.5)
    return dict(
        w1=jax.random.normal(ks[0], (C, C), jnp.float32) * s,    # CustomLinear (k=1), no bias (VN)
        d1=jax.random.normal(ks[1], (C, C), jnp.float32) * s,    # VNLeakyReLU direction map (k=1)
        w2=jax.random.normal(ks[2], (C, C), jnp.float32) * s,    # CustomLinear (k=2)
        d2=jax.random.normal(ks[3], (C, C), jnp.float32) * s,    # VNLeakyReLU direction map (k=2)
        m1=jax.random.normal(ks[4], (C, C), jnp.float32) * s,    # MLP linear 1
        b1=jax.random.normal(ks[5], (1, C), jnp.float32) * 0.1,
        m2=jax.random.normal(ks[6], (C, C), jnp.float32) * s,    # MLP linear 2
        b2=jax.random.normal(ks[7], (1, C), jnp.float32) * 0.1,
        m3=jax.random.normal(ks[8], (OUT, C), jnp.float32) * s,  # MLP linear 3
        b3=jax.random.normal(ks[9], (1, OUT), jnp.float32) * 0.1,
    )


def model_forward(x, p, *, tile_n=None):
    """Full Model.forward in one Pallas kernel: 1-D grid over big point tiles,
    per-tile Head compute, mean accumulated in a (1, C) VMEM scratch,
    MLP tail executed on the final grid step."""
    n, m = x.shape
    assert m == M
    if tile_n is None:
        tile_n = n if n <= 2048 else 2048
    assert n % tile_n == 0 and tile_n % 8 == 0

    # ---- host-side weight preprocessing (weight-only, once per call) ----
    s1 = jnp.sum(p['w1'], axis=1)                                  # (C,)  layer-1 linear on constant-channel input
    s1d = p['d1'] @ s1                                             # (C,)  fused layer-1 direction map
    s_cat = jnp.stack([s1, s1d], axis=0)                           # (2, C)
    w2cat_t = jnp.concatenate([p['w2'], p['d2'] @ p['w2']], axis=0).T   # (C, 2C) fused + pre-transposed
    m1t, m2t, m3t = p['m1'].T, p['m2'].T, p['m3'].T                # pre-transposed MLP weights

    def _recip(y):
        # EUP approximate reciprocal + one Newton refinement (≈ f32-accurate).
        r = pl.reciprocal(y, approx=True)
        return r * (2.0 - y * r)

    def kernel(x_ref, s_ref, w2_ref, m1_ref, b1_ref, m2_ref, b2_ref,
               m3_ref, b3_ref, o_ref, acc_ref):
        i = pl.program_id(0)

        @pl.when(i == 0)
        def _():
            acc_ref[...] = jnp.zeros_like(acc_ref)

        xt = x_ref[...]                                  # (tile_n, 3)
        r2 = jnp.sum(xt * xt, axis=1, keepdims=True)     # (tile_n, 1)  sum_a x_a^2

        s1r = s_ref[0:1, :]                              # (1, C)  s1
        s1dr = s_ref[1:2, :]                             # (1, C)  s1d = d1 @ s1

        # ---- Kron #1 -> CustomLinear(w1) -> VNLeakyReLU(d1)  (matmul-free) ----
        # v1[i,a,c] = x[i,a]*s1[c], d1v[i,a,c] = x[i,a]*s1d[c]; the VN
        # reductions over the kron axis reduce to r2 * (channel products).
        dot1 = r2 * (s1r * s1dr)                         # (tile_n, C)
        dnn1 = r2 * (s1dr * s1dr)
        coef1 = dot1 * _recip(dnn1 + EPS)
        q1 = jnp.where(dot1 >= 0.0, s1r, s1r - coef1 * s1dr)
        t = NEG_SLOPE * s1r + (1.0 - NEG_SLOPE) * q1     # (tile_n, C); layer-1 out = x[i,a] * t[i,c]

        # ---- Kron #2 -> CustomLinear(w2) fused with VNLeakyReLU(d2) dir map ----
        # kron-2 tensor = x_a*x_b*t[i,c]  =>  only t needs the matmul.
        gh = jnp.dot(t, w2_ref[...], preferred_element_type=jnp.float32)   # (tile_n, 2C)
        g2 = gh[:, :C]                                   # t @ w2.T
        h2 = gh[:, C:]                                   # t @ (d2@w2).T
        r4 = r2 * r2                                     # sum_{a,b} (x_a x_b)^2
        dot2 = r4 * (g2 * h2)
        dnn2 = r4 * (h2 * h2)
        coef2 = dot2 * _recip(dnn2 + EPS)
        q2 = jnp.where(dot2 >= 0.0, g2, g2 - coef2 * h2)
        u2 = NEG_SLOPE * g2 + (1.0 - NEG_SLOPE) * q2
        # ContractionLayer (k=2): trace over the two M axes -> sum_a x_a^2 * u2
        head = r2 * u2                                   # (tile_n, C)

        # accumulate for the global mean over points (Model: mean(dim=0))
        acc_ref[...] += jnp.sum(head, axis=0, keepdims=True)

        @pl.when(i == pl.num_programs(0) - 1)
        def _():
            x_inv = acc_ref[...] * (1.0 / n)             # (1, C)
            h = jnp.dot(x_inv, m1_ref[...],
                        preferred_element_type=jnp.float32) + b1_ref[...]
            h = jnp.maximum(h, 0.0)
            h = jnp.dot(h, m2_ref[...],
                        preferred_element_type=jnp.float32) + b2_ref[...]
            h = jnp.maximum(h, 0.0)
            o = jnp.dot(h, m3_ref[...],
                        preferred_element_type=jnp.float32) + b3_ref[...]
            o_ref[...] = o.astype(o_ref.dtype)

    def full(shape):
        return pl.BlockSpec(shape, lambda i: (0, 0))

    grid = (n // tile_n,)
    return pl.pallas_call(
        kernel,
        out_shape=jax.ShapeDtypeStruct((1, OUT), jnp.float32),
        grid_spec=pltpu.PrefetchScalarGridSpec(
            num_scalar_prefetch=0,
            grid=grid,
            in_specs=[
                pl.BlockSpec((tile_n, M), lambda i: (i, 0)),   # x tiles over points
                full((2, C)),            # [s1; s1d]
                full((C, 2 * C)),        # fused, pre-transposed layer-2 weights
                full((C, C)), full((1, C)),      # MLP 1
                full((C, C)), full((1, C)),      # MLP 2
                full((C, OUT)), full((1, OUT)),  # MLP 3
            ],
            out_specs=pl.BlockSpec((1, OUT), lambda i: (0, 0)),
            scratch_shapes=[pltpu.VMEM((1, C), jnp.float32)],
        ),
        compiler_params=pltpu.CompilerParams(
            dimension_semantics=("arbitrary",)),   # accumulation across point tiles
    )(x, s_cat, w2cat_t, m1t, p['b1'], m2t, p['b2'], m3t, p['b3'])


def model_reference(x, p):
    """Pure-JAX reference faithfully mirroring the module's Head + mean + MLP."""
    n, _ = x.shape

    def custom_linear(v, w):
        return jnp.einsum('npc,dc->npd', v, w)

    def vn_leaky_relu(v, dw):
        d = custom_linear(v, dw)
        dot = jnp.sum(v * d, axis=1, keepdims=True)
        dnn = jnp.sum(d * d, axis=1, keepdims=True)
        kept = jnp.where(dot >= 0, v, v - (dot / (dnn + EPS)) * d)
        return NEG_SLOPE * v + (1.0 - NEG_SLOPE) * kept

    def kron(xc, v):
        out = xc[:, :, None, :] * v[:, None, :, :]    # (n, M, P, C)
        return out.reshape(n, xc.shape[1] * v.shape[1], v.shape[2])

    xc = x[:, :, None]                                # (n, M, 1)
    v = jnp.ones((n, 1, C), jnp.float32)
    v = kron(xc, v)
    v = custom_linear(v, p['w1'])
    v = vn_leaky_relu(v, p['d1'])
    v = kron(xc, v)
    v = custom_linear(v, p['w2'])
    v = vn_leaky_relu(v, p['d2'])
    head = jnp.einsum('niic->nc', v.reshape(n, M, M, C))   # contraction (trace)
    x_inv = head.mean(axis=0, keepdims=True)
    h = jnp.maximum(x_inv @ p['m1'].T + p['b1'], 0.0)
    h = jnp.maximum(h @ p['m2'].T + p['b2'], 0.0)
    return h @ p['m3'].T + p['b3']


if __name__ == "__main__":
    key = jax.random.PRNGKey(0)
    kx, kp = jax.random.split(key)
    n_points = 1024
    x = jax.random.normal(kx, (n_points, M), jnp.float32)
    params = _make_params(kp)

    # tile_n=512 -> 2 grid steps, exercising the cross-step mean accumulator.
    out = jax.block_until_ready(model_forward(x, params, tile_n=512))
    assert out.shape == (1, OUT)

    with jax.default_matmul_precision("float32"):
        ref = jax.block_until_ready(model_reference(x, params))
    if not jnp.allclose(out, ref, rtol=5e-3, atol=5e-3):
        raise AssertionError(f"mismatch: kernel={out}, ref={ref}")

    print("KERNEL_OK")
</pallas_src>

<mosaic_0001>
module attributes {stable_mosaic.version = 11 : i64} {
  func.func @kernel(%arg0: i32, %arg1: memref<512x3xf32, #tpu.memory_space<vmem>>, %arg2: memref<2x32xf32, #tpu.memory_space<vmem>>, %arg3: memref<32x64xf32, #tpu.memory_space<vmem>>, %arg4: memref<32x32xf32, #tpu.memory_space<vmem>>, %arg5: memref<1x32xf32, #tpu.memory_space<vmem>>, %arg6: memref<32x32xf32, #tpu.memory_space<vmem>>, %arg7: memref<1x32xf32, #tpu.memory_space<vmem>>, %arg8: memref<32x16xf32, #tpu.memory_space<vmem>>, %arg9: memref<1x16xf32, #tpu.memory_space<vmem>>, %arg10: memref<1x16xf32, #tpu.memory_space<vmem>>, %arg11: memref<1x32xf32, #tpu.memory_space<vmem>>) attributes {dimension_semantics = [#tpu.dimension_semantics<arbitrary>], iteration_bounds = array<i64: 2>, scalar_prefetch = 0 : i64, scratch_operands = 1 : i64, tpu.core_type = #tpu.core_type<tc>, window_params = [{transform_indices = @transform_0, window_bounds = array<i64: 512, 3>}, {pipeline_mode = #tpu.pipeline_mode<synchronous>, transform_indices = @transform_1, window_bounds = array<i64: 2, 32>}, {pipeline_mode = #tpu.pipeline_mode<synchronous>, transform_indices = @transform_2, window_bounds = array<i64: 32, 64>}, {pipeline_mode = #tpu.pipeline_mode<synchronous>, transform_indices = @transform_3, window_bounds = array<i64: 32, 32>}, {pipeline_mode = #tpu.pipeline_mode<synchronous>, transform_indices = @transform_4, window_bounds = array<i64: 1, 32>}, {pipeline_mode = #tpu.pipeline_mode<synchronous>, transform_indices = @transform_5, window_bounds = array<i64: 32, 32>}, {pipeline_mode = #tpu.pipeline_mode<synchronous>, transform_indices = @transform_6, window_bounds = array<i64: 1, 32>}, {pipeline_mode = #tpu.pipeline_mode<synchronous>, transform_indices = @transform_7, window_bounds = array<i64: 32, 16>}, {pipeline_mode = #tpu.pipeline_mode<synchronous>, transform_indices = @transform_8, window_bounds = array<i64: 1, 16>}, {pipeline_mode = #tpu.pipeline_mode<synchronous>, transform_indices = @transform_9, window_bounds = array<i64: 1, 16>}]} {
    %c0_i32 = arith.constant 0 : i32
    %0 = arith.cmpi eq, %arg0, %c0_i32 : i32
    %1 = arith.extui %0 : i1 to i32
    %c0_i32_0 = arith.constant 0 : i32
    %2 = arith.cmpi ne, %1, %c0_i32_0 : i32
    scf.if %2 {
      %cst_24 = arith.constant 0.000000e+00 : f32
      %79 = vector.broadcast %cst_24 : f32 to vector<1x32xf32>
      %c0_25 = arith.constant 0 : index
      %c0_26 = arith.constant 0 : index
      %80 = vector.load %arg11[%c0_25, %c0_26] : memref<1x32xf32, #tpu.memory_space<vmem>>, vector<1x32xf32>
      tpu.vector_store %arg11[%c0_25, %c0_26], %79 {strides = array<i32>} : memref<1x32xf32, #tpu.memory_space<vmem>>, vector<1x32xf32>,
    } else {
    }
    %c0 = arith.constant 0 : index
    %c0_1 = arith.constant 0 : index
    %3 = vector.load %arg1[%c0, %c0_1] : memref<512x3xf32, #tpu.memory_space<vmem>>, vector<512x3xf32>
    %4 = arith.mulf %3, %3 : vector<512x3xf32>
    %cst = arith.constant dense<0.000000e+00> : vector<512xf32>
    %5 = vector.multi_reduction <add>, %4, %cst [1] : vector<512x3xf32> to vector<512xf32>
    %6 = vector.shape_cast %5 : vector<512xf32> to vector<512x1xf32>
    %c0_2 = arith.constant 0 : index
    %c0_3 = arith.constant 0 : index
    %7 = vector.load %arg2[%c0_2, %c0_3] : memref<2x32xf32, #tpu.memory_space<vmem>>, vector<1x32xf32>
    %c1 = arith.constant 1 : index
    %c0_4 = arith.constant 0 : index
    %8 = vector.load %arg2[%c1, %c0_4] : memref<2x32xf32, #tpu.memory_space<vmem>>, vector<1x32xf32>
    %9 = arith.mulf %7, %8 : vector<1x32xf32>
    %10 = vector.broadcast %6 : vector<512x1xf32> to vector<512x32xf32>
    %11 = vector.broadcast %9 : vector<1x32xf32> to vector<512x32xf32>
    %12 = arith.mulf %10, %11 : vector<512x32xf32>
    %13 = arith.mulf %8, %8 : vector<1x32xf32>
    %14 = vector.broadcast %6 : vector<512x1xf32> to vector<512x32xf32>
    %15 = vector.broadcast %13 : vector<1x32xf32> to vector<512x32xf32>
    %16 = arith.mulf %14, %15 : vector<512x32xf32>
    %cst_5 = arith.constant 9.99999997E-7 : f32
    %17 = vector.broadcast %cst_5 : f32 to vector<512x32xf32>
    %18 = arith.addf %16, %17 : vector<512x32xf32>
    %19 = tpu.reciprocal %18 {approx = true} : vector<512x32xf32> -> vector<512x32xf32>
    %20 = arith.mulf %18, %19 : vector<512x32xf32>
    %cst_6 = arith.constant 2.000000e+00 : f32
    %21 = vector.broadcast %cst_6 : f32 to vector<512x32xf32>
    %22 = arith.subf %21, %20 : vector<512x32xf32>
    %23 = arith.mulf %19, %22 : vector<512x32xf32>
    %24 = arith.mulf %12, %23 : vector<512x32xf32>
    %cst_7 = arith.constant 0.000000e+00 : f32
    %25 = vector.broadcast %cst_7 : f32 to vector<512x32xf32>
    %26 = arith.cmpf oge, %12, %25 : vector<512x32xf32>
    %27 = vector.broadcast %8 : vector<1x32xf32> to vector<512x32xf32>
    %28 = arith.mulf %24, %27 : vector<512x32xf32>
    %29 = vector.broadcast %7 : vector<1x32xf32> to vector<512x32xf32>
    %30 = arith.subf %29, %28 : vector<512x32xf32>
    %31 = vector.shape_cast %7 : vector<1x32xf32> to vector<1x32xf32>
    %32 = vector.broadcast %31 : vector<1x32xf32> to vector<512x32xf32>
    %33 = arith.select %26, %32, %30 : vector<512x32xi1>, vector<512x32xf32>
    %cst_8 = arith.constant 2.000000e-01 : f32
    %34 = vector.broadcast %cst_8 : f32 to vector<1x32xf32>
    %35 = arith.mulf %34, %7 : vector<1x32xf32>
    %cst_9 = arith.constant 8.000000e-01 : f32
    %36 = vector.broadcast %cst_9 : f32 to vector<512x32xf32>
    %37 = arith.mulf %36, %33 : vector<512x32xf32>
    %38 = vector.broadcast %35 : vector<1x32xf32> to vector<512x32xf32>
    %39 = arith.addf %38, %37 : vector<512x32xf32>
    %c0_10 = arith.constant 0 : index
    %c0_11 = arith.constant 0 : index
    %40 = vector.load %arg3[%c0_10, %c0_11] : memref<32x64xf32, #tpu.memory_space<vmem>>, vector<32x64xf32>
    %cst_12 = arith.constant dense<0.000000e+00> : vector<512x64xf32>
    %41 = tpu.matmul %39, %40, %cst_12 {dimension_numbers = #tpu.dot_dimension_numbers<[1], [0], [0], [1], [0, 0, 1, 1], [], []>} : vector<512x32xf32>, vector<32x64xf32>, vector<512x64xf32> -> vector<512x64xf32>
    %42 = vector.extract_strided_slice %41 {offsets = [0, 0], sizes = [512, 32], strides = [1, 1]} : vector<512x64xf32> to vector<512x32xf32>
    %43 = vector.extract_strided_slice %41 {offsets = [0, 32], sizes = [512, 32], strides = [1, 1]} : vector<512x64xf32> to vector<512x32xf32>
    %44 = arith.mulf %6, %6 : vector<512x1xf32>
    %45 = arith.mulf %42, %43 : vector<512x32xf32>
    %46 = vector.broadcast %44 : vector<512x1xf32> to vector<512x32xf32>
    %47 = arith.mulf %46, %45 : vector<512x32xf32>
    %48 = arith.mulf %43, %43 : vector<512x32xf32>
    %49 = vector.broadcast %44 : vector<512x1xf32> to vector<512x32xf32>
    %50 = arith.mulf %49, %48 : vector<512x32xf32>
    %cst_13 = arith.constant 9.99999997E-7 : f32
    %51 = vector.broadcast %cst_13 : f32 to vector<512x32xf32>
    %52 = arith.addf %50, %51 : vector<512x32xf32>
    %53 = tpu.reciprocal %52 {approx = true} : vector<512x32xf32> -> vector<512x32xf32>
    %54 = arith.mulf %52, %53 : vector<512x32xf32>
    %cst_14 = arith.constant 2.000000e+00 : f32
    %55 = vector.broadcast %cst_14 : f32 to vector<512x32xf32>
    %56 = arith.subf %55, %54 : vector<512x32xf32>
    %57 = arith.mulf %53, %56 : vector<512x32xf32>
    %58 = arith.mulf %47, %57 : vector<512x32xf32>
    %cst_15 = arith.constant 0.000000e+00 : f32
    %59 = vector.broadcast %cst_15 : f32 to vector<512x32xf32>
    %60 = arith.cmpf oge, %47, %59 : vector<512x32xf32>
    %61 = arith.mulf %58, %43 : vector<512x32xf32>
    %62 = arith.subf %42, %61 : vector<512x32xf32>
    %63 = arith.select %60, %42, %62 : vector<512x32xi1>, vector<512x32xf32>
    %cst_16 = arith.constant 2.000000e-01 : f32
    %64 = vector.broadcast %cst_16 : f32 to vector<512x32xf32>
    %65 = arith.mulf %64, %42 : vector<512x32xf32>
    %cst_17 = arith.constant 8.000000e-01 : f32
    %66 = vector.broadcast %cst_17 : f32 to vector<512x32xf32>
    %67 = arith.mulf %66, %63 : vector<512x32xf32>
    %68 = arith.addf %65, %67 : vector<512x32xf32>
    %69 = vector.broadcast %6 : vector<512x1xf32> to vector<512x32xf32>
    %70 = arith.mulf %69, %68 : vector<512x32xf32>
    %c0_18 = arith.constant 0 : index
    %c0_19 = arith.constant 0 : index
    %71 = vector.load %arg11[%c0_18, %c0_19] : memref<1x32xf32, #tpu.memory_space<vmem>>, vector<1x32xf32>
    %cst_20 = arith.constant dense<0.000000e+00> : vector<32xf32>
    %72 = vector.multi_reduction <add>, %70, %cst_20 [0] : vector<512x32xf32> to vector<32xf32>
    %73 = vector.shape_cast %72 : vector<32xf32> to vector<1x32xf32>
    %74 = arith.addf %71, %73 : vector<1x32xf32>
    %c0_21 = arith.constant 0 : index
    %c0_22 = arith.constant 0 : index
    %75 = vector.load %arg11[%c0_21, %c0_22] : memref<1x32xf32, #tpu.memory_space<vmem>>, vector<1x32xf32>
    tpu.vector_store %arg11[%c0_21, %c0_22], %74 {strides = array<i32>} : memref<1x32xf32, #tpu.memory_space<vmem>>, vector<1x32xf32>,
    %c1_i32 = arith.constant 1 : i32
    %76 = arith.cmpi eq, %arg0, %c1_i32 : i32
    %77 = arith.extui %76 : i1 to i32
    %c0_i32_23 = arith.constant 0 : i32
    %78 = arith.cmpi ne, %77, %c0_i32_23 : i32
    scf.if %78 {
      %c0_24 = arith.constant 0 : index
      %c0_25 = arith.constant 0 : index
      %79 = vector.load %arg11[%c0_24, %c0_25] : memref<1x32xf32, #tpu.memory_space<vmem>>, vector<1x32xf32>
      %cst_26 = arith.constant 9.765625E-4 : f32
      %80 = vector.broadcast %cst_26 : f32 to vector<1x32xf32>
      %81 = arith.mulf %79, %80 : vector<1x32xf32>
      %c0_27 = arith.constant 0 : index
      %c0_28 = arith.constant 0 : index
      %82 = vector.load %arg4[%c0_27, %c0_28] : memref<32x32xf32, #tpu.memory_space<vmem>>, vector<32x32xf32>
      %cst_29 = arith.constant dense<0.000000e+00> : vector<1x32xf32>
      %83 = tpu.matmul %81, %82, %cst_29 {dimension_numbers = #tpu.dot_dimension_numbers<[1], [0], [0], [1], [0, 0, 1, 1], [], []>} : vector<1x32xf32>, vector<32x32xf32>, vector<1x32xf32> -> vector<1x32xf32>
      %c0_30 = arith.constant 0 : index
      %c0_31 = arith.constant 0 : index
      %84 = vector.load %arg5[%c0_30, %c0_31] : memref<1x32xf32, #tpu.memory_space<vmem>>, vector<1x32xf32>
      %85 = arith.addf %83, %84 : vector<1x32xf32>
      %cst_32 = arith.constant 0.000000e+00 : f32
      %86 = vector.broadcast %cst_32 : f32 to vector<1x32xf32>
      %87 = arith.maximumf %85, %86 : vector<1x32xf32>
      %c0_33 = arith.constant 0 : index
      %c0_34 = arith.constant 0 : index
      %88 = vector.load %arg6[%c0_33, %c0_34] : memref<32x32xf32, #tpu.memory_space<vmem>>, vector<32x32xf32>
      %cst_35 = arith.constant dense<0.000000e+00> : vector<1x32xf32>
      %89 = tpu.matmul %87, %88, %cst_35 {dimension_numbers = #tpu.dot_dimension_numbers<[1], [0], [0], [1], [0, 0, 1, 1], [], []>} : vector<1x32xf32>, vector<32x32xf32>, vector<1x32xf32> -> vector<1x32xf32>
      %c0_36 = arith.constant 0 : index
      %c0_37 = arith.constant 0 : index
      %90 = vector.load %arg7[%c0_36, %c0_37] : memref<1x32xf32, #tpu.memory_space<vmem>>, vector<1x32xf32>
      %91 = arith.addf %89, %90 : vector<1x32xf32>
      %cst_38 = arith.constant 0.000000e+00 : f32
      %92 = vector.broadcast %cst_38 : f32 to vector<1x32xf32>
      %93 = arith.maximumf %91, %92 : vector<1x32xf32>
      %c0_39 = arith.constant 0 : index
      %c0_40 = arith.constant 0 : index
      %94 = vector.load %arg8[%c0_39, %c0_40] : memref<32x16xf32, #tpu.memory_space<vmem>>, vector<32x16xf32>
      %cst_41 = arith.constant dense<0.000000e+00> : vector<1x16xf32>
      %95 = tpu.matmul %93, %94, %cst_41 {dimension_numbers = #tpu.dot_dimension_numbers<[1], [0], [0], [1], [0, 0, 1, 1], [], []>} : vector<1x32xf32>, vector<32x16xf32>, vector<1x16xf32> -> vector<1x16xf32>
      %c0_42 = arith.constant 0 : index
      %c0_43 = arith.constant 0 : index
      %96 = vector.load %arg9[%c0_42, %c0_43] : memref<1x16xf32, #tpu.memory_space<vmem>>, vector<1x16xf32>
      %97 = arith.addf %95, %96 : vector<1x16xf32>
      %c0_44 = arith.constant 0 : index
      %c0_45 = arith.constant 0 : index
      %98 = vector.load %arg10[%c0_44, %c0_45] : memref<1x16xf32, #tpu.memory_space<vmem>>, vector<1x16xf32>
      tpu.vector_store %arg10[%c0_44, %c0_45], %97 {strides = array<i32>} : memref<1x16xf32, #tpu.memory_space<vmem>>, vector<1x16xf32>,
    } else {
    }
    return
  }
  func.func @transform_0(%arg0: i32) -> (i32, i32) {
    %c0_i32 = arith.constant 0 : i32
    %c0_i32_0 = arith.constant 0 : i32
    return %arg0, %c0_i32 : i32, i32
  }
  func.func @transform_1(%arg0: i32) -> (i32, i32) {
    %c0_i32 = arith.constant 0 : i32
    %c0_i32_0 = arith.constant 0 : i32
    %c0_i32_1 = arith.constant 0 : i32
    return %c0_i32, %c0_i32_0 : i32, i32
  }
  func.func @transform_2(%arg0: i32) -> (i32, i32) {
    %c0_i32 = arith.constant 0 : i32
    %c0_i32_0 = arith.constant 0 : i32
    %c0_i32_1 = arith.constant 0 : i32
    return %c0_i32, %c0_i32_0 : i32, i32
  }
  func.func @transform_3(%arg0: i32) -> (i32, i32) {
    %c0_i32 = arith.constant 0 : i32
    %c0_i32_0 = arith.constant 0 : i32
    %c0_i32_1 = arith.constant 0 : i32
    return %c0_i32, %c0_i32_0 : i32, i32
  }
  func.func @transform_4(%arg0: i32) -> (i32, i32) {
    %c0_i32 = arith.constant 0 : i32
    %c0_i32_0 = arith.constant 0 : i32
    %c0_i32_1 = arith.constant 0 : i32
    return %c0_i32, %c0_i32_0 : i32, i32
  }
  func.func @transform_5(%arg0: i32) -> (i32, i32) {
    %c0_i32 = arith.constant 0 : i32
    %c0_i32_0 = arith.constant 0 : i32
    %c0_i32_1 = arith.constant 0 : i32
    return %c0_i32, %c0_i32_0 : i32, i32
  }
  func.func @transform_6(%arg0: i32) -> (i32, i32) {
    %c0_i32 = arith.constant 0 : i32
    %c0_i32_0 = arith.constant 0 : i32
    %c0_i32_1 = arith.constant 0 : i32
    return %c0_i32, %c0_i32_0 : i32, i32
  }
  func.func @transform_7(%arg0: i32) -> (i32, i32) {
    %c0_i32 = arith.constant 0 : i32
    %c0_i32_0 = arith.constant 0 : i32
    %c0_i32_1 = arith.constant 0 : i32
    return %c0_i32, %c0_i32_0 : i32, i32
  }
  func.func @transform_8(%arg0: i32) -> (i32, i32) {
    %c0_i32 = arith.constant 0 : i32
    %c0_i32_0 = arith.constant 0 : i32
    %c0_i32_1 = arith.constant 0 : i32
    return %c0_i32, %c0_i32_0 : i32, i32
  }
  func.func @transform_9(%arg0: i32) -> (i32, i32) {
    %c0_i32 = arith.constant 0 : i32
    %c0_i32_0 = arith.constant 0 : i32
    %c0_i32_1 = arith.constant 0 : i32
    return %c0_i32, %c0_i32_0 : i32, i32
  }
}

</mosaic_0001>

<llo_original>
// kernel: tpu_custom_call.1
$region0: #{tpu_custom_call.1}
  #allocation0 [shape = 'u32[]', space=smem, size = 0x4, offset = 0x4, fixed_abs, tag = 'smem constant byte address 0x4 - core index']
  #allocation1 [shape = 'u32[72,128]{1,0:T(1,128)}', space=vmem, size = 0x9000, scoped, tag = 'internal scratch']
  #allocation2 [shape = 'f32[1,32]{1,0:T(1,128)}', space=vmem, size = 0x200, scoped, tag = 'scratch operand']
  %s0 = inlined_call_operand.vmem [shape: f32[1024,3], index: 0, kind: input, shape index: {}]
  %s1 = inlined_call_operand.vmem [shape: f32[2,32], index: 1, kind: input, shape index: {}]
  %s2 = inlined_call_operand.vmem [shape: f32[32,64], index: 2, kind: input, shape index: {}]
  %s3 = inlined_call_operand.vmem [shape: f32[32,32], index: 3, kind: input, shape index: {}]
  %s4 = inlined_call_operand.vmem [shape: f32[1,32], index: 4, kind: input, shape index: {}]
  %s5 = inlined_call_operand.vmem [shape: f32[32,32], index: 5, kind: input, shape index: {}]
  %s6 = inlined_call_operand.vmem [shape: f32[1,32], index: 6, kind: input, shape index: {}]
  %s7 = inlined_call_operand.vmem [shape: f32[32,16], index: 7, kind: input, shape index: {}]
  %s8 = inlined_call_operand.vmem [shape: f32[1,16], index: 8, kind: input, shape index: {}]
  %s9 = inlined_call_operand.hbm [shape: f32[1,16], index: 9, kind: output, shape index: {}]
  %s10 = sld [smem:[#allocation0]]
  $region77: #{tpu_custom_call.1} parent=0
    _
  %s12 = ssub.s32 1, %s10
  %s13 = scalar_select 0, %s12, %s10
  $region1: #{tpu_custom_call.1} parent=0
    #allocation3 [shape = 'u8[512]{0}', space=vmem, size = 0x400, scoped, tag = 'output window, operand 0, single buffered']
    #allocation4 [shape = 's32[2]{0}', space=sflag, size = 0x8, scoped, tag = 'scoped memory for tpu_custom_call.1']
    %14 = vsyncpa [#allocation4], 0
    loop: start=0, step=1, limit=4
    $region2: #{tpu_custom_call.1} parent=1 // loop_pre_header
      _
    $region3: #{tpu_custom_call.1} parent=1 // loop_header
      %s16 = sphi 0, %s20
      %p17 = scmp.ge.s32.totalorder %s16, 4
      %s26 = sphi 0, %s28
      %s29 = sphi 0, %s26
      %s30 = sphi 0, %s29
      %s46 = sphi 0, %s30
      %s50 = sphi 0, %s50
      %s52 = sphi 0, %s50
      %s53 = sphi 0, %s52
      %s67 = sphi 0, %s53
      %s71 = sphi 0, %s71
      %s73 = sphi 0, %s71
      %s74 = sphi 0, %s73
      %s88 = sphi 0, %s74
      %s92 = sphi 0, %s92
      %s94 = sphi 0, %s92
      %s95 = sphi 0, %s94
      %s109 = sphi 0, %s95
      %s113 = sphi 0, %s113
      %s115 = sphi 0, %s113
      %s116 = sphi 0, %s115
      %s130 = sphi 0, %s116
      %s134 = sphi 0, %s134
      %s136 = sphi 0, %s134
      %s137 = sphi 0, %s136
      %s151 = sphi 0, %s137
      %s155 = sphi 0, %s155
      %s157 = sphi 0, %s155
      %s158 = sphi 0, %s157
      %s172 = sphi 0, %s158
      %s176 = sphi 0, %s176
      %s178 = sphi 0, %s176
      %s179 = sphi 0, %s178
      %s193 = sphi 0, %s179
      %s197 = sphi 0, %s197
      %s199 = sphi 0, %s197
      %s200 = sphi 0, %s199
      %s214 = sphi 0, %s200
      %s218 = sphi 0, %s218
      %s220 = sphi 0, %s218
      %s221 = sphi 0, %s220
      %s235 = sphi 0, %s221
    $region4: #{tpu_custom_call.1} parent=1 // loop_header_branch
      %19 = sbr.rel (%p17) target = $region8
    $region5: #{tpu_custom_call.1} parent=1 // loop_body
      %s21 = ssub.s32 %s16, 1
      %s22 = ssub.s32 %s16, 2
      %s23 = sadd.s32 %s16, 1
      %s24 = ssub.s32 %s16, %s23
      %p25 = scmp.eq.s32.totalorder %s24, 0
      %s27 = sadd.s32 %s26, 1
      %s28 = scalar_select %p25, %s26, %s27
      %p31 = pneg %p25
      %p32 = scmp.eq.s32.totalorder %s16, 1
      %p33 = por %p31, %p32
      %p34 = scmp.ne.s32.totalorder %s26, %s29
      %p35 = scmp.eq.s32.totalorder %s16, 0
      %p36 = por %p34, %p35
      %p37 = scmp.ne.s32.totalorder %s26, %s29
      %p38 = scmp.eq.s32.totalorder %s21, 1
      %p39 = por %p37, %p38
      %p40 = scmp.ne.s32.totalorder %s29, %s30
      %p41 = scmp.eq.s32.totalorder %s21, 0
      %p42 = por %p40, %p41
      %p43 = scmp.ne.s32.totalorder %s29, %s30
      %p44 = scmp.eq.s32.totalorder %s22, 1
      %p45 = por %p43, %p44
      %p47 = scmp.ne.s32.totalorder %s30, %s46
      %p48 = scmp.eq.s32.totalorder %s22, 0
      %p49 = por %p47, %p48
      %s51 = sadd.s32 %s50, 1
      %p54 = scmp.eq.s32.totalorder %s16, 1
      %p55 = scmp.ne.s32.totalorder %s50, %s52
      %p56 = scmp.eq.s32.totalorder %s16, 0
      %p57 = por %p55, %p56
      %p58 = scmp.ne.s32.totalorder %s50, %s52
      %p59 = scmp.eq.s32.totalorder %s21, 1
      %p60 = por %p58, %p59
      %p61 = scmp.ne.s32.totalorder %s52, %s53
      %p62 = scmp.eq.s32.totalorder %s21, 0
      %p63 = por %p61, %p62
      %p64 = scmp.ne.s32.totalorder %s52, %s53
      %p65 = scmp.eq.s32.totalorder %s22, 1
      %p66 = por %p64, %p65
      %p68 = scmp.ne.s32.totalorder %s53, %s67
      %p69 = scmp.eq.s32.totalorder %s22, 0
      %p70 = por %p68, %p69
      %s72 = sadd.s32 %s71, 1
      %p75 = scmp.eq.s32.totalorder %s16, 1
      %p76 = scmp.ne.s32.totalorder %s71, %s73
      %p77 = scmp.eq.s32.totalorder %s16, 0
      %p78 = por %p76, %p77
      %p79 = scmp.ne.s32.totalorder %s71, %s73
      %p80 = scmp.eq.s32.totalorder %s21, 1
      %p81 = por %p79, %p80
      %p82 = scmp.ne.s32.totalorder %s73, %s74
      %p83 = scmp.eq.s32.totalorder %s21, 0
      %p84 = por %p82, %p83
      %p85 = scmp.ne.s32.totalorder %s73, %s74
      %p86 = scmp.eq.s32.totalorder %s22, 1
      %p87 = por %p85, %p86
      %p89 = scmp.ne.s32.totalorder %s74, %s88
      %p90 = scmp.eq.s32.totalorder %s22, 0
      %p91 = por %p89, %p90
      %s93 = sadd.s32 %s92, 1
      %p96 = scmp.eq.s32.totalorder %s16, 1
      %p97 = scmp.ne.s32.totalorder %s92, %s94
      %p98 = scmp.eq.s32.totalorder %s16, 0
      %p99 = por %p97, %p98
      %p100 = scmp.ne.s32.totalorder %s92, %s94
      %p101 = scmp.eq.s32.totalorder %s21, 1
      %p102 = por %p100, %p101
      %p103 = scmp.ne.s32.totalorder %s94, %s95
      %p104 = scmp.eq.s32.totalorder %s21, 0
      %p105 = por %p103, %p104
      %p106 = scmp.ne.s32.totalorder %s94, %s95
      %p107 = scmp.eq.s32.totalorder %s22, 1
      %p108 = por %p106, %p107
      %p110 = scmp.ne.s32.totalorder %s95, %s109
      %p111 = scmp.eq.s32.totalorder %s22, 0
      %p112 = por %p110, %p111
      %s114 = sadd.s32 %s113, 1
      %p117 = scmp.eq.s32.totalorder %s16, 1
      %p118 = scmp.ne.s32.totalorder %s113, %s115
      %p119 = scmp.eq.s32.totalorder %s16, 0
      %p120 = por %p118, %p119
      %p121 = scmp.ne.s32.totalorder %s113, %s115
      %p122 = scmp.eq.s32.totalorder %s21, 1
      %p123 = por %p121, %p122
      %p124 = scmp.ne.s32.totalorder %s115, %s116
      %p125 = scmp.eq.s32.totalorder %s21, 0
      %p126 = por %p124, %p125
      %p127 = scmp.ne.s32.totalorder %s115, %s116
      %p128 = scmp.eq.s32.totalorder %s22, 1
      %p129 = por %p127, %p128
      %p131 = scmp.ne.s32.totalorder %s116, %s130
      %p132 = scmp.eq.s32.totalorder %s22, 0
      %p133 = por %p131, %p132
      %s135 = sadd.s32 %s134, 1
      %p138 = scmp.eq.s32.totalorder %s16, 1
      %p139 = scmp.ne.s32.totalorder %s134, %s136
      %p140 = scmp.eq.s32.totalorder %s16, 0
      %p141 = por %p139, %p140
      %p142 = scmp.ne.s32.totalorder %s134, %s136
      %p143 = scmp.eq.s32.totalorder %s21, 1
      %p144 = por %p142, %p143
      %p145 = scmp.ne.s32.totalorder %s136, %s137
      %p146 = scmp.eq.s32.totalorder %s21, 0
      %p147 = por %p145, %p146
      %p148 = scmp.ne.s32.totalorder %s136, %s137
      %p149 = scmp.eq.s32.totalorder %s22, 1
      %p150 = por %p148, %p149
      %p152 = scmp.ne.s32.totalorder %s137, %s151
      %p153 = scmp.eq.s32.totalorder %s22, 0
      %p154 = por %p152, %p153
      %s156 = sadd.s32 %s155, 1
      %p159 = scmp.eq.s32.totalorder %s16, 1
      %p160 = scmp.ne.s32.totalorder %s155, %s157
      %p161 = scmp.eq.s32.totalorder %s16, 0
      %p162 = por %p160, %p161
      %p163 = scmp.ne.s32.totalorder %s155, %s157
      %p164 = scmp.eq.s32.totalorder %s21, 1
      %p165 = por %p163, %p164
      %p166 = scmp.ne.s32.totalorder %s157, %s158
      %p167 = scmp.eq.s32.totalorder %s21, 0
      %p168 = por %p166, %p167
      %p169 = scmp.ne.s32.totalorder %s157, %s158
      %p170 = scmp.eq.s32.totalorder %s22, 1
      %p171 = por %p169, %p170
      %p173 = scmp.ne.s32.totalorder %s158, %s172
      %p174 = scmp.eq.s32.totalorder %s22, 0
      %p175 = por %p173, %p174
      %s177 = sadd.s32 %s176, 1
      %p180 = scmp.eq.s32.totalorder %s16, 1
      %p181 = scmp.ne.s32.totalorder %s176, %s178
      %p182 = scmp.eq.s32.totalorder %s16, 0
      %p183 = por %p181, %p182
      %p184 = scmp.ne.s32.totalorder %s176, %s178
      %p185 = scmp.eq.s32.totalorder %s21, 1
      %p186 = por %p184, %p185
      %p187 = scmp.ne.s32.totalorder %s178, %s179
      %p188 = scmp.eq.s32.totalorder %s21, 0
      %p189 = por %p187, %p188
      %p190 = scmp.ne.s32.totalorder %s178, %s179
      %p191 = scmp.eq.s32.totalorder %s22, 1
      %p192 = por %p190, %p191
      %p194 = scmp.ne.s32.totalorder %s179, %s193
      %p195 = scmp.eq.s32.totalorder %s22, 0
      %p196 = por %p194, %p195
      %s198 = sadd.s32 %s197, 1
      %p201 = scmp.eq.s32.totalorder %s16, 1
      %p202 = scmp.ne.s32.totalorder %s197, %s199
      %p203 = scmp.eq.s32.totalorder %s16, 0
      %p204 = por %p202, %p203
      %p205 = scmp.ne.s32.totalorder %s197, %s199
      %p206 = scmp.eq.s32.totalorder %s21, 1
      %p207 = por %p205, %p206
      %p208 = scmp.ne.s32.totalorder %s199, %s200
      %p209 = scmp.eq.s32.totalorder %s21, 0
      %p210 = por %p208, %p209
      %p211 = scmp.ne.s32.totalorder %s199, %s200
      %p212 = scmp.eq.s32.totalorder %s22, 1
      %p213 = por %p211, %p212
      %p215 = scmp.ne.s32.totalorder %s200, %s214
      %p216 = scmp.eq.s32.totalorder %s22, 0
      %p217 = por %p215, %p216
      %s219 = sadd.s32 %s218, 1
      %p222 = scmp.eq.s32.totalorder %s16, 1
      %p223 = scmp.ne.s32.totalorder %s218, %s220
      %p224 = scmp.eq.s32.totalorder %s16, 0
      %p225 = por %p223, %p224
      %p226 = scmp.ne.s32.totalorder %s218, %s220
      %p227 = scmp.eq.s32.totalorder %s21, 1
      %p228 = por %p226, %p227
      %p229 = scmp.ne.s32.totalorder %s220, %s221
      %p230 = scmp.eq.s32.totalorder %s21, 0
      %p231 = por %p229, %p230
      %p232 = scmp.ne.s32.totalorder %s220, %s221
      %p233 = scmp.eq.s32.totalorder %s22, 1
      %p234 = por %p232, %p233
      %p236 = scmp.ne.s32.totalorder %s221, %s235
      %p237 = scmp.eq.s32.totalorder %s22, 0
      %p238 = por %p236, %p237
      %p239 = scmp.le.s32.totalorder 1, %s16
      %p240 = scmp.lt.s32.totalorder %s16, 3
      %p241 = pnand %p239, %p240
      %p242 = pneg %p241
      // Predicated region
      $region9: #{tpu_custom_call.1} parent=5 // pred_check
        _
      $region10: #{tpu_custom_call.1} parent=5 // pred_check_branch
        %244 = sbr.rel (%p241) target = $region12
      $region11: #{tpu_custom_call.1} parent=5 // pred_region
        %s245 = ssub.s32 %s16, 1
        // Predicated region
        $region13: #{tpu_custom_call.1} parent=11 // pred_check
          %p246 = pneg %p63
        $region14: #{tpu_custom_call.1} parent=11 // pred_check_branch
          %248 = sbr.rel (%p246) target = $region16
        $region15: #{tpu_custom_call.1} parent=11 // pred_region
          _
        $region16: #{tpu_custom_call.1} parent=11 // pred_fallthru
          _
        // Predicated region
        $region17: #{tpu_custom_call.1} parent=11 // pred_check
          %p249 = pneg %p84
        $region18: #{tpu_custom_call.1} parent=11 // pred_check_branch
          %251 = sbr.rel (%p249) target = $region20
        $region19: #{tpu_custom_call.1} parent=11 // pred_region
          _
        $region20: #{tpu_custom_call.1} parent=11 // pred_fallthru
          _
        // Predicated region
        $region21: #{tpu_custom_call.1} parent=11 // pred_check
          %p252 = pneg %p105
        $region22: #{tpu_custom_call.1} parent=11 // pred_check_branch
          %254 = sbr.rel (%p252) target = $region24
        $region23: #{tpu_custom_call.1} parent=11 // pred_region
          _
        $region24: #{tpu_custom_call.1} parent=11 // pred_fallthru
          _
        // Predicated region
        $region25: #{tpu_custom_call.1} parent=11 // pred_check
          %p255 = pneg %p126
        $region26: #{tpu_custom_call.1} parent=11 // pred_check_branch
          %257 = sbr.rel (%p255) target = $region28
        $region27: #{tpu_custom_call.1} parent=11 // pred_region
          _
        $region28: #{tpu_custom_call.1} parent=11 // pred_fallthru
          _
        // Predicated region
        $region29: #{tpu_custom_call.1} parent=11 // pred_check
          %p258 = pneg %p147
        $region30: #{tpu_custom_call.1} parent=11 // pred_check_branch
          %260 = sbr.rel (%p258) target = $region32
        $region31: #{tpu_custom_call.1} parent=11 // pred_region
          _
        $region32: #{tpu_custom_call.1} parent=11 // pred_fallthru
          _
        // Predicated region
        $region33: #{tpu_custom_call.1} parent=11 // pred_check
          %p261 = pneg %p168
        $region34: #{tpu_custom_call.1} parent=11 // pred_check_branch
          %263 = sbr.rel (%p261) target = $region36
        $region35: #{tpu_custom_call.1} parent=11 // pred_region
          _
        $region36: #{tpu_custom_call.1} parent=11 // pred_fallthru
          _
        // Predicated region
        $region37: #{tpu_custom_call.1} parent=11 // pred_check
          %p264 = pneg %p189
        $region38: #{tpu_custom_call.1} parent=11 // pred_check_branch
          %266 = sbr.rel (%p264) target = $region40
        $region39: #{tpu_custom_call.1} parent=11 // pred_region
          _
        $region40: #{tpu_custom_call.1} parent=11 // pred_fallthru
          _
        // Predicated region
        $region41: #{tpu_custom_call.1} parent=11 // pred_check
          %p267 = pneg %p210
        $region42: #{tpu_custom_call.1} parent=11 // pred_check_branch
          %269 = sbr.rel (%p267) target = $region44
        $region43: #{tpu_custom_call.1} parent=11 // pred_region
          _
        $region44: #{tpu_custom_call.1} parent=11 // pred_fallthru
          _
      $region12: #{tpu_custom_call.1} parent=5 // pred_fallthru
        _
      %p270 = scmp.lt.s32.totalorder %s16, 2
      // Predicated region
      $region45: #{tpu_custom_call.1} parent=5 // pred_check
        %p271 = pneg %p270
      $region46: #{tpu_custom_call.1} parent=5 // pred_check_branch
        %273 = sbr.rel (%p271) target = $region48
      $region47: #{tpu_custom_call.1} parent=5 // pred_region
        // Predicated region
        $region49: #{tpu_custom_call.1} parent=47 // pred_check
          %p274 = pneg %p36
        $region50: #{tpu_custom_call.1} parent=47 // pred_check_branch
          %276 = sbr.rel (%p274) target = $region52
        $region51: #{tpu_custom_call.1} parent=47 // pred_region
          %s277 = smul.u32 64, %s16
          %p278 = scmp.lt.s32.totalorder %s277, 127
          %s279 = scalar_select %p278, %s277, 127
          %s280 = smul.addr %s279, 8
          %s281 = scalar_lea.vmem %s0, %s280
          %s282 = smul.u32 64, %s16
        $region52: #{tpu_custom_call.1} parent=47 // pred_fallthru
          _
      $region48: #{tpu_custom_call.1} parent=5 // pred_fallthru
        _
      %p283 = scmp.le.s32.totalorder 1, %s16
      %p284 = scmp.lt.s32.totalorder %s16, 3
      %p285 = pnand %p283, %p284
      %p286 = pneg %p285
      // Predicated region
      $region53: #{tpu_custom_call.1} parent=5 // pred_check
        _
      $region54: #{tpu_custom_call.1} parent=5 // pred_check_branch
        %288 = sbr.rel (%p285) target = $region56
      $region55: #{tpu_custom_call.1} parent=5 // pred_region
        %s289 = ssub.s32 %s16, 1
        %s290 = smul.u32 64, %s21
        %p291 = scmp.lt.s32.totalorder %s290, 127
        %s292 = scalar_select %p291, %s290, 127
        %s293 = smul.addr %s292, 8
        %s294 = scalar_lea.vmem %s0, %s293
        %p295 = pneg %p42
        %p296 = pneg %p39
        %p297 = pneg %p63
        %p298 = pneg %p60
        %p299 = pneg %p84
        %p300 = pneg %p81
        %p301 = pneg %p105
        %p302 = pneg %p102
        %p303 = pneg %p126
        %p304 = pneg %p123
        %p305 = pneg %p147
        %p306 = pneg %p144
        %p307 = pneg %p168
        %p308 = pneg %p165
        %p309 = pneg %p189
        %p310 = pneg %p186
        %p311 = pneg %p210
        %p312 = pneg %p207
        %p313 = pneg %p231
        %p314 = pneg %p228
        %s315 = smul.u32 64, %s21
        %p316 = scmp.lt.s32.totalorder %s315, 127
        %s317 = scalar_select %p316, %s315, 127
        %s318 = smul.addr %s317, 8
        %s319 = scalar_lea.vmem %s0, %s318
        %s320 = smul.u32 64, %s21
        %p321 = scmp.eq.s32.totalorder %s21, 0
        // Predicated region
        $region57: #{tpu_custom_call.1} parent=55 // pred_check
          %p322 = pneg %p321
        $region58: #{tpu_custom_call.1} parent=55 // pred_check_branch
          %324 = sbr.rel (%p322) target = $region60
        $region59: #{tpu_custom_call.1} parent=55 // pred_region
          %vm325 = vcmask 253952
          %326 = vst.msk [vmem:[#allocation2] sm:$0x1] %vm325, 0.0
        $region60: #{tpu_custom_call.1} parent=55 // pred_fallthru
          _
        %v327 = vld [vmem:[%s319] sm:$0xff]
        %v328 = vld [vmem:[%s319 + $0x8] sm:$0xff]
        %v329 = vld [vmem:[%s319 + $0x10] sm:$0xff]
        %v330 = vld [vmem:[%s319 + $0x18] sm:$0xff]
        %v331 = vld [vmem:[%s319 + $0x20] sm:$0xff]
        %v332 = vld [vmem:[%s319 + $0x28] sm:$0xff]
        %v333 = vld [vmem:[%s319 + $0x30] sm:$0xff]
        %v334 = vld [vmem:[%s319 + $0x38] sm:$0xff]
        %v335 = vld [vmem:[%s319 + $0x40] sm:$0xff]
        %v336 = vld [vmem:[%s319 + $0x48] sm:$0xff]
        %v337 = vld [vmem:[%s319 + $0x50] sm:$0xff]
        %v338 = vld [vmem:[%s319 + $0x58] sm:$0xff]
        %v339 = vld [vmem:[%s319 + $0x60] sm:$0xff]
        %v340 = vld [vmem:[%s319 + $0x68] sm:$0xff]
        %v341 = vld [vmem:[%s319 + $0x70] sm:$0xff]
        %v342 = vld [vmem:[%s319 + $0x78] sm:$0xff]
        %v343 = vld [vmem:[%s319 + $0x80] sm:$0xff]
        %v344 = vld [vmem:[%s319 + $0x88] sm:$0xff]
        %v345 = vld [vmem:[%s319 + $0x90] sm:$0xff]
        %v346 = vld [vmem:[%s319 + $0x98] sm:$0xff]
        %v347 = vld [vmem:[%s319 + $0xa0] sm:$0xff]
        %v348 = vld [vmem:[%s319 + $0xa8] sm:$0xff]
        %v349 = vld [vmem:[%s319 + $0xb0] sm:$0xff]
        %v350 = vld [vmem:[%s319 + $0xb8] sm:$0xff]
        %v351 = vld [vmem:[%s319 + $0xc0] sm:$0xff]
        %v352 = vld [vmem:[%s319 + $0xc8] sm:$0xff]
        %v353 = vld [vmem:[%s319 + $0xd0] sm:$0xff]
        %v354 = vld [vmem:[%s319 + $0xd8] sm:$0xff]
        %v355 = vld [vmem:[%s319 + $0xe0] sm:$0xff]
        %v356 = vld [vmem:[%s319 + $0xe8] sm:$0xff]
        %v357 = vld [vmem:[%s319 + $0xf0] sm:$0xff]
        %v358 = vld [vmem:[%s319 + $0xf8] sm:$0xff]
        %v359 = vld [vmem:[%s319 + $0x100] sm:$0xff]
        %v360 = vld [vmem:[%s319 + $0x108] sm:$0xff]
        %v361 = vld [vmem:[%s319 + $0x110] sm:$0xff]
        %v362 = vld [vmem:[%s319 + $0x118] sm:$0xff]
        %v363 = vld [vmem:[%s319 + $0x120] sm:$0xff]
        %v364 = vld [vmem:[%s319 + $0x128] sm:$0xff]
        %v365 = vld [vmem:[%s319 + $0x130] sm:$0xff]
        %v366 = vld [vmem:[%s319 + $0x138] sm:$0xff]
        %v367 = vld [vmem:[%s319 + $0x140] sm:$0xff]
        %v368 = vld [vmem:[%s319 + $0x148] sm:$0xff]
        %v369 = vld [vmem:[%s319 + $0x150] sm:$0xff]
        %v370 = vld [vmem:[%s319 + $0x158] sm:$0xff]
        %v371 = vld [vmem:[%s319 + $0x160] sm:$0xff]
        %v372 = vld [vmem:[%s319 + $0x168] sm:$0xff]
        %v373 = vld [vmem:[%s319 + $0x170] sm:$0xff]
        %v374 = vld [vmem:[%s319 + $0x178] sm:$0xff]
        %v375 = vld [vmem:[%s319 + $0x180] sm:$0xff]
        %v376 = vld [vmem:[%s319 + $0x188] sm:$0xff]
        %v377 = vld [vmem:[%s319 + $0x190] sm:$0xff]
        %v378 = vld [vmem:[%s319 + $0x198] sm:$0xff]
        %v379 = vld [vmem:[%s319 + $0x1a0] sm:$0xff]
        %v380 = vld [vmem:[%s319 + $0x1a8] sm:$0xff]
        %v381 = vld [vmem:[%s319 + $0x1b0] sm:$0xff]
        %v382 = vld [vmem:[%s319 + $0x1b8] sm:$0xff]
        %v383 = vld [vmem:[%s319 + $0x1c0] sm:$0xff]
        %v384 = vld [vmem:[%s319 + $0x1c8] sm:$0xff]
        %v385 = vld [vmem:[%s319 + $0x1d0] sm:$0xff]
        %v386 = vld [vmem:[%s319 + $0x1d8] sm:$0xff]
        %v387 = vld [vmem:[%s319 + $0x1e0] sm:$0xff]
        %v388 = vld [vmem:[%s319 + $0x1e8] sm:$0xff]
        %v389 = vld [vmem:[%s319 + $0x1f0] sm:$0xff]
        %v390 = vld [vmem:[%s319 + $0x1f8] sm:$0xff]
        %v391 = vmul.f32 %v327, %v327
        %v392 = vmul.f32 %v328, %v328
        %v393 = vmul.f32 %v329, %v329
        %v394 = vmul.f32 %v330, %v330
        %v395 = vmul.f32 %v331, %v331
        %v396 = vmul.f32 %v332, %v332
        %v397 = vmul.f32 %v333, %v333
        %v398 = vmul.f32 %v334, %v334
        %v399 = vmul.f32 %v335, %v335
        %v400 = vmul.f32 %v336, %v336
        %v401 = vmul.f32 %v337, %v337
        %v402 = vmul.f32 %v338, %v338
        %v403 = vmul.f32 %v339, %v339
        %v404 = vmul.f32 %v340, %v340
        %v405 = vmul.f32 %v341, %v341
        %v406 = vmul.f32 %v342, %v342
        %v407 = vmul.f32 %v343, %v343
        %v408 = vmul.f32 %v344, %v344
        %v409 = vmul.f32 %v345, %v345
        %v410 = vmul.f32 %v346, %v346
        %v411 = vmul.f32 %v347, %v347
        %v412 = vmul.f32 %v348, %v348
        %v413 = vmul.f32 %v349, %v349
        %v414 = vmul.f32 %v350, %v350
        %v415 = vmul.f32 %v351, %v351
        %v416 = vmul.f32 %v352, %v352
        %v417 = vmul.f32 %v353, %v353
        %v418 = vmul.f32 %v354, %v354
        %v419 = vmul.f32 %v355, %v355
        %v420 = vmul.f32 %v356, %v356
        %v421 = vmul.f32 %v357, %v357
        %v422 = vmul.f32 %v358, %v358
        %v423 = vmul.f32 %v359, %v359
        %v424 = vmul.f32 %v360, %v360
        %v425 = vmul.f32 %v361, %v361
        %v426 = vmul.f32 %v362, %v362
        %v427 = vmul.f32 %v363, %v363
        %v428 = vmul.f32 %v364, %v364
        %v429 = vmul.f32 %v365, %v365
        %v430 = vmul.f32 %v366, %v366
        %v431 = vmul.f32 %v367, %v367
        %v432 = vmul.f32 %v368, %v368
        %v433 = vmul.f32 %v369, %v369
        %v434 = vmul.f32 %v370, %v370
        %v435 = vmul.f32 %v371, %v371
        %v436 = vmul.f32 %v372, %v372
        %v437 = vmul.f32 %v373, %v373
        %v438 = vmul.f32 %v374, %v374
        %v439 = vmul.f32 %v375, %v375
        %v440 = vmul.f32 %v376, %v376
        %v441 = vmul.f32 %v377, %v377
        %v442 = vmul.f32 %v378, %v378
        %v443 = vmul.f32 %v379, %v379
        %v444 = vmul.f32 %v380, %v380
        %v445 = vmul.f32 %v381, %v381
        %v446 = vmul.f32 %v382, %v382
        %v447 = vmul.f32 %v383, %v383
        %v448 = vmul.f32 %v384, %v384
        %v449 = vmul.f32 %v385, %v385
        %v450 = vmul.f32 %v386, %v386
        %v451 = vmul.f32 %v387, %v387
        %v452 = vmul.f32 %v388, %v388
        %v453 = vmul.f32 %v389, %v389
        %v454 = vmul.f32 %v390, %v390
        %vm455 = vcmask 23552
        %v456 = vsel %vm455, %v391, 0.0
        %457 = vadd.xlane.f32.xlu0 %v456
        %v458 = vpop.xlane.xlu0 %457
        %v459 = vsel %vm455, %v392, 0.0
        %460 = vadd.xlane.f32.xlu0 %v459
        %v461 = vpop.xlane.xlu0 %460
        %v462 = vsel %vm455, %v393, 0.0
        %463 = vadd.xlane.f32.xlu0 %v462
        %v464 = vpop.xlane.xlu0 %463
        %v465 = vsel %vm455, %v394, 0.0
        %466 = vadd.xlane.f32.xlu0 %v465
        %v467 = vpop.xlane.xlu0 %466
        %v468 = vsel %vm455, %v395, 0.0
        %469 = vadd.xlane.f32.xlu0 %v468
        %v470 = vpop.xlane.xlu0 %469
        %v471 = vsel %vm455, %v396, 0.0
        %472 = vadd.xlane.f32.xlu0 %v471
        %v473 = vpop.xlane.xlu0 %472
        %v474 = vsel %vm455, %v397, 0.0
        %475 = vadd.xlane.f32.xlu0 %v474
        %v476 = vpop.xlane.xlu0 %475
        %v477 = vsel %vm455, %v398, 0.0
        %478 = vadd.xlane.f32.xlu0 %v477
        %v479 = vpop.xlane.xlu0 %478
        %v480 = vsel %vm455, %v399, 0.0
        %481 = vadd.xlane.f32.xlu0 %v480
        %v482 = vpop.xlane.xlu0 %481
        %v483 = vsel %vm455, %v400, 0.0
        %484 = vadd.xlane.f32.xlu0 %v483
        %v485 = vpop.xlane.xlu0 %484
        %v486 = vsel %vm455, %v401, 0.0
        %487 = vadd.xlane.f32.xlu0 %v486
        %v488 = vpop.xlane.xlu0 %487
        %v489 = vsel %vm455, %v402, 0.0
        %490 = vadd.xlane.f32.xlu0 %v489
        %v491 = vpop.xlane.xlu0 %490
        %v492 = vsel %vm455, %v403, 0.0
        %493 = vadd.xlane.f32.xlu0 %v492
        %v494 = vpop.xlane.xlu0 %493
        %v495 = vsel %vm455, %v404, 0.0
        %496 = vadd.xlane.f32.xlu0 %v495
        %v497 = vpop.xlane.xlu0 %496
        %v498 = vsel %vm455, %v405, 0.0
        %499 = vadd.xlane.f32.xlu0 %v498
        %v500 = vpop.xlane.xlu0 %499
        %v501 = vsel %vm455, %v406, 0.0
        %502 = vadd.xlane.f32.xlu0 %v501
        %v503 = vpop.xlane.xlu0 %502
        %v504 = vsel %vm455, %v407, 0.0
        %505 = vadd.xlane.f32.xlu0 %v504
        %v506 = vpop.xlane.xlu0 %505
        %v507 = vsel %vm455, %v408, 0.0
        %508 = vadd.xlane.f32.xlu0 %v507
        %v509 = vpop.xlane.xlu0 %508
        %v510 = vsel %vm455, %v409, 0.0
        %511 = vadd.xlane.f32.xlu0 %v510
        %v512 = vpop.xlane.xlu0 %511
        %v513 = vsel %vm455, %v410, 0.0
        %514 = vadd.xlane.f32.xlu0 %v513
        %v515 = vpop.xlane.xlu0 %514
        %v516 = vsel %vm455, %v411, 0.0
        %517 = vadd.xlane.f32.xlu0 %v516
        %v518 = vpop.xlane.xlu0 %517
        %v519 = vsel %vm455, %v412, 0.0
        %520 = vadd.xlane.f32.xlu0 %v519
        %v521 = vpop.xlane.xlu0 %520
        %v522 = vsel %vm455, %v413, 0.0
        %523 = vadd.xlane.f32.xlu0 %v522
        %v524 = vpop.xlane.xlu0 %523
        %v525 = vsel %vm455, %v414, 0.0
        %526 = vadd.xlane.f32.xlu0 %v525
        %v527 = vpop.xlane.xlu0 %526
        %v528 = vsel %vm455, %v415, 0.0
        %529 = vadd.xlane.f32.xlu0 %v528
        %v530 = vpop.xlane.xlu0 %529
        %v531 = vsel %vm455, %v416, 0.0
        %532 = vadd.xlane.f32.xlu0 %v531
        %v533 = vpop.xlane.xlu0 %532
        %v534 = vsel %vm455, %v417, 0.0
        %535 = vadd.xlane.f32.xlu0 %v534
        %v536 = vpop.xlane.xlu0 %535
        %v537 = vsel %vm455, %v418, 0.0
        %538 = vadd.xlane.f32.xlu0 %v537
        %v539 = vpop.xlane.xlu0 %538
        %v540 = vsel %vm455, %v419, 0.0
        %541 = vadd.xlane.f32.xlu0 %v540
        %v542 = vpop.xlane.xlu0 %541
        %v543 = vsel %vm455, %v420, 0.0
        %544 = vadd.xlane.f32.xlu0 %v543
        %v545 = vpop.xlane.xlu0 %544
        %v546 = vsel %vm455, %v421, 0.0
        %547 = vadd.xlane.f32.xlu0 %v546
        %v548 = vpop.xlane.xlu0 %547
        %v549 = vsel %vm455, %v422, 0.0
        %550 = vadd.xlane.f32.xlu0 %v549
        %v551 = vpop.xlane.xlu0 %550
        %v552 = vsel %vm455, %v423, 0.0
        %553 = vadd.xlane.f32.xlu0 %v552
        %v554 = vpop.xlane.xlu0 %553
        %v555 = vsel %vm455, %v424, 0.0
        %556 = vadd.xlane.f32.xlu0 %v555
        %v557 = vpop.xlane.xlu0 %556
        %v558 = vsel %vm455, %v425, 0.0
        %559 = vadd.xlane.f32.xlu0 %v558
        %v560 = vpop.xlane.xlu0 %559
        %v561 = vsel %vm455, %v426, 0.0
        %562 = vadd.xlane.f32.xlu0 %v561
        %v563 = vpop.xlane.xlu0 %562
        %v564 = vsel %vm455, %v427, 0.0
        %565 = vadd.xlane.f32.xlu0 %v564
        %v566 = vpop.xlane.xlu0 %565
        %v567 = vsel %vm455, %v428, 0.0
        %568 = vadd.xlane.f32.xlu0 %v567
        %v569 = vpop.xlane.xlu0 %568
        %v570 = vsel %vm455, %v429, 0.0
        %571 = vadd.xlane.f32.xlu0 %v570
        %v572 = vpop.xlane.xlu0 %571
        %v573 = vsel %vm455, %v430, 0.0
        %574 = vadd.xlane.f32.xlu0 %v573
        %v575 = vpop.xlane.xlu0 %574
        %v576 = vsel %vm455, %v431, 0.0
        %577 = vadd.xlane.f32.xlu0 %v576
        %v578 = vpop.xlane.xlu0 %577
        %v579 = vsel %vm455, %v432, 0.0
        %580 = vadd.xlane.f32.xlu0 %v579
        %v581 = vpop.xlane.xlu0 %580
        %v582 = vsel %vm455, %v433, 0.0
        %583 = vadd.xlane.f32.xlu0 %v582
        %v584 = vpop.xlane.xlu0 %583
        %v585 = vsel %vm455, %v434, 0.0
        %586 = vadd.xlane.f32.xlu0 %v585
        %v587 = vpop.xlane.xlu0 %586
        %v588 = vsel %vm455, %v435, 0.0
        %589 = vadd.xlane.f32.xlu0 %v588
        %v590 = vpop.xlane.xlu0 %589
        %v591 = vsel %vm455, %v436, 0.0
        %592 = vadd.xlane.f32.xlu0 %v591
        %v593 = vpop.xlane.xlu0 %592
        %v594 = vsel %vm455, %v437, 0.0
        %595 = vadd.xlane.f32.xlu0 %v594
        %v596 = vpop.xlane.xlu0 %595
        %v597 = vsel %vm455, %v438, 0.0
        %598 = vadd.xlane.f32.xlu0 %v597
        %v599 = vpop.xlane.xlu0 %598
        %v600 = vsel %vm455, %v439, 0.0
        %601 = vadd.xlane.f32.xlu0 %v600
        %v602 = vpop.xlane.xlu0 %601
        %v603 = vsel %vm455, %v440, 0.0
        %604 = vadd.xlane.f32.xlu0 %v603
        %v605 = vpop.xlane.xlu0 %604
        %v606 = vsel %vm455, %v441, 0.0
        %607 = vadd.xlane.f32.xlu0 %v606
        %v608 = vpop.xlane.xlu0 %607
        %v609 = vsel %vm455, %v442, 0.0
        %610 = vadd.xlane.f32.xlu0 %v609
        %v611 = vpop.xlane.xlu0 %610
        %v612 = vsel %vm455, %v443, 0.0
        %613 = vadd.xlane.f32.xlu0 %v612
        %v614 = vpop.xlane.xlu0 %613
        %v615 = vsel %vm455, %v444, 0.0
        %616 = vadd.xlane.f32.xlu0 %v615
        %v617 = vpop.xlane.xlu0 %616
        %v618 = vsel %vm455, %v445, 0.0
        %619 = vadd.xlane.f32.xlu0 %v618
        %v620 = vpop.xlane.xlu0 %619
        %v621 = vsel %vm455, %v446, 0.0
        %622 = vadd.xlane.f32.xlu0 %v621
        %v623 = vpop.xlane.xlu0 %622
        %v624 = vsel %vm455, %v447, 0.0
        %625 = vadd.xlane.f32.xlu0 %v624
        %v626 = vpop.xlane.xlu0 %625
        %v627 = vsel %vm455, %v448, 0.0
        %628 = vadd.xlane.f32.xlu0 %v627
        %v629 = vpop.xlane.xlu0 %628
        %v630 = vsel %vm455, %v449, 0.0
        %631 = vadd.xlane.f32.xlu0 %v630
        %v632 = vpop.xlane.xlu0 %631
        %v633 = vsel %vm455, %v450, 0.0
        %634 = vadd.xlane.f32.xlu0 %v633
        %v635 = vpop.xlane.xlu0 %634
        %v636 = vsel %vm455, %v451, 0.0
        %637 = vadd.xlane.f32.xlu0 %v636
        %v638 = vpop.xlane.xlu0 %637
        %v639 = vsel %vm455, %v452, 0.0
        %640 = vadd.xlane.f32.xlu0 %v639
        %v641 = vpop.xlane.xlu0 %640
        %v642 = vsel %vm455, %v453, 0.0
        %643 = vadd.xlane.f32.xlu0 %v642
        %v644 = vpop.xlane.xlu0 %643
        %v645 = vsel %vm455, %v454, 0.0
        %646 = vadd.xlane.f32.xlu0 %v645
        %v647 = vpop.xlane.xlu0 %646
        %v648 = vld [vmem:[%s1] sm:$0x1]
        %v649 = vld [vmem:[%s1 + $0x1] sm:$0x1]
        %v650 = vmul.f32 %v648, %v649
        %v651 = vperm.slane %v650, 0
        %v652 = vmul.f32 %v458, %v651
        %v653 = vmul.f32 %v461, %v651
        %v654 = vmul.f32 %v464, %v651
        %v655 = vmul.f32 %v467, %v651
        %v656 = vmul.f32 %v470, %v651
        %v657 = vmul.f32 %v473, %v651
        %v658 = vmul.f32 %v476, %v651
        %v659 = vmul.f32 %v479, %v651
        %v660 = vmul.f32 %v482, %v651
        %v661 = vmul.f32 %v485, %v651
        %v662 = vmul.f32 %v488, %v651
        %v663 = vmul.f32 %v491, %v651
        %v664 = vmul.f32 %v494, %v651
        %v665 = vmul.f32 %v497, %v651
        %v666 = vmul.f32 %v500, %v651
        %v667 = vmul.f32 %v503, %v651
        %v668 = vmul.f32 %v506, %v651
        %v669 = vmul.f32 %v509, %v651
        %v670 = vmul.f32 %v512, %v651
        %v671 = vmul.f32 %v515, %v651
        %v672 = vmul.f32 %v518, %v651
        %v673 = vmul.f32 %v521, %v651
        %v674 = vmul.f32 %v524, %v651
        %v675 = vmul.f32 %v527, %v651
        %v676 = vmul.f32 %v530, %v651
        %v677 = vmul.f32 %v533, %v651
        %v678 = vmul.f32 %v536, %v651
        %v679 = vmul.f32 %v539, %v651
        %v680 = vmul.f32 %v542, %v651
        %v681 = vmul.f32 %v545, %v651
        %v682 = vmul.f32 %v548, %v651
        %v683 = vmul.f32 %v551, %v651
        %v684 = vmul.f32 %v554, %v651
        %v685 = vmul.f32 %v557, %v651
        %v686 = vmul.f32 %v560, %v651
        %v687 = vmul.f32 %v563, %v651
        %v688 = vmul.f32 %v566, %v651
        %v689 = vmul.f32 %v569, %v651
        %v690 = vmul.f32 %v572, %v651
        %v691 = vmul.f32 %v575, %v651
        %v692 = vmul.f32 %v578, %v651
        %v693 = vmul.f32 %v581, %v651
        %v694 = vmul.f32 %v584, %v651
        %v695 = vmul.f32 %v587, %v651
        %v696 = vmul.f32 %v590, %v651
        %v697 = vmul.f32 %v593, %v651
        %v698 = vmul.f32 %v596, %v651
        %v699 = vmul.f32 %v599, %v651
        %v700 = vmul.f32 %v602, %v651
        %v701 = vmul.f32 %v605, %v651
        %v702 = vmul.f32 %v608, %v651
        %v703 = vmul.f32 %v611, %v651
        %v704 = vmul.f32 %v614, %v651
        %v705 = vmul.f32 %v617, %v651
        %v706 = vmul.f32 %v620, %v651
        %v707 = vmul.f32 %v623, %v651
        %v708 = vmul.f32 %v626, %v651
        %v709 = vmul.f32 %v629, %v651
        %v710 = vmul.f32 %v632, %v651
        %v711 = vmul.f32 %v635, %v651
        %v712 = vmul.f32 %v638, %v651
        %v713 = vmul.f32 %v641, %v651
        %v714 = vmul.f32 %v644, %v651
        %v715 = vmul.f32 %v647, %v651
        %v716 = vmul.f32 %v649, %v649
        %v717 = vperm.slane %v716, 0
        %v718 = vmul.f32 %v458, %v717
        %v719 = vmul.f32 %v461, %v717
        %v720 = vmul.f32 %v464, %v717
        %v721 = vmul.f32 %v467, %v717
        %v722 = vmul.f32 %v470, %v717
        %v723 = vmul.f32 %v473, %v717
        %v724 = vmul.f32 %v476, %v717
        %v725 = vmul.f32 %v479, %v717
        %v726 = vmul.f32 %v482, %v717
        %v727 = vmul.f32 %v485, %v717
        %v728 = vmul.f32 %v488, %v717
        %v729 = vmul.f32 %v491, %v717
        %v730 = vmul.f32 %v494, %v717
        %v731 = vmul.f32 %v497, %v717
        %v732 = vmul.f32 %v500, %v717
        %v733 = vmul.f32 %v503, %v717
        %v734 = vmul.f32 %v506, %v717
        %v735 = vmul.f32 %v509, %v717
        %v736 = vmul.f32 %v512, %v717
        %v737 = vmul.f32 %v515, %v717
        %v738 = vmul.f32 %v518, %v717
        %v739 = vmul.f32 %v521, %v717
        %v740 = vmul.f32 %v524, %v717
        %v741 = vmul.f32 %v527, %v717
        %v742 = vmul.f32 %v530, %v717
        %v743 = vmul.f32 %v533, %v717
        %v744 = vmul.f32 %v536, %v717
        %v745 = vmul.f32 %v539, %v717
        %v746 = vmul.f32 %v542, %v717
        %v747 = vmul.f32 %v545, %v717
        %v748 = vmul.f32 %v548, %v717
        %v749 = vmul.f32 %v551, %v717
        %v750 = vmul.f32 %v554, %v717
        %v751 = vmul.f32 %v557, %v717
        %v752 = vmul.f32 %v560, %v717
        %v753 = vmul.f32 %v563, %v717
        %v754 = vmul.f32 %v566, %v717
        %v755 = vmul.f32 %v569, %v717
        %v756 = vmul.f32 %v572, %v717
        %v757 = vmul.f32 %v575, %v717
        %v758 = vmul.f32 %v578, %v717
        %v759 = vmul.f32 %v581, %v717
        %v760 = vmul.f32 %v584, %v717
        %v761 = vmul.f32 %v587, %v717
        %v762 = vmul.f32 %v590, %v717
        %v763 = vmul.f32 %v593, %v717
        %v764 = vmul.f32 %v596, %v717
        %v765 = vmul.f32 %v599, %v717
        %v766 = vmul.f32 %v602, %v717
        %v767 = vmul.f32 %v605, %v717
        %v768 = vmul.f32 %v608, %v717
        %v769 = vmul.f32 %v611, %v717
        %v770 = vmul.f32 %v614, %v717
        %v771 = vmul.f32 %v617, %v717
        %v772 = vmul.f32 %v620, %v717
        %v773 = vmul.f32 %v623, %v717
        %v774 = vmul.f32 %v626, %v717
        %v775 = vmul.f32 %v629, %v717
        %v776 = vmul.f32 %v632, %v717
        %v777 = vmul.f32 %v635, %v717
        %v778 = vmul.f32 %v638, %v717
        %v779 = vmul.f32 %v641, %v717
        %v780 = vmul.f32 %v644, %v717
        %v781 = vmul.f32 %v647, %v717
        %v782 = vadd.f32 %v718, 1e-06
        %v783 = vadd.f32 %v719, 1e-06
        %v784 = vadd.f32 %v720, 1e-06
        %v785 = vadd.f32 %v721, 1e-06
        %v786 = vadd.f32 %v722, 1e-06
        %v787 = vadd.f32 %v723, 1e-06
        %v788 = vadd.f32 %v724, 1e-06
        %v789 = vadd.f32 %v725, 1e-06
        %v790 = vadd.f32 %v726, 1e-06
        %v791 = vadd.f32 %v727, 1e-06
        %v792 = vadd.f32 %v728, 1e-06
        %v793 = vadd.f32 %v729, 1e-06
        %v794 = vadd.f32 %v730, 1e-06
        %v795 = vadd.f32 %v731, 1e-06
        %v796 = vadd.f32 %v732, 1e-06
        %v797 = vadd.f32 %v733, 1e-06
        %v798 = vadd.f32 %v734, 1e-06
        %v799 = vadd.f32 %v735, 1e-06
        %v800 = vadd.f32 %v736, 1e-06
        %v801 = vadd.f32 %v737, 1e-06
        %v802 = vadd.f32 %v738, 1e-06
        %v803 = vadd.f32 %v739, 1e-06
        %v804 = vadd.f32 %v740, 1e-06
        %v805 = vadd.f32 %v741, 1e-06
        %v806 = vadd.f32 %v742, 1e-06
        %v807 = vadd.f32 %v743, 1e-06
        %v808 = vadd.f32 %v744, 1e-06
        %v809 = vadd.f32 %v745, 1e-06
        %v810 = vadd.f32 %v746, 1e-06
        %v811 = vadd.f32 %v747, 1e-06
        %v812 = vadd.f32 %v748, 1e-06
        %v813 = vadd.f32 %v749, 1e-06
        %v814 = vadd.f32 %v750, 1e-06
        %v815 = vadd.f32 %v751, 1e-06
        %v816 = vadd.f32 %v752, 1e-06
        %v817 = vadd.f32 %v753, 1e-06
        %v818 = vadd.f32 %v754, 1e-06
        %v819 = vadd.f32 %v755, 1e-06
        %v820 = vadd.f32 %v756, 1e-06
        %v821 = vadd.f32 %v757, 1e-06
        %v822 = vadd.f32 %v758, 1e-06
        %v823 = vadd.f32 %v759, 1e-06
        %v824 = vadd.f32 %v760, 1e-06
        %v825 = vadd.f32 %v761, 1e-06
        %v826 = vadd.f32 %v762, 1e-06
        %v827 = vadd.f32 %v763, 1e-06
        %v828 = vadd.f32 %v764, 1e-06
        %v829 = vadd.f32 %v765, 1e-06
        %v830 = vadd.f32 %v766, 1e-06
        %v831 = vadd.f32 %v767, 1e-06
        %v832 = vadd.f32 %v768, 1e-06
        %v833 = vadd.f32 %v769, 1e-06
        %v834 = vadd.f32 %v770, 1e-06
        %v835 = vadd.f32 %v771, 1e-06
        %v836 = vadd.f32 %v772, 1e-06
        %v837 = vadd.f32 %v773, 1e-06
        %v838 = vadd.f32 %v774, 1e-06
        %v839 = vadd.f32 %v775, 1e-06
        %v840 = vadd.f32 %v776, 1e-06
        %v841 = vadd.f32 %v777, 1e-06
        %v842 = vadd.f32 %v778, 1e-06
        %v843 = vadd.f32 %v779, 1e-06
        %v844 = vadd.f32 %v780, 1e-06
        %v845 = vadd.f32 %v781, 1e-06
        %v846 = vrcp.pop %v782
        %v847 = vrcp.pop %v783
        %v848 = vrcp.pop %v784
        %v849 = vrcp.pop %v785
        %v850 = vrcp.pop %v786
        %v851 = vrcp.pop %v787
        %v852 = vrcp.pop %v788
        %v853 = vrcp.pop %v789
        %v854 = vrcp.pop %v790
        %v855 = vrcp.pop %v791
        %v856 = vrcp.pop %v792
        %v857 = vrcp.pop %v793
        %v858 = vrcp.pop %v794
        %v859 = vrcp.pop %v795
        %v860 = vrcp.pop %v796
        %v861 = vrcp.pop %v797
        %v862 = vrcp.pop %v798
        %v863 = vrcp.pop %v799
        %v864 = vrcp.pop %v800
        %v865 = vrcp.pop %v801
        %v866 = vrcp.pop %v802
        %v867 = vrcp.pop %v803
        %v868 = vrcp.pop %v804
        %v869 = vrcp.pop %v805
        %v870 = vrcp.pop %v806
        %v871 = vrcp.pop %v807
        %v872 = vrcp.pop %v808
        %v873 = vrcp.pop %v809
        %v874 = vrcp.pop %v810
        %v875 = vrcp.pop %v811
        %v876 = vrcp.pop %v812
        %v877 = vrcp.pop %v813
        %v878 = vrcp.pop %v814
        %v879 = vrcp.pop %v815
        %v880 = vrcp.pop %v816
        %v881 = vrcp.pop %v817
        %v882 = vrcp.pop %v818
        %v883 = vrcp.pop %v819
        %v884 = vrcp.pop %v820
        %v885 = vrcp.pop %v821
        %v886 = vrcp.pop %v822
        %v887 = vrcp.pop %v823
        %v888 = vrcp.pop %v824
        %v889 = vrcp.pop %v825
        %v890 = vrcp.pop %v826
        %v891 = vrcp.pop %v827
        %v892 = vrcp.pop %v828
        %v893 = vrcp.pop %v829
        %v894 = vrcp.pop %v830
        %v895 = vrcp.pop %v831
        %v896 = vrcp.pop %v832
        %v897 = vrcp.pop %v833
        %v898 = vrcp.pop %v834
        %v899 = vrcp.pop %v835
        %v900 = vrcp.pop %v836
        %v901 = vrcp.pop %v837
        %v902 = vrcp.pop %v838
        %v903 = vrcp.pop %v839
        %v904 = vrcp.pop %v840
        %v905 = vrcp.pop %v841
        %v906 = vrcp.pop %v842
        %v907 = vrcp.pop %v843
        %v908 = vrcp.pop %v844
        %v909 = vrcp.pop %v845
        %v910 = vmul.f32 %v782, %v846
        %v911 = vmul.f32 %v783, %v847
        %v912 = vmul.f32 %v784, %v848
        %v913 = vmul.f32 %v785, %v849
        %v914 = vmul.f32 %v786, %v850
        %v915 = vmul.f32 %v787, %v851
        %v916 = vmul.f32 %v788, %v852
        %v917 = vmul.f32 %v789, %v853
        %v918 = vmul.f32 %v790, %v854
        %v919 = vmul.f32 %v791, %v855
        %v920 = vmul.f32 %v792, %v856
        %v921 = vmul.f32 %v793, %v857
        %v922 = vmul.f32 %v794, %v858
        %v923 = vmul.f32 %v795, %v859
        %v924 = vmul.f32 %v796, %v860
        %v925 = vmul.f32 %v797, %v861
        %v926 = vmul.f32 %v798, %v862
        %v927 = vmul.f32 %v799, %v863
        %v928 = vmul.f32 %v800, %v864
        %v929 = vmul.f32 %v801, %v865
        %v930 = vmul.f32 %v802, %v866
        %v931 = vmul.f32 %v803, %v867
        %v932 = vmul.f32 %v804, %v868
        %v933 = vmul.f32 %v805, %v869
        %v934 = vmul.f32 %v806, %v870
        %v935 = vmul.f32 %v807, %v871
        %v936 = vmul.f32 %v808, %v872
        %v937 = vmul.f32 %v809, %v873
        %v938 = vmul.f32 %v810, %v874
        %v939 = vmul.f32 %v811, %v875
        %v940 = vmul.f32 %v812, %v876
        %v941 = vmul.f32 %v813, %v877
        %v942 = vmul.f32 %v814, %v878
        %v943 = vmul.f32 %v815, %v879
        %v944 = vmul.f32 %v816, %v880
        %v945 = vmul.f32 %v817, %v881
        %v946 = vmul.f32 %v818, %v882
        %v947 = vmul.f32 %v819, %v883
        %v948 = vmul.f32 %v820, %v884
        %v949 = vmul.f32 %v821, %v885
        %v950 = vmul.f32 %v822, %v886
        %v951 = vmul.f32 %v823, %v887
        %v952 = vmul.f32 %v824, %v888
        %v953 = vmul.f32 %v825, %v889
        %v954 = vmul.f32 %v826, %v890
        %v955 = vmul.f32 %v827, %v891
        %v956 = vmul.f32 %v828, %v892
        %v957 = vmul.f32 %v829, %v893
        %v958 = vmul.f32 %v830, %v894
        %v959 = vmul.f32 %v831, %v895
        %v960 = vmul.f32 %v832, %v896
        %v961 = vmul.f32 %v833, %v897
        %v962 = vmul.f32 %v834, %v898
        %v963 = vmul.f32 %v835, %v899
        %v964 = vmul.f32 %v836, %v900
        %v965 = vmul.f32 %v837, %v901
        %v966 = vmul.f32 %v838, %v902
        %v967 = vmul.f32 %v839, %v903
        %v968 = vmul.f32 %v840, %v904
        %v969 = vmul.f32 %v841, %v905
        %v970 = vmul.f32 %v842, %v906
        %v971 = vmul.f32 %v843, %v907
        %v972 = vmul.f32 %v844, %v908
        %v973 = vmul.f32 %v845, %v909
        %v974 = vsub.f32 2.0, %v910
        %v975 = vsub.f32 2.0, %v911
        %v976 = vsub.f32 2.0, %v912
        %v977 = vsub.f32 2.0, %v913
        %v978 = vsub.f32 2.0, %v914
        %v979 = vsub.f32 2.0, %v915
        %v980 = vsub.f32 2.0, %v916
        %v981 = vsub.f32 2.0, %v917
        %v982 = vsub.f32 2.0, %v918
        %v983 = vsub.f32 2.0, %v919
        %v984 = vsub.f32 2.0, %v920
        %v985 = vsub.f32 2.0, %v921
        %v986 = vsub.f32 2.0, %v922
        %v987 = vsub.f32 2.0, %v923
        %v988 = vsub.f32 2.0, %v924
        %v989 = vsub.f32 2.0, %v925
        %v990 = vsub.f32 2.0, %v926
        %v991 = vsub.f32 2.0, %v927
        %v992 = vsub.f32 2.0, %v928
        %v993 = vsub.f32 2.0, %v929
        %v994 = vsub.f32 2.0, %v930
        %v995 = vsub.f32 2.0, %v931
        %v996 = vsub.f32 2.0, %v932
        %v997 = vsub.f32 2.0, %v933
        %v998 = vsub.f32 2.0, %v934
        %v999 = vsub.f32 2.0, %v935
        %v1000 = vsub.f32 2.0, %v936
        %v1001 = vsub.f32 2.0, %v937
        %v1002 = vsub.f32 2.0, %v938
        %v1003 = vsub.f32 2.0, %v939
        %v1004 = vsub.f32 2.0, %v940
        %v1005 = vsub.f32 2.0, %v941
        %v1006 = vsub.f32 2.0, %v942
        %v1007 = vsub.f32 2.0, %v943
        %v1008 = vsub.f32 2.0, %v944
        %v1009 = vsub.f32 2.0, %v945
        %v1010 = vsub.f32 2.0, %v946
        %v1011 = vsub.f32 2.0, %v947
        %v1012 = vsub.f32 2.0, %v948
        %v1013 = vsub.f32 2.0, %v949
        %v1014 = vsub.f32 2.0, %v950
        %v1015 = vsub.f32 2.0, %v951
        %v1016 = vsub.f32 2.0, %v952
        %v1017 = vsub.f32 2.0, %v953
        %v1018 = vsub.f32 2.0, %v954
        %v1019 = vsub.f32 2.0, %v955
        %v1020 = vsub.f32 2.0, %v956
        %v1021 = vsub.f32 2.0, %v957
        %v1022 = vsub.f32 2.0, %v958
        %v1023 = vsub.f32 2.0, %v959
        %v1024 = vsub.f32 2.0, %v960
        %v1025 = vsub.f32 2.0, %v961
        %v1026 = vsub.f32 2.0, %v962
        %v1027 = vsub.f32 2.0, %v963
        %v1028 = vsub.f32 2.0, %v964
        %v1029 = vsub.f32 2.0, %v965
        %v1030 = vsub.f32 2.0, %v966
        %v1031 = vsub.f32 2.0, %v967
        %v1032 = vsub.f32 2.0, %v968
        %v1033 = vsub.f32 2.0, %v969
        %v1034 = vsub.f32 2.0, %v970
        %v1035 = vsub.f32 2.0, %v971
        %v1036 = vsub.f32 2.0, %v972
        %v1037 = vsub.f32 2.0, %v973
        %v1038 = vmul.f32 %v846, %v974
        %v1039 = vmul.f32 %v847, %v975
        %v1040 = vmul.f32 %v848, %v976
        %v1041 = vmul.f32 %v849, %v977
        %v1042 = vmul.f32 %v850, %v978
        %v1043 = vmul.f32 %v851, %v979
        %v1044 = vmul.f32 %v852, %v980
        %v1045 = vmul.f32 %v853, %v981
        %v1046 = vmul.f32 %v854, %v982
        %v1047 = vmul.f32 %v855, %v983
        %v1048 = vmul.f32 %v856, %v984
        %v1049 = vmul.f32 %v857, %v985
        %v1050 = vmul.f32 %v858, %v986
        %v1051 = vmul.f32 %v859, %v987
        %v1052 = vmul.f32 %v860, %v988
        %v1053 = vmul.f32 %v861, %v989
        %v1054 = vmul.f32 %v862, %v990
        %v1055 = vmul.f32 %v863, %v991
        %v1056 = vmul.f32 %v864, %v992
        %v1057 = vmul.f32 %v865, %v993
        %v1058 = vmul.f32 %v866, %v994
        %v1059 = vmul.f32 %v867, %v995
        %v1060 = vmul.f32 %v868, %v996
        %v1061 = vmul.f32 %v869, %v997
        %v1062 = vmul.f32 %v870, %v998
        %v1063 = vmul.f32 %v871, %v999
        %v1064 = vmul.f32 %v872, %v1000
        %v1065 = vmul.f32 %v873, %v1001
        %v1066 = vmul.f32 %v874, %v1002
        %v1067 = vmul.f32 %v875, %v1003
        %v1068 = vmul.f32 %v876, %v1004
        %v1069 = vmul.f32 %v877, %v1005
        %v1070 = vmul.f32 %v878, %v1006
        %v1071 = vmul.f32 %v879, %v1007
        %v1072 = vmul.f32 %v880, %v1008
        %v1073 = vmul.f32 %v881, %v1009
        %v1074 = vmul.f32 %v882, %v1010
        %v1075 = vmul.f32 %v883, %v1011
        %v1076 = vmul.f32 %v884, %v1012
        %v1077 = vmul.f32 %v885, %v1013
        %v1078 = vmul.f32 %v886, %v1014
        %v1079 = vmul.f32 %v887, %v1015
        %v1080 = vmul.f32 %v888, %v1016
        %v1081 = vmul.f32 %v889, %v1017
        %v1082 = vmul.f32 %v890, %v1018
        %v1083 = vmul.f32 %v891, %v1019
        %v1084 = vmul.f32 %v892, %v1020
        %v1085 = vmul.f32 %v893, %v1021
        %v1086 = vmul.f32 %v894, %v1022
        %v1087 = vmul.f32 %v895, %v1023
        %v1088 = vmul.f32 %v896, %v1024
        %v1089 = vmul.f32 %v897, %v1025
        %v1090 = vmul.f32 %v898, %v1026
        %v1091 = vmul.f32 %v899, %v1027
        %v1092 = vmul.f32 %v900, %v1028
        %v1093 = vmul.f32 %v901, %v1029
        %v1094 = vmul.f32 %v902, %v1030
        %v1095 = vmul.f32 %v903, %v1031
        %v1096 = vmul.f32 %v904, %v1032
        %v1097 = vmul.f32 %v905, %v1033
        %v1098 = vmul.f32 %v906, %v1034
        %v1099 = vmul.f32 %v907, %v1035
        %v1100 = vmul.f32 %v908, %v1036
        %v1101 = vmul.f32 %v909, %v1037
        %v1102 = vmul.f32 %v652, %v1038
        %v1103 = vmul.f32 %v653, %v1039
        %v1104 = vmul.f32 %v654, %v1040
        %v1105 = vmul.f32 %v655, %v1041
        %v1106 = vmul.f32 %v656, %v1042
        %v1107 = vmul.f32 %v657, %v1043
        %v1108 = vmul.f32 %v658, %v1044
        %v1109 = vmul.f32 %v659, %v1045
        %v1110 = vmul.f32 %v660, %v1046
        %v1111 = vmul.f32 %v661, %v1047
        %v1112 = vmul.f32 %v662, %v1048
        %v1113 = vmul.f32 %v663, %v1049
        %v1114 = vmul.f32 %v664, %v1050
        %v1115 = vmul.f32 %v665, %v1051
        %v1116 = vmul.f32 %v666, %v1052
        %v1117 = vmul.f32 %v667, %v1053
        %v1118 = vmul.f32 %v668, %v1054
        %v1119 = vmul.f32 %v669, %v1055
        %v1120 = vmul.f32 %v670, %v1056
        %v1121 = vmul.f32 %v671, %v1057
        %v1122 = vmul.f32 %v672, %v1058
        %v1123 = vmul.f32 %v673, %v1059
        %v1124 = vmul.f32 %v674, %v1060
        %v1125 = vmul.f32 %v675, %v1061
        %v1126 = vmul.f32 %v676, %v1062
        %v1127 = vmul.f32 %v677, %v1063
        %v1128 = vmul.f32 %v678, %v1064
        %v1129 = vmul.f32 %v679, %v1065
        %v1130 = vmul.f32 %v680, %v1066
        %v1131 = vmul.f32 %v681, %v1067
        %v1132 = vmul.f32 %v682, %v1068
        %v1133 = vmul.f32 %v683, %v1069
        %v1134 = vmul.f32 %v684, %v1070
        %v1135 = vmul.f32 %v685, %v1071
        %v1136 = vmul.f32 %v686, %v1072
        %v1137 = vmul.f32 %v687, %v1073
        %v1138 = vmul.f32 %v688, %v1074
        %v1139 = vmul.f32 %v689, %v1075
        %v1140 = vmul.f32 %v690, %v1076
        %v1141 = vmul.f32 %v691, %v1077
        %v1142 = vmul.f32 %v692, %v1078
        %v1143 = vmul.f32 %v693, %v1079
        %v1144 = vmul.f32 %v694, %v1080
        %v1145 = vmul.f32 %v695, %v1081
        %v1146 = vmul.f32 %v696, %v1082
        %v1147 = vmul.f32 %v697, %v1083
        %v1148 = vmul.f32 %v698, %v1084
        %v1149 = vmul.f32 %v699, %v1085
        %v1150 = vmul.f32 %v700, %v1086
        %v1151 = vmul.f32 %v701, %v1087
        %v1152 = vmul.f32 %v702, %v1088
        %v1153 = vmul.f32 %v703, %v1089
        %v1154 = vmul.f32 %v704, %v1090
        %v1155 = vmul.f32 %v705, %v1091
        %v1156 = vmul.f32 %v706, %v1092
        %v1157 = vmul.f32 %v707, %v1093
        %v1158 = vmul.f32 %v708, %v1094
        %v1159 = vmul.f32 %v709, %v1095
        %v1160 = vmul.f32 %v710, %v1096
        %v1161 = vmul.f32 %v711, %v1097
        %v1162 = vmul.f32 %v712, %v1098
        %v1163 = vmul.f32 %v713, %v1099
        %v1164 = vmul.f32 %v714, %v1100
        %v1165 = vmul.f32 %v715, %v1101
        %vm1166 = vcmp.ge.f32.partialorder %v652, 0.0
        %vm1167 = vcmp.ge.f32.partialorder %v653, 0.0
        %vm1168 = vcmp.ge.f32.partialorder %v654, 0.0
        %vm1169 = vcmp.ge.f32.partialorder %v655, 0.0
        %vm1170 = vcmp.ge.f32.partialorder %v656, 0.0
        %vm1171 = vcmp.ge.f32.partialorder %v657, 0.0
        %vm1172 = vcmp.ge.f32.partialorder %v658, 0.0
        %vm1173 = vcmp.ge.f32.partialorder %v659, 0.0
        %vm1174 = vcmp.ge.f32.partialorder %v660, 0.0
        %vm1175 = vcmp.ge.f32.partialorder %v661, 0.0
        %vm1176 = vcmp.ge.f32.partialorder %v662, 0.0
        %vm1177 = vcmp.ge.f32.partialorder %v663, 0.0
        %vm1178 = vcmp.ge.f32.partialorder %v664, 0.0
        %vm1179 = vcmp.ge.f32.partialorder %v665, 0.0
        %vm1180 = vcmp.ge.f32.partialorder %v666, 0.0
        %vm1181 = vcmp.ge.f32.partialorder %v667, 0.0
        %vm1182 = vcmp.ge.f32.partialorder %v668, 0.0
        %vm1183 = vcmp.ge.f32.partialorder %v669, 0.0
        %vm1184 = vcmp.ge.f32.partialorder %v670, 0.0
        %vm1185 = vcmp.ge.f32.partialorder %v671, 0.0
        %vm1186 = vcmp.ge.f32.partialorder %v672, 0.0
        %vm1187 = vcmp.ge.f32.partialorder %v673, 0.0
        %vm1188 = vcmp.ge.f32.partialorder %v674, 0.0
        %vm1189 = vcmp.ge.f32.partialorder %v675, 0.0
        %vm1190 = vcmp.ge.f32.partialorder %v676, 0.0
        %vm1191 = vcmp.ge.f32.partialorder %v677, 0.0
        %vm1192 = vcmp.ge.f32.partialorder %v678, 0.0
        %vm1193 = vcmp.ge.f32.partialorder %v679, 0.0
        %vm1194 = vcmp.ge.f32.partialorder %v680, 0.0
        %vm1195 = vcmp.ge.f32.partialorder %v681, 0.0
        %vm1196 = vcmp.ge.f32.partialorder %v682, 0.0
        %vm1197 = vcmp.ge.f32.partialorder %v683, 0.0
        %vm1198 = vcmp.ge.f32.partialorder %v684, 0.0
        %vm1199 = vcmp.ge.f32.partialorder %v685, 0.0
        %vm1200 = vcmp.ge.f32.partialorder %v686, 0.0
        %vm1201 = vcmp.ge.f32.partialorder %v687, 0.0
        %vm1202 = vcmp.ge.f32.partialorder %v688, 0.0
        %vm1203 = vcmp.ge.f32.partialorder %v689, 0.0
        %vm1204 = vcmp.ge.f32.partialorder %v690, 0.0
        %vm1205 = vcmp.ge.f32.partialorder %v691, 0.0
        %vm1206 = vcmp.ge.f32.partialorder %v692, 0.0
        %vm1207 = vcmp.ge.f32.partialorder %v693, 0.0
        %vm1208 = vcmp.ge.f32.partialorder %v694, 0.0
        %vm1209 = vcmp.ge.f32.partialorder %v695, 0.0
        %vm1210 = vcmp.ge.f32.partialorder %v696, 0.0
        %vm1211 = vcmp.ge.f32.partialorder %v697, 0.0
        %vm1212 = vcmp.ge.f32.partialorder %v698, 0.0
        %vm1213 = vcmp.ge.f32.partialorder %v699, 0.0
        %vm1214 = vcmp.ge.f32.partialorder %v700, 0.0
        %vm1215 = vcmp.ge.f32.partialorder %v701, 0.0
        %vm1216 = vcmp.ge.f32.partialorder %v702, 0.0
        %vm1217 = vcmp.ge.f32.partialorder %v703, 0.0
        %vm1218 = vcmp.ge.f32.partialorder %v704, 0.0
        %vm1219 = vcmp.ge.f32.partialorder %v705, 0.0
        %vm1220 = vcmp.ge.f32.partialorder %v706, 0.0
        %vm1221 = vcmp.ge.f32.partialorder %v707, 0.0
        %vm1222 = vcmp.ge.f32.partialorder %v708, 0.0
        %vm1223 = vcmp.ge.f32.partialorder %v709, 0.0
        %vm1224 = vcmp.ge.f32.partialorder %v710, 0.0
        %vm1225 = vcmp.ge.f32.partialorder %v711, 0.0
        %vm1226 = vcmp.ge.f32.partialorder %v712, 0.0
        %vm1227 = vcmp.ge.f32.partialorder %v713, 0.0
        %vm1228 = vcmp.ge.f32.partialorder %v714, 0.0
        %vm1229 = vcmp.ge.f32.partialorder %v715, 0.0
        %v1230 = vperm.slane %v649, 0
        %v1231 = vmul.f32 %v1102, %v1230
        %v1232 = vmul.f32 %v1103, %v1230
        %v1233 = vmul.f32 %v1104, %v1230
        %v1234 = vmul.f32 %v1105, %v1230
        %v1235 = vmul.f32 %v1106, %v1230
        %v1236 = vmul.f32 %v1107, %v1230
        %v1237 = vmul.f32 %v1108, %v1230
        %v1238 = vmul.f32 %v1109, %v1230
        %v1239 = vmul.f32 %v1110, %v1230
        %v1240 = vmul.f32 %v1111, %v1230
        %v1241 = vmul.f32 %v1112, %v1230
        %v1242 = vmul.f32 %v1113, %v1230
        %v1243 = vmul.f32 %v1114, %v1230
        %v1244 = vmul.f32 %v1115, %v1230
        %v1245 = vmul.f32 %v1116, %v1230
        %v1246 = vmul.f32 %v1117, %v1230
        %v1247 = vmul.f32 %v1118, %v1230
        %v1248 = vmul.f32 %v1119, %v1230
        %v1249 = vmul.f32 %v1120, %v1230
        %v1250 = vmul.f32 %v1121, %v1230
        %v1251 = vmul.f32 %v1122, %v1230
        %v1252 = vmul.f32 %v1123, %v1230
        %v1253 = vmul.f32 %v1124, %v1230
        %v1254 = vmul.f32 %v1125, %v1230
        %v1255 = vmul.f32 %v1126, %v1230
        %v1256 = vmul.f32 %v1127, %v1230
        %v1257 = vmul.f32 %v1128, %v1230
        %v1258 = vmul.f32 %v1129, %v1230
        %v1259 = vmul.f32 %v1130, %v1230
        %v1260 = vmul.f32 %v1131, %v1230
        %v1261 = vmul.f32 %v1132, %v1230
        %v1262 = vmul.f32 %v1133, %v1230
        %v1263 = vmul.f32 %v1134, %v1230
        %v1264 = vmul.f32 %v1135, %v1230
        %v1265 = vmul.f32 %v1136, %v1230
        %v1266 = vmul.f32 %v1137, %v1230
        %v1267 = vmul.f32 %v1138, %v1230
        %v1268 = vmul.f32 %v1139, %v1230
        %v1269 = vmul.f32 %v1140, %v1230
        %v1270 = vmul.f32 %v1141, %v1230
        %v1271 = vmul.f32 %v1142, %v1230
        %v1272 = vmul.f32 %v1143, %v1230
        %v1273 = vmul.f32 %v1144, %v1230
        %v1274 = vmul.f32 %v1145, %v1230
        %v1275 = vmul.f32 %v1146, %v1230
        %v1276 = vmul.f32 %v1147, %v1230
        %v1277 = vmul.f32 %v1148, %v1230
        %v1278 = vmul.f32 %v1149, %v1230
        %v1279 = vmul.f32 %v1150, %v1230
        %v1280 = vmul.f32 %v1151, %v1230
        %v1281 = vmul.f32 %v1152, %v1230
        %v1282 = vmul.f32 %v1153, %v1230
        %v1283 = vmul.f32 %v1154, %v1230
        %v1284 = vmul.f32 %v1155, %v1230
        %v1285 = vmul.f32 %v1156, %v1230
        %v1286 = vmul.f32 %v1157, %v1230
        %v1287 = vmul.f32 %v1158, %v1230
        %v1288 = vmul.f32 %v1159, %v1230
        %v1289 = vmul.f32 %v1160, %v1230
        %v1290 = vmul.f32 %v1161, %v1230
        %v1291 = vmul.f32 %v1162, %v1230
        %v1292 = vmul.f32 %v1163, %v1230
        %v1293 = vmul.f32 %v1164, %v1230
        %v1294 = vmul.f32 %v1165, %v1230
        %v1295 = vperm.slane %v648, 0
        %v1296 = vsub.f32 %v1295, %v1231
        %v1297 = vsub.f32 %v1295, %v1232
        %v1298 = vsub.f32 %v1295, %v1233
        %v1299 = vsub.f32 %v1295, %v1234
        %v1300 = vsub.f32 %v1295, %v1235
        %v1301 = vsub.f32 %v1295, %v1236
        %v1302 = vsub.f32 %v1295, %v1237
        %v1303 = vsub.f32 %v1295, %v1238
        %v1304 = vsub.f32 %v1295, %v1239
        %v1305 = vsub.f32 %v1295, %v1240
        %v1306 = vsub.f32 %v1295, %v1241
        %v1307 = vsub.f32 %v1295, %v1242
        %v1308 = vsub.f32 %v1295, %v1243
        %v1309 = vsub.f32 %v1295, %v1244
        %v1310 = vsub.f32 %v1295, %v1245
        %v1311 = vsub.f32 %v1295, %v1246
        %v1312 = vsub.f32 %v1295, %v1247
        %v1313 = vsub.f32 %v1295, %v1248
        %v1314 = vsub.f32 %v1295, %v1249
        %v1315 = vsub.f32 %v1295, %v1250
        %v1316 = vsub.f32 %v1295, %v1251
        %v1317 = vsub.f32 %v1295, %v1252
        %v1318 = vsub.f32 %v1295, %v1253
        %v1319 = vsub.f32 %v1295, %v1254
        %v1320 = vsub.f32 %v1295, %v1255
        %v1321 = vsub.f32 %v1295, %v1256
        %v1322 = vsub.f32 %v1295, %v1257
        %v1323 = vsub.f32 %v1295, %v1258
        %v1324 = vsub.f32 %v1295, %v1259
        %v1325 = vsub.f32 %v1295, %v1260
        %v1326 = vsub.f32 %v1295, %v1261
        %v1327 = vsub.f32 %v1295, %v1262
        %v1328 = vsub.f32 %v1295, %v1263
        %v1329 = vsub.f32 %v1295, %v1264
        %v1330 = vsub.f32 %v1295, %v1265
        %v1331 = vsub.f32 %v1295, %v1266
        %v1332 = vsub.f32 %v1295, %v1267
        %v1333 = vsub.f32 %v1295, %v1268
        %v1334 = vsub.f32 %v1295, %v1269
        %v1335 = vsub.f32 %v1295, %v1270
        %v1336 = vsub.f32 %v1295, %v1271
        %v1337 = vsub.f32 %v1295, %v1272
        %v1338 = vsub.f32 %v1295, %v1273
        %v1339 = vsub.f32 %v1295, %v1274
        %v1340 = vsub.f32 %v1295, %v1275
        %v1341 = vsub.f32 %v1295, %v1276
        %v1342 = vsub.f32 %v1295, %v1277
        %v1343 = vsub.f32 %v1295, %v1278
        %v1344 = vsub.f32 %v1295, %v1279
        %v1345 = vsub.f32 %v1295, %v1280
        %v1346 = vsub.f32 %v1295, %v1281
        %v1347 = vsub.f32 %v1295, %v1282
        %v1348 = vsub.f32 %v1295, %v1283
        %v1349 = vsub.f32 %v1295, %v1284
        %v1350 = vsub.f32 %v1295, %v1285
        %v1351 = vsub.f32 %v1295, %v1286
        %v1352 = vsub.f32 %v1295, %v1287
        %v1353 = vsub.f32 %v1295, %v1288
        %v1354 = vsub.f32 %v1295, %v1289
        %v1355 = vsub.f32 %v1295, %v1290
        %v1356 = vsub.f32 %v1295, %v1291
        %v1357 = vsub.f32 %v1295, %v1292
        %v1358 = vsub.f32 %v1295, %v1293
        %v1359 = vsub.f32 %v1295, %v1294
        %v1360 = vsel %vm1166, %v1295, %v1296
        %v1361 = vsel %vm1167, %v1295, %v1297
        %v1362 = vsel %vm1168, %v1295, %v1298
        %v1363 = vsel %vm1169, %v1295, %v1299
        %v1364 = vsel %vm1170, %v1295, %v1300
        %v1365 = vsel %vm1171, %v1295, %v1301
        %v1366 = vsel %vm1172, %v1295, %v1302
        %v1367 = vsel %vm1173, %v1295, %v1303
        %v1368 = vsel %vm1174, %v1295, %v1304
        %v1369 = vsel %vm1175, %v1295, %v1305
        %v1370 = vsel %vm1176, %v1295, %v1306
        %v1371 = vsel %vm1177, %v1295, %v1307
        %v1372 = vsel %vm1178, %v1295, %v1308
        %v1373 = vsel %vm1179, %v1295, %v1309
        %v1374 = vsel %vm1180, %v1295, %v1310
        %v1375 = vsel %vm1181, %v1295, %v1311
        %v1376 = vsel %vm1182, %v1295, %v1312
        %v1377 = vsel %vm1183, %v1295, %v1313
        %v1378 = vsel %vm1184, %v1295, %v1314
        %v1379 = vsel %vm1185, %v1295, %v1315
        %v1380 = vsel %vm1186, %v1295, %v1316
        %v1381 = vsel %vm1187, %v1295, %v1317
        %v1382 = vsel %vm1188, %v1295, %v1318
        %v1383 = vsel %vm1189, %v1295, %v1319
        %v1384 = vsel %vm1190, %v1295, %v1320
        %v1385 = vsel %vm1191, %v1295, %v1321
        %v1386 = vsel %vm1192, %v1295, %v1322
        %v1387 = vsel %vm1193, %v1295, %v1323
        %v1388 = vsel %vm1194, %v1295, %v1324
        %v1389 = vsel %vm1195, %v1295, %v1325
        %v1390 = vsel %vm1196, %v1295, %v1326
        %v1391 = vsel %vm1197, %v1295, %v1327
        %v1392 = vsel %vm1198, %v1295, %v1328
        %v1393 = vsel %vm1199, %v1295, %v1329
        %v1394 = vsel %vm1200, %v1295, %v1330
        %v1395 = vsel %vm1201, %v1295, %v1331
        %v1396 = vsel %vm1202, %v1295, %v1332
        %v1397 = vsel %vm1203, %v1295, %v1333
        %v1398 = vsel %vm1204, %v1295, %v1334
        %v1399 = vsel %vm1205, %v1295, %v1335
        %v1400 = vsel %vm1206, %v1295, %v1336
        %v1401 = vsel %vm1207, %v1295, %v1337
        %v1402 = vsel %vm1208, %v1295, %v1338
        %v1403 = vsel %vm1209, %v1295, %v1339
        %v1404 = vsel %vm1210, %v1295, %v1340
        %v1405 = vsel %vm1211, %v1295, %v1341
        %v1406 = vsel %vm1212, %v1295, %v1342
        %v1407 = vsel %vm1213, %v1295, %v1343
        %v1408 = vsel %vm1214, %v1295, %v1344
        %v1409 = vsel %vm1215, %v1295, %v1345
        %v1410 = vsel %vm1216, %v1295, %v1346
        %v1411 = vsel %vm1217, %v1295, %v1347
        %v1412 = vsel %vm1218, %v1295, %v1348
        %v1413 = vsel %vm1219, %v1295, %v1349
        %v1414 = vsel %vm1220, %v1295, %v1350
        %v1415 = vsel %vm1221, %v1295, %v1351
        %v1416 = vsel %vm1222, %v1295, %v1352
        %v1417 = vsel %vm1223, %v1295, %v1353
        %v1418 = vsel %vm1224, %v1295, %v1354
        %v1419 = vsel %vm1225, %v1295, %v1355
        %v1420 = vsel %vm1226, %v1295, %v1356
        %v1421 = vsel %vm1227, %v1295, %v1357
        %v1422 = vsel %vm1228, %v1295, %v1358
        %v1423 = vsel %vm1229, %v1295, %v1359
        %v1424 = vmul.f32 %v648, 0.2
        %v1425 = vmul.f32 %v1360, 0.8
        %v1426 = vmul.f32 %v1361, 0.8
        %v1427 = vmul.f32 %v1362, 0.8
        %v1428 = vmul.f32 %v1363, 0.8
        %v1429 = vmul.f32 %v1364, 0.8
        %v1430 = vmul.f32 %v1365, 0.8
        %v1431 = vmul.f32 %v1366, 0.8
        %v1432 = vmul.f32 %v1367, 0.8
        %v1433 = vmul.f32 %v1368, 0.8
        %v1434 = vmul.f32 %v1369, 0.8
        %v1435 = vmul.f32 %v1370, 0.8
        %v1436 = vmul.f32 %v1371, 0.8
        %v1437 = vmul.f32 %v1372, 0.8
        %v1438 = vmul.f32 %v1373, 0.8
        %v1439 = vmul.f32 %v1374, 0.8
        %v1440 = vmul.f32 %v1375, 0.8
        %v1441 = vmul.f32 %v1376, 0.8
        %v1442 = vmul.f32 %v1377, 0.8
        %v1443 = vmul.f32 %v1378, 0.8
        %v1444 = vmul.f32 %v1379, 0.8
        %v1445 = vmul.f32 %v1380, 0.8
        %v1446 = vmul.f32 %v1381, 0.8
        %v1447 = vmul.f32 %v1382, 0.8
        %v1448 = vmul.f32 %v1383, 0.8
        %v1449 = vmul.f32 %v1384, 0.8
        %v1450 = vmul.f32 %v1385, 0.8
        %v1451 = vmul.f32 %v1386, 0.8
        %v1452 = vmul.f32 %v1387, 0.8
        %v1453 = vmul.f32 %v1388, 0.8
        %v1454 = vmul.f32 %v1389, 0.8
        %v1455 = vmul.f32 %v1390, 0.8
        %v1456 = vmul.f32 %v1391, 0.8
        %v1457 = vmul.f32 %v1392, 0.8
        %v1458 = vmul.f32 %v1393, 0.8
        %v1459 = vmul.f32 %v1394, 0.8
        %v1460 = vmul.f32 %v1395, 0.8
        %v1461 = vmul.f32 %v1396, 0.8
        %v1462 = vmul.f32 %v1397, 0.8
        %v1463 = vmul.f32 %v1398, 0.8
        %v1464 = vmul.f32 %v1399, 0.8
        %v1465 = vmul.f32 %v1400, 0.8
        %v1466 = vmul.f32 %v1401, 0.8
        %v1467 = vmul.f32 %v1402, 0.8
        %v1468 = vmul.f32 %v1403, 0.8
        %v1469 = vmul.f32 %v1404, 0.8
        %v1470 = vmul.f32 %v1405, 0.8
        %v1471 = vmul.f32 %v1406, 0.8
        %v1472 = vmul.f32 %v1407, 0.8
        %v1473 = vmul.f32 %v1408, 0.8
        %v1474 = vmul.f32 %v1409, 0.8
        %v1475 = vmul.f32 %v1410, 0.8
        %v1476 = vmul.f32 %v1411, 0.8
        %v1477 = vmul.f32 %v1412, 0.8
        %v1478 = vmul.f32 %v1413, 0.8
        %v1479 = vmul.f32 %v1414, 0.8
        %v1480 = vmul.f32 %v1415, 0.8
        %v1481 = vmul.f32 %v1416, 0.8
        %v1482 = vmul.f32 %v1417, 0.8
        %v1483 = vmul.f32 %v1418, 0.8
        %v1484 = vmul.f32 %v1419, 0.8
        %v1485 = vmul.f32 %v1420, 0.8
        %v1486 = vmul.f32 %v1421, 0.8
        %v1487 = vmul.f32 %v1422, 0.8
        %v1488 = vmul.f32 %v1423, 0.8
        %v1489 = vperm.slane %v1424, 0
        %v1490 = vadd.f32 %v1489, %v1425
        %v1491 = vadd.f32 %v1489, %v1426
        %v1492 = vadd.f32 %v1489, %v1427
        %v1493 = vadd.f32 %v1489, %v1428
        %v1494 = vadd.f32 %v1489, %v1429
        %v1495 = vadd.f32 %v1489, %v1430
        %v1496 = vadd.f32 %v1489, %v1431
        %v1497 = vadd.f32 %v1489, %v1432
        %v1498 = vadd.f32 %v1489, %v1433
        %v1499 = vadd.f32 %v1489, %v1434
        %v1500 = vadd.f32 %v1489, %v1435
        %v1501 = vadd.f32 %v1489, %v1436
        %v1502 = vadd.f32 %v1489, %v1437
        %v1503 = vadd.f32 %v1489, %v1438
        %v1504 = vadd.f32 %v1489, %v1439
        %v1505 = vadd.f32 %v1489, %v1440
        %v1506 = vadd.f32 %v1489, %v1441
        %v1507 = vadd.f32 %v1489, %v1442
        %v1508 = vadd.f32 %v1489, %v1443
        %v1509 = vadd.f32 %v1489, %v1444
        %v1510 = vadd.f32 %v1489, %v1445
        %v1511 = vadd.f32 %v1489, %v1446
        %v1512 = vadd.f32 %v1489, %v1447
        %v1513 = vadd.f32 %v1489, %v1448
        %v1514 = vadd.f32 %v1489, %v1449
        %v1515 = vadd.f32 %v1489, %v1450
        %v1516 = vadd.f32 %v1489, %v1451
        %v1517 = vadd.f32 %v1489, %v1452
        %v1518 = vadd.f32 %v1489, %v1453
        %v1519 = vadd.f32 %v1489, %v1454
        %v1520 = vadd.f32 %v1489, %v1455
        %v1521 = vadd.f32 %v1489, %v1456
        %v1522 = vadd.f32 %v1489, %v1457
        %v1523 = vadd.f32 %v1489, %v1458
        %v1524 = vadd.f32 %v1489, %v1459
        %v1525 = vadd.f32 %v1489, %v1460
        %v1526 = vadd.f32 %v1489, %v1461
        %v1527 = vadd.f32 %v1489, %v1462
        %v1528 = vadd.f32 %v1489, %v1463
        %v1529 = vadd.f32 %v1489, %v1464
        %v1530 = vadd.f32 %v1489, %v1465
        %v1531 = vadd.f32 %v1489, %v1466
        %v1532 = vadd.f32 %v1489, %v1467
        %v1533 = vadd.f32 %v1489, %v1468
        %v1534 = vadd.f32 %v1489, %v1469
        %v1535 = vadd.f32 %v1489, %v1470
        %v1536 = vadd.f32 %v1489, %v1471
        %v1537 = vadd.f32 %v1489, %v1472
        %v1538 = vadd.f32 %v1489, %v1473
        %v1539 = vadd.f32 %v1489, %v1474
        %v1540 = vadd.f32 %v1489, %v1475
        %v1541 = vadd.f32 %v1489, %v1476
        %v1542 = vadd.f32 %v1489, %v1477
        %v1543 = vadd.f32 %v1489, %v1478
        %v1544 = vadd.f32 %v1489, %v1479
        %v1545 = vadd.f32 %v1489, %v1480
        %v1546 = vadd.f32 %v1489, %v1481
        %v1547 = vadd.f32 %v1489, %v1482
        %v1548 = vadd.f32 %v1489, %v1483
        %v1549 = vadd.f32 %v1489, %v1484
        %v1550 = vadd.f32 %v1489, %v1485
        %v1551 = vadd.f32 %v1489, %v1486
        %v1552 = vadd.f32 %v1489, %v1487
        %v1553 = vadd.f32 %v1489, %v1488
        %v1554 = vld [vmem:[%s2] sm:$0xff]
        %v1555 = vld [vmem:[%s2 + $0x8] sm:$0xff]
        %v1556 = vld [vmem:[%s2 + $0x10] sm:$0xff]
        %v1557 = vld [vmem:[%s2 + $0x18] sm:$0xff]
        %vm1558 = vcmask 261120
        %v1560 = vsel %vm1558, %v1490, 0
        %v1563 = vsel %vm1558, %v1491, 0
        %v1566 = vsel %vm1558, %v1492, 0
        %v1569 = vsel %vm1558, %v1493, 0
        %v1572 = vsel %vm1558, %v1494, 0
        %v1575 = vsel %vm1558, %v1495, 0
        %v1578 = vsel %vm1558, %v1496, 0
        %v1581 = vsel %vm1558, %v1497, 0
        %v1584 = vsel %vm1558, %v1498, 0
        %v1587 = vsel %vm1558, %v1499, 0
        %v1590 = vsel %vm1558, %v1500, 0
        %v1593 = vsel %vm1558, %v1501, 0
        %v1596 = vsel %vm1558, %v1502, 0
        %v1599 = vsel %vm1558, %v1503, 0
        %v1602 = vsel %vm1558, %v1504, 0
        %v1605 = vsel %vm1558, %v1505, 0
        %v1608 = vsel %vm1558, %v1506, 0
        %v1611 = vsel %vm1558, %v1507, 0
        %v1614 = vsel %vm1558, %v1508, 0
        %v1617 = vsel %vm1558, %v1509, 0
        %v1620 = vsel %vm1558, %v1510, 0
        %v1623 = vsel %vm1558, %v1511, 0
        %v1626 = vsel %vm1558, %v1512, 0
        %v1629 = vsel %vm1558, %v1513, 0
        %v1632 = vsel %vm1558, %v1514, 0
        %v1635 = vsel %vm1558, %v1515, 0
        %v1638 = vsel %vm1558, %v1516, 0
        %v1641 = vsel %vm1558, %v1517, 0
        %v1644 = vsel %vm1558, %v1518, 0
        %v1647 = vsel %vm1558, %v1519, 0
        %v1650 = vsel %vm1558, %v1520, 0
        %v1653 = vsel %vm1558, %v1521, 0
        %v1656 = vsel %vm1558, %v1522, 0
        %v1659 = vsel %vm1558, %v1523, 0
        %v1662 = vsel %vm1558, %v1524, 0
        %v1665 = vsel %vm1558, %v1525, 0
        %v1668 = vsel %vm1558, %v1526, 0
        %v1671 = vsel %vm1558, %v1527, 0
        %v1674 = vsel %vm1558, %v1528, 0
        %v1677 = vsel %vm1558, %v1529, 0
        %v1680 = vsel %vm1558, %v1530, 0
        %v1683 = vsel %vm1558, %v1531, 0
        %v1686 = vsel %vm1558, %v1532, 0
        %v1689 = vsel %vm1558, %v1533, 0
        %v1692 = vsel %vm1558, %v1534, 0
        %v1695 = vsel %vm1558, %v1535, 0
        %v1698 = vsel %vm1558, %v1536, 0
        %v1701 = vsel %vm1558, %v1537, 0
        %v1704 = vsel %vm1558, %v1538, 0
        %v1707 = vsel %vm1558, %v1539, 0
        %v1710 = vsel %vm1558, %v1540, 0
        %v1713 = vsel %vm1558, %v1541, 0
        %v1716 = vsel %vm1558, %v1542, 0
        %v1719 = vsel %vm1558, %v1543, 0
        %v1722 = vsel %vm1558, %v1544, 0
        %v1725 = vsel %vm1558, %v1545, 0
        %v1728 = vsel %vm1558, %v1546, 0
        %v1731 = vsel %vm1558, %v1547, 0
        %v1734 = vsel %vm1558, %v1548, 0
        %v1737 = vsel %vm1558, %v1549, 0
        %v1740 = vsel %vm1558, %v1550, 0
        %v1743 = vsel %vm1558, %v1551, 0
        %v1746 = vsel %vm1558, %v1552, 0
        %v1749 = vsel %vm1558, %v1553, 0
        %1751 = vmatpush.msra.mxu0 0.0
        %1752 = vmatpush.msra.mxu0 0.0
        %1753 = vmatpush.msra.mxu0 0.0
        %1754 = vmatpush.msra.mxu0 0.0
        %1755 = vmatpush.msra.mxu0 0.0
        %1756 = vmatpush.msra.mxu0 0.0
        %1757 = vmatpush.msra.mxu0 0.0
        %1758 = vmatpush.msra.mxu0 0.0
        %1759 = vmatpush.msra.mxu0 0.0
        %1760 = vmatpush.msra.mxu0 0.0
        %1761 = vmatpush.msra.mxu0 0.0
        %1762 = vmatpush.msra.mxu0 0.0
        %1763 = vmatpush.msra.mxu0 %v1557
        %1764 = vmatpush.msra.mxu0 %v1556
        %1765 = vmatpush.msra.mxu0 %v1555
        %1766 = vmatpush.msra.mxu0 %v1554
        %1767 = vmatmul.f32.gmra.mxu0 %v1560
        %v1768 = vpop.f32.mrf.mxu0
        %v1769 = vadd.f32 0.0, %v1768
        %1770 = vmatmul.f32.gmra.mxu0 %v1563
        %v1771 = vpop.f32.mrf.mxu0
        %v1772 = vadd.f32 0.0, %v1771
        %1773 = vmatmul.f32.gmra.mxu0 %v1566
        %v1774 = vpop.f32.mrf.mxu0
        %v1775 = vadd.f32 0.0, %v1774
        %1776 = vmatmul.f32.gmra.mxu0 %v1569
        %v1777 = vpop.f32.mrf.mxu0
        %v1778 = vadd.f32 0.0, %v1777
        %1779 = vmatmul.f32.gmra.mxu0 %v1572
        %v1780 = vpop.f32.mrf.mxu0
        %v1781 = vadd.f32 0.0, %v1780
        %1782 = vmatmul.f32.gmra.mxu0 %v1575
        %v1783 = vpop.f32.mrf.mxu0
        %v1784 = vadd.f32 0.0, %v1783
        %1785 = vmatmul.f32.gmra.mxu0 %v1578
        %v1786 = vpop.f32.mrf.mxu0
        %v1787 = vadd.f32 0.0, %v1786
        %1788 = vmatmul.f32.gmra.mxu0 %v1581
        %v1789 = vpop.f32.mrf.mxu0
        %v1790 = vadd.f32 0.0, %v1789
        %1791 = vmatmul.f32.gmra.mxu0 %v1584
        %v1792 = vpop.f32.mrf.mxu0
        %v1793 = vadd.f32 0.0, %v1792
        %1794 = vmatmul.f32.gmra.mxu0 %v1587
        %v1795 = vpop.f32.mrf.mxu0
        %v1796 = vadd.f32 0.0, %v1795
        %1797 = vmatmul.f32.gmra.mxu0 %v1590
        %v1798 = vpop.f32.mrf.mxu0
        %v1799 = vadd.f32 0.0, %v1798
        %1800 = vmatmul.f32.gmra.mxu0 %v1593
        %v1801 = vpop.f32.mrf.mxu0
        %v1802 = vadd.f32 0.0, %v1801
        %1803 = vmatmul.f32.gmra.mxu0 %v1596
        %v1804 = vpop.f32.mrf.mxu0
        %v1805 = vadd.f32 0.0, %v1804
        %1806 = vmatmul.f32.gmra.mxu0 %v1599
        %v1807 = vpop.f32.mrf.mxu0
        %v1808 = vadd.f32 0.0, %v1807
        %1809 = vmatmul.f32.gmra.mxu0 %v1602
        %v1810 = vpop.f32.mrf.mxu0
        %v1811 = vadd.f32 0.0, %v1810
        %1812 = vmatmul.f32.gmra.mxu0 %v1605
        %v1813 = vpop.f32.mrf.mxu0
        %v1814 = vadd.f32 0.0, %v1813
        %1815 = vmatmul.f32.gmra.mxu0 %v1608
        %v1816 = vpop.f32.mrf.mxu0
        %v1817 = vadd.f32 0.0, %v1816
        %1818 = vmatmul.f32.gmra.mxu0 %v1611
        %v1819 = vpop.f32.mrf.mxu0
        %v1820 = vadd.f32 0.0, %v1819
        %1821 = vmatmul.f32.gmra.mxu0 %v1614
        %v1822 = vpop.f32.mrf.mxu0
        %v1823 = vadd.f32 0.0, %v1822
        %1824 = vmatmul.f32.gmra.mxu0 %v1617
        %v1825 = vpop.f32.mrf.mxu0
        %v1826 = vadd.f32 0.0, %v1825
        %1827 = vmatmul.f32.gmra.mxu0 %v1620
        %v1828 = vpop.f32.mrf.mxu0
        %v1829 = vadd.f32 0.0, %v1828
        %1830 = vmatmul.f32.gmra.mxu0 %v1623
        %v1831 = vpop.f32.mrf.mxu0
        %v1832 = vadd.f32 0.0, %v1831
        %1833 = vmatmul.f32.gmra.mxu0 %v1626
        %v1834 = vpop.f32.mrf.mxu0
        %v1835 = vadd.f32 0.0, %v1834
        %1836 = vmatmul.f32.gmra.mxu0 %v1629
        %v1837 = vpop.f32.mrf.mxu0
        %v1838 = vadd.f32 0.0, %v1837
        %1839 = vmatmul.f32.gmra.mxu0 %v1632
        %v1840 = vpop.f32.mrf.mxu0
        %v1841 = vadd.f32 0.0, %v1840
        %1842 = vmatmul.f32.gmra.mxu0 %v1635
        %v1843 = vpop.f32.mrf.mxu0
        %v1844 = vadd.f32 0.0, %v1843
        %1845 = vmatmul.f32.gmra.mxu0 %v1638
        %v1846 = vpop.f32.mrf.mxu0
        %v1847 = vadd.f32 0.0, %v1846
        %1848 = vmatmul.f32.gmra.mxu0 %v1641
        %v1849 = vpop.f32.mrf.mxu0
        %v1850 = vadd.f32 0.0, %v1849
        %1851 = vmatmul.f32.gmra.mxu0 %v1644
        %v1852 = vpop.f32.mrf.mxu0
        %v1853 = vadd.f32 0.0, %v1852
        %1854 = vmatmul.f32.gmra.mxu0 %v1647
        %v1855 = vpop.f32.mrf.mxu0
        %v1856 = vadd.f32 0.0, %v1855
        %1857 = vmatmul.f32.gmra.mxu0 %v1650
        %v1858 = vpop.f32.mrf.mxu0
        %v1859 = vadd.f32 0.0, %v1858
        %1860 = vmatmul.f32.gmra.mxu0 %v1653
        %v1861 = vpop.f32.mrf.mxu0
        %v1862 = vadd.f32 0.0, %v1861
        %1863 = vmatmul.f32.gmra.mxu0 %v1656
        %v1864 = vpop.f32.mrf.mxu0
        %v1865 = vadd.f32 0.0, %v1864
        %1866 = vmatmul.f32.gmra.mxu0 %v1659
        %v1867 = vpop.f32.mrf.mxu0
        %v1868 = vadd.f32 0.0, %v1867
        %1869 = vmatmul.f32.gmra.mxu0 %v1662
        %v1870 = vpop.f32.mrf.mxu0
        %v1871 = vadd.f32 0.0, %v1870
        %1872 = vmatmul.f32.gmra.mxu0 %v1665
        %v1873 = vpop.f32.mrf.mxu0
        %v1874 = vadd.f32 0.0, %v1873
        %1875 = vmatmul.f32.gmra.mxu0 %v1668
        %v1876 = vpop.f32.mrf.mxu0
        %v1877 = vadd.f32 0.0, %v1876
        %1878 = vmatmul.f32.gmra.mxu0 %v1671
        %v1879 = vpop.f32.mrf.mxu0
        %v1880 = vadd.f32 0.0, %v1879
        %1881 = vmatmul.f32.gmra.mxu0 %v1674
        %v1882 = vpop.f32.mrf.mxu0
        %v1883 = vadd.f32 0.0, %v1882
        %1884 = vmatmul.f32.gmra.mxu0 %v1677
        %v1885 = vpop.f32.mrf.mxu0
        %v1886 = vadd.f32 0.0, %v1885
        %1887 = vmatmul.f32.gmra.mxu0 %v1680
        %v1888 = vpop.f32.mrf.mxu0
        %v1889 = vadd.f32 0.0, %v1888
        %1890 = vmatmul.f32.gmra.mxu0 %v1683
        %v1891 = vpop.f32.mrf.mxu0
        %v1892 = vadd.f32 0.0, %v1891
        %1893 = vmatmul.f32.gmra.mxu0 %v1686
        %v1894 = vpop.f32.mrf.mxu0
        %v1895 = vadd.f32 0.0, %v1894
        %1896 = vmatmul.f32.gmra.mxu0 %v1689
        %v1897 = vpop.f32.mrf.mxu0
        %v1898 = vadd.f32 0.0, %v1897
        %1899 = vmatmul.f32.gmra.mxu0 %v1692
        %v1900 = vpop.f32.mrf.mxu0
        %v1901 = vadd.f32 0.0, %v1900
        %1902 = vmatmul.f32.gmra.mxu0 %v1695
        %v1903 = vpop.f32.mrf.mxu0
        %v1904 = vadd.f32 0.0, %v1903
        %1905 = vmatmul.f32.gmra.mxu0 %v1698
        %v1906 = vpop.f32.mrf.mxu0
        %v1907 = vadd.f32 0.0, %v1906
        %1908 = vmatmul.f32.gmra.mxu0 %v1701
        %v1909 = vpop.f32.mrf.mxu0
        %v1910 = vadd.f32 0.0, %v1909
        %1911 = vmatmul.f32.gmra.mxu0 %v1704
        %v1912 = vpop.f32.mrf.mxu0
        %v1913 = vadd.f32 0.0, %v1912
        %1914 = vmatmul.f32.gmra.mxu0 %v1707
        %v1915 = vpop.f32.mrf.mxu0
        %v1916 = vadd.f32 0.0, %v1915
        %1917 = vmatmul.f32.gmra.mxu0 %v1710
        %v1918 = vpop.f32.mrf.mxu0
        %v1919 = vadd.f32 0.0, %v1918
        %1920 = vmatmul.f32.gmra.mxu0 %v1713
        %v1921 = vpop.f32.mrf.mxu0
        %v1922 = vadd.f32 0.0, %v1921
        %1923 = vmatmul.f32.gmra.mxu0 %v1716
        %v1924 = vpop.f32.mrf.mxu0
        %v1925 = vadd.f32 0.0, %v1924
        %1926 = vmatmul.f32.gmra.mxu0 %v1719
        %v1927 = vpop.f32.mrf.mxu0
        %v1928 = vadd.f32 0.0, %v1927
        %1929 = vmatmul.f32.gmra.mxu0 %v1722
        %v1930 = vpop.f32.mrf.mxu0
        %v1931 = vadd.f32 0.0, %v1930
        %1932 = vmatmul.f32.gmra.mxu0 %v1725
        %v1933 = vpop.f32.mrf.mxu0
        %v1934 = vadd.f32 0.0, %v1933
        %1935 = vmatmul.f32.gmra.mxu0 %v1728
        %v1936 = vpop.f32.mrf.mxu0
        %v1937 = vadd.f32 0.0, %v1936
        %1938 = vmatmul.f32.gmra.mxu0 %v1731
        %v1939 = vpop.f32.mrf.mxu0
        %v1940 = vadd.f32 0.0, %v1939
        %1941 = vmatmul.f32.gmra.mxu0 %v1734
        %v1942 = vpop.f32.mrf.mxu0
        %v1943 = vadd.f32 0.0, %v1942
        %1944 = vmatmul.f32.gmra.mxu0 %v1737
        %v1945 = vpop.f32.mrf.mxu0
        %v1946 = vadd.f32 0.0, %v1945
        %1947 = vmatmul.f32.gmra.mxu0 %v1740
        %v1948 = vpop.f32.mrf.mxu0
        %v1949 = vadd.f32 0.0, %v1948
        %1950 = vmatmul.f32.gmra.mxu0 %v1743
        %v1951 = vpop.f32.mrf.mxu0
        %v1952 = vadd.f32 0.0, %v1951
        %1953 = vmatmul.f32.gmra.mxu0 %v1746
        %v1954 = vpop.f32.mrf.mxu0
        %v1955 = vadd.f32 0.0, %v1954
        %1956 = vmatmul.f32.gmra.mxu0 %v1749
        %v1957 = vpop.f32.mrf.mxu0
        %v1958 = vadd.f32 0.0, %v1957
        %1959 = vdwg.mxu0
        %v1960 = vmul.f32 %v458, %v458
        %v1961 = vmul.f32 %v461, %v461
        %v1962 = vmul.f32 %v464, %v464
        %v1963 = vmul.f32 %v467, %v467
        %v1964 = vmul.f32 %v470, %v470
        %v1965 = vmul.f32 %v473, %v473
        %v1966 = vmul.f32 %v476, %v476
        %v1967 = vmul.f32 %v479, %v479
        %v1968 = vmul.f32 %v482, %v482
        %v1969 = vmul.f32 %v485, %v485
        %v1970 = vmul.f32 %v488, %v488
        %v1971 = vmul.f32 %v491, %v491
        %v1972 = vmul.f32 %v494, %v494
        %v1973 = vmul.f32 %v497, %v497
        %v1974 = vmul.f32 %v500, %v500
        %v1975 = vmul.f32 %v503, %v503
        %v1976 = vmul.f32 %v506, %v506
        %v1977 = vmul.f32 %v509, %v509
        %v1978 = vmul.f32 %v512, %v512
        %v1979 = vmul.f32 %v515, %v515
        %v1980 = vmul.f32 %v518, %v518
        %v1981 = vmul.f32 %v521, %v521
        %v1982 = vmul.f32 %v524, %v524
        %v1983 = vmul.f32 %v527, %v527
        %v1984 = vmul.f32 %v530, %v530
        %v1985 = vmul.f32 %v533, %v533
        %v1986 = vmul.f32 %v536, %v536
        %v1987 = vmul.f32 %v539, %v539
        %v1988 = vmul.f32 %v542, %v542
        %v1989 = vmul.f32 %v545, %v545
        %v1990 = vmul.f32 %v548, %v548
        %v1991 = vmul.f32 %v551, %v551
        %v1992 = vmul.f32 %v554, %v554
        %v1993 = vmul.f32 %v557, %v557
        %v1994 = vmul.f32 %v560, %v560
        %v1995 = vmul.f32 %v563, %v563
        %v1996 = vmul.f32 %v566, %v566
        %v1997 = vmul.f32 %v569, %v569
        %v1998 = vmul.f32 %v572, %v572
        %v1999 = vmul.f32 %v575, %v575
        %v2000 = vmul.f32 %v578, %v578
        %v2001 = vmul.f32 %v581, %v581
        %v2002 = vmul.f32 %v584, %v584
        %v2003 = vmul.f32 %v587, %v587
        %v2004 = vmul.f32 %v590, %v590
        %v2005 = vmul.f32 %v593, %v593
        %v2006 = vmul.f32 %v596, %v596
        %v2007 = vmul.f32 %v599, %v599
        %v2008 = vmul.f32 %v602, %v602
        %v2009 = vmul.f32 %v605, %v605
        %v2010 = vmul.f32 %v608, %v608
        %v2011 = vmul.f32 %v611, %v611
        %v2012 = vmul.f32 %v614, %v614
        %v2013 = vmul.f32 %v617, %v617
        %v2014 = vmul.f32 %v620, %v620
        %v2015 = vmul.f32 %v623, %v623
        %v2016 = vmul.f32 %v626, %v626
        %v2017 = vmul.f32 %v629, %v629
        %v2018 = vmul.f32 %v632, %v632
        %v2019 = vmul.f32 %v635, %v635
        %v2020 = vmul.f32 %v638, %v638
        %v2021 = vmul.f32 %v641, %v641
        %v2022 = vmul.f32 %v644, %v644
        %v2023 = vmul.f32 %v647, %v647
        %2088 = vrot.lane.b32.xlu0 %v1769, 96
        %v2089 = vpop.permute.xlu0 %2088
        %2090 = vrot.lane.b32.xlu0 %v1772, 96
        %v2091 = vpop.permute.xlu0 %2090
        %2092 = vrot.lane.b32.xlu0 %v1775, 96
        %v2093 = vpop.permute.xlu0 %2092
        %2094 = vrot.lane.b32.xlu0 %v1778, 96
        %v2095 = vpop.permute.xlu0 %2094
        %2096 = vrot.lane.b32.xlu0 %v1781, 96
        %v2097 = vpop.permute.xlu0 %2096
        %2098 = vrot.lane.b32.xlu0 %v1784, 96
        %v2099 = vpop.permute.xlu0 %2098
        %2100 = vrot.lane.b32.xlu0 %v1787, 96
        %v2101 = vpop.permute.xlu0 %2100
        %2102 = vrot.lane.b32.xlu0 %v1790, 96
        %v2103 = vpop.permute.xlu0 %2102
        %2104 = vrot.lane.b32.xlu0 %v1793, 96
        %v2105 = vpop.permute.xlu0 %2104
        %2106 = vrot.lane.b32.xlu0 %v1796, 96
        %v2107 = vpop.permute.xlu0 %2106
        %2108 = vrot.lane.b32.xlu0 %v1799, 96
        %v2109 = vpop.permute.xlu0 %2108
        %2110 = vrot.lane.b32.xlu0 %v1802, 96
        %v2111 = vpop.permute.xlu0 %2110
        %2112 = vrot.lane.b32.xlu0 %v1805, 96
        %v2113 = vpop.permute.xlu0 %2112
        %2114 = vrot.lane.b32.xlu0 %v1808, 96
        %v2115 = vpop.permute.xlu0 %2114
        %2116 = vrot.lane.b32.xlu0 %v1811, 96
        %v2117 = vpop.permute.xlu0 %2116
        %2118 = vrot.lane.b32.xlu0 %v1814, 96
        %v2119 = vpop.permute.xlu0 %2118
        %2120 = vrot.lane.b32.xlu0 %v1817, 96
        %v2121 = vpop.permute.xlu0 %2120
        %2122 = vrot.lane.b32.xlu0 %v1820, 96
        %v2123 = vpop.permute.xlu0 %2122
        %2124 = vrot.lane.b32.xlu0 %v1823, 96
        %v2125 = vpop.permute.xlu0 %2124
        %2126 = vrot.lane.b32.xlu0 %v1826, 96
        %v2127 = vpop.permute.xlu0 %2126
        %2128 = vrot.lane.b32.xlu0 %v1829, 96
        %v2129 = vpop.permute.xlu0 %2128
        %2130 = vrot.lane.b32.xlu0 %v1832, 96
        %v2131 = vpop.permute.xlu0 %2130
        %2132 = vrot.lane.b32.xlu0 %v1835, 96
        %v2133 = vpop.permute.xlu0 %2132
        %2134 = vrot.lane.b32.xlu0 %v1838, 96
        %v2135 = vpop.permute.xlu0 %2134
        %2136 = vrot.lane.b32.xlu0 %v1841, 96
        %v2137 = vpop.permute.xlu0 %2136
        %2138 = vrot.lane.b32.xlu0 %v1844, 96
        %v2139 = vpop.permute.xlu0 %2138
        %2140 = vrot.lane.b32.xlu0 %v1847, 96
        %v2141 = vpop.permute.xlu0 %2140
        %2142 = vrot.lane.b32.xlu0 %v1850, 96
        %v2143 = vpop.permute.xlu0 %2142
        %2144 = vrot.lane.b32.xlu0 %v1853, 96
        %v2145 = vpop.permute.xlu0 %2144
        %2146 = vrot.lane.b32.xlu0 %v1856, 96
        %v2147 = vpop.permute.xlu0 %2146
        %2148 = vrot.lane.b32.xlu0 %v1859, 96
        %v2149 = vpop.permute.xlu0 %2148
        %2150 = vrot.lane.b32.xlu0 %v1862, 96
        %v2151 = vpop.permute.xlu0 %2150
        %2152 = vrot.lane.b32.xlu0 %v1865, 96
        %v2153 = vpop.permute.xlu0 %2152
        %2154 = vrot.lane.b32.xlu0 %v1868, 96
        %v2155 = vpop.permute.xlu0 %2154
        %2156 = vrot.lane.b32.xlu0 %v1871, 96
        %v2157 = vpop.permute.xlu0 %2156
        %2158 = vrot.lane.b32.xlu0 %v1874, 96
        %v2159 = vpop.permute.xlu0 %2158
        %2160 = vrot.lane.b32.xlu0 %v1877, 96
        %v2161 = vpop.permute.xlu0 %2160
        %2162 = vrot.lane.b32.xlu0 %v1880, 96
        %v2163 = vpop.permute.xlu0 %2162
        %2164 = vrot.lane.b32.xlu0 %v1883, 96
        %v2165 = vpop.permute.xlu0 %2164
        %2166 = vrot.lane.b32.xlu0 %v1886, 96
        %v2167 = vpop.permute.xlu0 %2166
        %2168 = vrot.lane.b32.xlu0 %v1889, 96
        %v2169 = vpop.permute.xlu0 %2168
        %2170 = vrot.lane.b32.xlu0 %v1892, 96
        %v2171 = vpop.permute.xlu0 %2170
        %2172 = vrot.lane.b32.xlu0 %v1895, 96
        %v2173 = vpop.permute.xlu0 %2172
        %2174 = vrot.lane.b32.xlu0 %v1898, 96
        %v2175 = vpop.permute.xlu0 %2174
        %2176 = vrot.lane.b32.xlu0 %v1901, 96
        %v2177 = vpop.permute.xlu0 %2176
        %2178 = vrot.lane.b32.xlu0 %v1904, 96
        %v2179 = vpop.permute.xlu0 %2178
        %2180 = vrot.lane.b32.xlu0 %v1907, 96
        %v2181 = vpop.permute.xlu0 %2180
        %2182 = vrot.lane.b32.xlu0 %v1910, 96
        %v2183 = vpop.permute.xlu0 %2182
        %2184 = vrot.lane.b32.xlu0 %v1913, 96
        %v2185 = vpop.permute.xlu0 %2184
        %2186 = vrot.lane.b32.xlu0 %v1916, 96
        %v2187 = vpop.permute.xlu0 %2186
        %2188 = vrot.lane.b32.xlu0 %v1919, 96
        %v2189 = vpop.permute.xlu0 %2188
        %2190 = vrot.lane.b32.xlu0 %v1922, 96
        %v2191 = vpop.permute.xlu0 %2190
        %2192 = vrot.lane.b32.xlu0 %v1925, 96
        %v2193 = vpop.permute.xlu0 %2192
        %2194 = vrot.lane.b32.xlu0 %v1928, 96
        %v2195 = vpop.permute.xlu0 %2194
        %2196 = vrot.lane.b32.xlu0 %v1931, 96
        %v2197 = vpop.permute.xlu0 %2196
        %2198 = vrot.lane.b32.xlu0 %v1934, 96
        %v2199 = vpop.permute.xlu0 %2198
        %2200 = vrot.lane.b32.xlu0 %v1937, 96
        %v2201 = vpop.permute.xlu0 %2200
        %2202 = vrot.lane.b32.xlu0 %v1940, 96
        %v2203 = vpop.permute.xlu0 %2202
        %2204 = vrot.lane.b32.xlu0 %v1943, 96
        %v2205 = vpop.permute.xlu0 %2204
        %2206 = vrot.lane.b32.xlu0 %v1946, 96
        %v2207 = vpop.permute.xlu0 %2206
        %2208 = vrot.lane.b32.xlu0 %v1949, 96
        %v2209 = vpop.permute.xlu0 %2208
        %2210 = vrot.lane.b32.xlu0 %v1952, 96
        %v2211 = vpop.permute.xlu0 %2210
        %2212 = vrot.lane.b32.xlu0 %v1955, 96
        %v2213 = vpop.permute.xlu0 %2212
        %2214 = vrot.lane.b32.xlu0 %v1958, 96
        %v2215 = vpop.permute.xlu0 %2214
        %v2280 = vmul.f32 %v1769, %v2089
        %v2281 = vmul.f32 %v1772, %v2091
        %v2282 = vmul.f32 %v1775, %v2093
        %v2283 = vmul.f32 %v1778, %v2095
        %v2284 = vmul.f32 %v1781, %v2097
        %v2285 = vmul.f32 %v1784, %v2099
        %v2286 = vmul.f32 %v1787, %v2101
        %v2287 = vmul.f32 %v1790, %v2103
        %v2288 = vmul.f32 %v1793, %v2105
        %v2289 = vmul.f32 %v1796, %v2107
        %v2290 = vmul.f32 %v1799, %v2109
        %v2291 = vmul.f32 %v1802, %v2111
        %v2292 = vmul.f32 %v1805, %v2113
        %v2293 = vmul.f32 %v1808, %v2115
        %v2294 = vmul.f32 %v1811, %v2117
        %v2295 = vmul.f32 %v1814, %v2119
        %v2296 = vmul.f32 %v1817, %v2121
        %v2297 = vmul.f32 %v1820, %v2123
        %v2298 = vmul.f32 %v1823, %v2125
        %v2299 = vmul.f32 %v1826, %v2127
        %v2300 = vmul.f32 %v1829, %v2129
        %v2301 = vmul.f32 %v1832, %v2131
        %v2302 = vmul.f32 %v1835, %v2133
        %v2303 = vmul.f32 %v1838, %v2135
        %v2304 = vmul.f32 %v1841, %v2137
        %v2305 = vmul.f32 %v1844, %v2139
        %v2306 = vmul.f32 %v1847, %v2141
        %v2307 = vmul.f32 %v1850, %v2143
        %v2308 = vmul.f32 %v1853, %v2145
        %v2309 = vmul.f32 %v1856, %v2147
        %v2310 = vmul.f32 %v1859, %v2149
        %v2311 = vmul.f32 %v1862, %v2151
        %v2312 = vmul.f32 %v1865, %v2153
        %v2313 = vmul.f32 %v1868, %v2155
        %v2314 = vmul.f32 %v1871, %v2157
        %v2315 = vmul.f32 %v1874, %v2159
        %v2316 = vmul.f32 %v1877, %v2161
        %v2317 = vmul.f32 %v1880, %v2163
        %v2318 = vmul.f32 %v1883, %v2165
        %v2319 = vmul.f32 %v1886, %v2167
        %v2320 = vmul.f32 %v1889, %v2169
        %v2321 = vmul.f32 %v1892, %v2171
        %v2322 = vmul.f32 %v1895, %v2173
        %v2323 = vmul.f32 %v1898, %v2175
        %v2324 = vmul.f32 %v1901, %v2177
        %v2325 = vmul.f32 %v1904, %v2179
        %v2326 = vmul.f32 %v1907, %v2181
        %v2327 = vmul.f32 %v1910, %v2183
        %v2328 = vmul.f32 %v1913, %v2185
        %v2329 = vmul.f32 %v1916, %v2187
        %v2330 = vmul.f32 %v1919, %v2189
        %v2331 = vmul.f32 %v1922, %v2191
        %v2332 = vmul.f32 %v1925, %v2193
        %v2333 = vmul.f32 %v1928, %v2195
        %v2334 = vmul.f32 %v1931, %v2197
        %v2335 = vmul.f32 %v1934, %v2199
        %v2336 = vmul.f32 %v1937, %v2201
        %v2337 = vmul.f32 %v1940, %v2203
        %v2338 = vmul.f32 %v1943, %v2205
        %v2339 = vmul.f32 %v1946, %v2207
        %v2340 = vmul.f32 %v1949, %v2209
        %v2341 = vmul.f32 %v1952, %v2211
        %v2342 = vmul.f32 %v1955, %v2213
        %v2343 = vmul.f32 %v1958, %v2215
        %v2344 = vmul.f32 %v1960, %v2280
        %v2345 = vmul.f32 %v1961, %v2281
        %v2346 = vmul.f32 %v1962, %v2282
        %v2347 = vmul.f32 %v1963, %v2283
        %v2348 = vmul.f32 %v1964, %v2284
        %v2349 = vmul.f32 %v1965, %v2285
        %v2350 = vmul.f32 %v1966, %v2286
        %v2351 = vmul.f32 %v1967, %v2287
        %v2352 = vmul.f32 %v1968, %v2288
        %v2353 = vmul.f32 %v1969, %v2289
        %v2354 = vmul.f32 %v1970, %v2290
        %v2355 = vmul.f32 %v1971, %v2291
        %v2356 = vmul.f32 %v1972, %v2292
        %v2357 = vmul.f32 %v1973, %v2293
        %v2358 = vmul.f32 %v1974, %v2294
        %v2359 = vmul.f32 %v1975, %v2295
        %v2360 = vmul.f32 %v1976, %v2296
        %v2361 = vmul.f32 %v1977, %v2297
        %v2362 = vmul.f32 %v1978, %v2298
        %v2363 = vmul.f32 %v1979, %v2299
        %v2364 = vmul.f32 %v1980, %v2300
        %v2365 = vmul.f32 %v1981, %v2301
        %v2366 = vmul.f32 %v1982, %v2302
        %v2367 = vmul.f32 %v1983, %v2303
        %v2368 = vmul.f32 %v1984, %v2304
        %v2369 = vmul.f32 %v1985, %v2305
        %v2370 = vmul.f32 %v1986, %v2306
        %v2371 = vmul.f32 %v1987, %v2307
        %v2372 = vmul.f32 %v1988, %v2308
        %v2373 = vmul.f32 %v1989, %v2309
        %v2374 = vmul.f32 %v1990, %v2310
        %v2375 = vmul.f32 %v1991, %v2311
        %v2376 = vmul.f32 %v1992, %v2312
        %v2377 = vmul.f32 %v1993, %v2313
        %v2378 = vmul.f32 %v1994, %v2314
        %v2379 = vmul.f32 %v1995, %v2315
        %v2380 = vmul.f32 %v1996, %v2316
        %v2381 = vmul.f32 %v1997, %v2317
        %v2382 = vmul.f32 %v1998, %v2318
        %v2383 = vmul.f32 %v1999, %v2319
        %v2384 = vmul.f32 %v2000, %v2320
        %v2385 = vmul.f32 %v2001, %v2321
        %v2386 = vmul.f32 %v2002, %v2322
        %v2387 = vmul.f32 %v2003, %v2323
        %v2388 = vmul.f32 %v2004, %v2324
        %v2389 = vmul.f32 %v2005, %v2325
        %v2390 = vmul.f32 %v2006, %v2326
        %v2391 = vmul.f32 %v2007, %v2327
        %v2392 = vmul.f32 %v2008, %v2328
        %v2393 = vmul.f32 %v2009, %v2329
        %v2394 = vmul.f32 %v2010, %v2330
        %v2395 = vmul.f32 %v2011, %v2331
        %v2396 = vmul.f32 %v2012, %v2332
        %v2397 = vmul.f32 %v2013, %v2333
        %v2398 = vmul.f32 %v2014, %v2334
        %v2399 = vmul.f32 %v2015, %v2335
        %v2400 = vmul.f32 %v2016, %v2336
        %v2401 = vmul.f32 %v2017, %v2337
        %v2402 = vmul.f32 %v2018, %v2338
        %v2403 = vmul.f32 %v2019, %v2339
        %v2404 = vmul.f32 %v2020, %v2340
        %v2405 = vmul.f32 %v2021, %v2341
        %v2406 = vmul.f32 %v2022, %v2342
        %v2407 = vmul.f32 %v2023, %v2343
        %v2408 = vmul.f32 %v1769, %v1769
        %v2409 = vmul.f32 %v1772, %v1772
        %v2410 = vmul.f32 %v1775, %v1775
        %v2411 = vmul.f32 %v1778, %v1778
        %v2412 = vmul.f32 %v1781, %v1781
        %v2413 = vmul.f32 %v1784, %v1784
        %v2414 = vmul.f32 %v1787, %v1787
        %v2415 = vmul.f32 %v1790, %v1790
        %v2416 = vmul.f32 %v1793, %v1793
        %v2417 = vmul.f32 %v1796, %v1796
        %v2418 = vmul.f32 %v1799, %v1799
        %v2419 = vmul.f32 %v1802, %v1802
        %v2420 = vmul.f32 %v1805, %v1805
        %v2421 = vmul.f32 %v1808, %v1808
        %v2422 = vmul.f32 %v1811, %v1811
        %v2423 = vmul.f32 %v1814, %v1814
        %v2424 = vmul.f32 %v1817, %v1817
        %v2425 = vmul.f32 %v1820, %v1820
        %v2426 = vmul.f32 %v1823, %v1823
        %v2427 = vmul.f32 %v1826, %v1826
        %v2428 = vmul.f32 %v1829, %v1829
        %v2429 = vmul.f32 %v1832, %v1832
        %v2430 = vmul.f32 %v1835, %v1835
        %v2431 = vmul.f32 %v1838, %v1838
        %v2432 = vmul.f32 %v1841, %v1841
        %v2433 = vmul.f32 %v1844, %v1844
        %v2434 = vmul.f32 %v1847, %v1847
        %v2435 = vmul.f32 %v1850, %v1850
        %v2436 = vmul.f32 %v1853, %v1853
        %v2437 = vmul.f32 %v1856, %v1856
        %v2438 = vmul.f32 %v1859, %v1859
        %v2439 = vmul.f32 %v1862, %v1862
        %v2440 = vmul.f32 %v1865, %v1865
        %v2441 = vmul.f32 %v1868, %v1868
        %v2442 = vmul.f32 %v1871, %v1871
        %v2443 = vmul.f32 %v1874, %v1874
        %v2444 = vmul.f32 %v1877, %v1877
        %v2445 = vmul.f32 %v1880, %v1880
        %v2446 = vmul.f32 %v1883, %v1883
        %v2447 = vmul.f32 %v1886, %v1886
        %v2448 = vmul.f32 %v1889, %v1889
        %v2449 = vmul.f32 %v1892, %v1892
        %v2450 = vmul.f32 %v1895, %v1895
        %v2451 = vmul.f32 %v1898, %v1898
        %v2452 = vmul.f32 %v1901, %v1901
        %v2453 = vmul.f32 %v1904, %v1904
        %v2454 = vmul.f32 %v1907, %v1907
        %v2455 = vmul.f32 %v1910, %v1910
        %v2456 = vmul.f32 %v1913, %v1913
        %v2457 = vmul.f32 %v1916, %v1916
        %v2458 = vmul.f32 %v1919, %v1919
        %v2459 = vmul.f32 %v1922, %v1922
        %v2460 = vmul.f32 %v1925, %v1925
        %v2461 = vmul.f32 %v1928, %v1928
        %v2462 = vmul.f32 %v1931, %v1931
        %v2463 = vmul.f32 %v1934, %v1934
        %v2464 = vmul.f32 %v1937, %v1937
        %v2465 = vmul.f32 %v1940, %v1940
        %v2466 = vmul.f32 %v1943, %v1943
        %v2467 = vmul.f32 %v1946, %v1946
        %v2468 = vmul.f32 %v1949, %v1949
        %v2469 = vmul.f32 %v1952, %v1952
        %v2470 = vmul.f32 %v1955, %v1955
        %v2471 = vmul.f32 %v1958, %v1958
        %v2472 = vmul.f32 %v1960, %v2408
        %v2473 = vmul.f32 %v1961, %v2409
        %v2474 = vmul.f32 %v1962, %v2410
        %v2475 = vmul.f32 %v1963, %v2411
        %v2476 = vmul.f32 %v1964, %v2412
        %v2477 = vmul.f32 %v1965, %v2413
        %v2478 = vmul.f32 %v1966, %v2414
        %v2479 = vmul.f32 %v1967, %v2415
        %v2480 = vmul.f32 %v1968, %v2416
        %v2481 = vmul.f32 %v1969, %v2417
        %v2482 = vmul.f32 %v1970, %v2418
        %v2483 = vmul.f32 %v1971, %v2419
        %v2484 = vmul.f32 %v1972, %v2420
        %v2485 = vmul.f32 %v1973, %v2421
        %v2486 = vmul.f32 %v1974, %v2422
        %v2487 = vmul.f32 %v1975, %v2423
        %v2488 = vmul.f32 %v1976, %v2424
        %v2489 = vmul.f32 %v1977, %v2425
        %v2490 = vmul.f32 %v1978, %v2426
        %v2491 = vmul.f32 %v1979, %v2427
        %v2492 = vmul.f32 %v1980, %v2428
        %v2493 = vmul.f32 %v1981, %v2429
        %v2494 = vmul.f32 %v1982, %v2430
        %v2495 = vmul.f32 %v1983, %v2431
        %v2496 = vmul.f32 %v1984, %v2432
        %v2497 = vmul.f32 %v1985, %v2433
        %v2498 = vmul.f32 %v1986, %v2434
        %v2499 = vmul.f32 %v1987, %v2435
        %v2500 = vmul.f32 %v1988, %v2436
        %v2501 = vmul.f32 %v1989, %v2437
        %v2502 = vmul.f32 %v1990, %v2438
        %v2503 = vmul.f32 %v1991, %v2439
        %v2504 = vmul.f32 %v1992, %v2440
        %v2505 = vmul.f32 %v1993, %v2441
        %v2506 = vmul.f32 %v1994, %v2442
        %v2507 = vmul.f32 %v1995, %v2443
        %v2508 = vmul.f32 %v1996, %v2444
        %v2509 = vmul.f32 %v1997, %v2445
        %v2510 = vmul.f32 %v1998, %v2446
        %v2511 = vmul.f32 %v1999, %v2447
        %v2512 = vmul.f32 %v2000, %v2448
        %v2513 = vmul.f32 %v2001, %v2449
        %v2514 = vmul.f32 %v2002, %v2450
        %v2515 = vmul.f32 %v2003, %v2451
        %v2516 = vmul.f32 %v2004, %v2452
        %v2517 = vmul.f32 %v2005, %v2453
        %v2518 = vmul.f32 %v2006, %v2454
        %v2519 = vmul.f32 %v2007, %v2455
        %v2520 = vmul.f32 %v2008, %v2456
        %v2521 = vmul.f32 %v2009, %v2457
        %v2522 = vmul.f32 %v2010, %v2458
        %v2523 = vmul.f32 %v2011, %v2459
        %v2524 = vmul.f32 %v2012, %v2460
        %v2525 = vmul.f32 %v2013, %v2461
        %v2526 = vmul.f32 %v2014, %v2462
        %v2527 = vmul.f32 %v2015, %v2463
        %v2528 = vmul.f32 %v2016, %v2464
        %v2529 = vmul.f32 %v2017, %v2465
        %v2530 = vmul.f32 %v2018, %v2466
        %v2531 = vmul.f32 %v2019, %v2467
        %v2532 = vmul.f32 %v2020, %v2468
        %v2533 = vmul.f32 %v2021, %v2469
        %v2534 = vmul.f32 %v2022, %v2470
        %v2535 = vmul.f32 %v2023, %v2471
        %v2536 = vadd.f32 %v2472, 1e-06
        %v2537 = vadd.f32 %v2473, 1e-06
        %v2538 = vadd.f32 %v2474, 1e-06
        %v2539 = vadd.f32 %v2475, 1e-06
        %v2540 = vadd.f32 %v2476, 1e-06
        %v2541 = vadd.f32 %v2477, 1e-06
        %v2542 = vadd.f32 %v2478, 1e-06
        %v2543 = vadd.f32 %v2479, 1e-06
        %v2544 = vadd.f32 %v2480, 1e-06
        %v2545 = vadd.f32 %v2481, 1e-06
        %v2546 = vadd.f32 %v2482, 1e-06
        %v2547 = vadd.f32 %v2483, 1e-06
        %v2548 = vadd.f32 %v2484, 1e-06
        %v2549 = vadd.f32 %v2485, 1e-06
        %v2550 = vadd.f32 %v2486, 1e-06
        %v2551 = vadd.f32 %v2487, 1e-06
        %v2552 = vadd.f32 %v2488, 1e-06
        %v2553 = vadd.f32 %v2489, 1e-06
        %v2554 = vadd.f32 %v2490, 1e-06
        %v2555 = vadd.f32 %v2491, 1e-06
        %v2556 = vadd.f32 %v2492, 1e-06
        %v2557 = vadd.f32 %v2493, 1e-06
        %v2558 = vadd.f32 %v2494, 1e-06
        %v2559 = vadd.f32 %v2495, 1e-06
        %v2560 = vadd.f32 %v2496, 1e-06
        %v2561 = vadd.f32 %v2497, 1e-06
        %v2562 = vadd.f32 %v2498, 1e-06
        %v2563 = vadd.f32 %v2499, 1e-06
        %v2564 = vadd.f32 %v2500, 1e-06
        %v2565 = vadd.f32 %v2501, 1e-06
        %v2566 = vadd.f32 %v2502, 1e-06
        %v2567 = vadd.f32 %v2503, 1e-06
        %v2568 = vadd.f32 %v2504, 1e-06
        %v2569 = vadd.f32 %v2505, 1e-06
        %v2570 = vadd.f32 %v2506, 1e-06
        %v2571 = vadd.f32 %v2507, 1e-06
        %v2572 = vadd.f32 %v2508, 1e-06
        %v2573 = vadd.f32 %v2509, 1e-06
        %v2574 = vadd.f32 %v2510, 1e-06
        %v2575 = vadd.f32 %v2511, 1e-06
        %v2576 = vadd.f32 %v2512, 1e-06
        %v2577 = vadd.f32 %v2513, 1e-06
        %v2578 = vadd.f32 %v2514, 1e-06
        %v2579 = vadd.f32 %v2515, 1e-06
        %v2580 = vadd.f32 %v2516, 1e-06
        %v2581 = vadd.f32 %v2517, 1e-06
        %v2582 = vadd.f32 %v2518, 1e-06
        %v2583 = vadd.f32 %v2519, 1e-06
        %v2584 = vadd.f32 %v2520, 1e-06
        %v2585 = vadd.f32 %v2521, 1e-06
        %v2586 = vadd.f32 %v2522, 1e-06
        %v2587 = vadd.f32 %v2523, 1e-06
        %v2588 = vadd.f32 %v2524, 1e-06
        %v2589 = vadd.f32 %v2525, 1e-06
        %v2590 = vadd.f32 %v2526, 1e-06
        %v2591 = vadd.f32 %v2527, 1e-06
        %v2592 = vadd.f32 %v2528, 1e-06
        %v2593 = vadd.f32 %v2529, 1e-06
        %v2594 = vadd.f32 %v2530, 1e-06
        %v2595 = vadd.f32 %v2531, 1e-06
        %v2596 = vadd.f32 %v2532, 1e-06
        %v2597 = vadd.f32 %v2533, 1e-06
        %v2598 = vadd.f32 %v2534, 1e-06
        %v2599 = vadd.f32 %v2535, 1e-06
        %v2600 = vrcp.pop %v2536
        %v2601 = vrcp.pop %v2537
        %v2602 = vrcp.pop %v2538
        %v2603 = vrcp.pop %v2539
        %v2604 = vrcp.pop %v2540
        %v2605 = vrcp.pop %v2541
        %v2606 = vrcp.pop %v2542
        %v2607 = vrcp.pop %v2543
        %v2608 = vrcp.pop %v2544
        %v2609 = vrcp.pop %v2545
        %v2610 = vrcp.pop %v2546
        %v2611 = vrcp.pop %v2547
        %v2612 = vrcp.pop %v2548
        %v2613 = vrcp.pop %v2549
        %v2614 = vrcp.pop %v2550
        %v2615 = vrcp.pop %v2551
        %v2616 = vrcp.pop %v2552
        %v2617 = vrcp.pop %v2553
        %v2618 = vrcp.pop %v2554
        %v2619 = vrcp.pop %v2555
        %v2620 = vrcp.pop %v2556
        %v2621 = vrcp.pop %v2557
        %v2622 = vrcp.pop %v2558
        %v2623 = vrcp.pop %v2559
        %v2624 = vrcp.pop %v2560
        %v2625 = vrcp.pop %v2561
        %v2626 = vrcp.pop %v2562
        %v2627 = vrcp.pop %v2563
        %v2628 = vrcp.pop %v2564
        %v2629 = vrcp.pop %v2565
        %v2630 = vrcp.pop %v2566
        %v2631 = vrcp.pop %v2567
        %v2632 = vrcp.pop %v2568
        %v2633 = vrcp.pop %v2569
        %v2634 = vrcp.pop %v2570
        %v2635 = vrcp.pop %v2571
        %v2636 = vrcp.pop %v2572
        %v2637 = vrcp.pop %v2573
        %v2638 = vrcp.pop %v2574
        %v2639 = vrcp.pop %v2575
        %v2640 = vrcp.pop %v2576
        %v2641 = vrcp.pop %v2577
        %v2642 = vrcp.pop %v2578
        %v2643 = vrcp.pop %v2579
        %v2644 = vrcp.pop %v2580
        %v2645 = vrcp.pop %v2581
        %v2646 = vrcp.pop %v2582
        %v2647 = vrcp.pop %v2583
        %v2648 = vrcp.pop %v2584
        %v2649 = vrcp.pop %v2585
        %v2650 = vrcp.pop %v2586
        %v2651 = vrcp.pop %v2587
        %v2652 = vrcp.pop %v2588
        %v2653 = vrcp.pop %v2589
        %v2654 = vrcp.pop %v2590
        %v2655 = vrcp.pop %v2591
        %v2656 = vrcp.pop %v2592
        %v2657 = vrcp.pop %v2593
        %v2658 = vrcp.pop %v2594
        %v2659 = vrcp.pop %v2595
        %v2660 = vrcp.pop %v2596
        %v2661 = vrcp.pop %v2597
        %v2662 = vrcp.pop %v2598
        %v2663 = vrcp.pop %v2599
        %v2664 = vmul.f32 %v2536, %v2600
        %v2665 = vmul.f32 %v2537, %v2601
        %v2666 = vmul.f32 %v2538, %v2602
        %v2667 = vmul.f32 %v2539, %v2603
        %v2668 = vmul.f32 %v2540, %v2604
        %v2669 = vmul.f32 %v2541, %v2605
        %v2670 = vmul.f32 %v2542, %v2606
        %v2671 = vmul.f32 %v2543, %v2607
        %v2672 = vmul.f32 %v2544, %v2608
        %v2673 = vmul.f32 %v2545, %v2609
        %v2674 = vmul.f32 %v2546, %v2610
        %v2675 = vmul.f32 %v2547, %v2611
        %v2676 = vmul.f32 %v2548, %v2612
        %v2677 = vmul.f32 %v2549, %v2613
        %v2678 = vmul.f32 %v2550, %v2614
        %v2679 = vmul.f32 %v2551, %v2615
        %v2680 = vmul.f32 %v2552, %v2616
        %v2681 = vmul.f32 %v2553, %v2617
        %v2682 = vmul.f32 %v2554, %v2618
        %v2683 = vmul.f32 %v2555, %v2619
        %v2684 = vmul.f32 %v2556, %v2620
        %v2685 = vmul.f32 %v2557, %v2621
        %v2686 = vmul.f32 %v2558, %v2622
        %v2687 = vmul.f32 %v2559, %v2623
        %v2688 = vmul.f32 %v2560, %v2624
        %v2689 = vmul.f32 %v2561, %v2625
        %v2690 = vmul.f32 %v2562, %v2626
        %v2691 = vmul.f32 %v2563, %v2627
        %v2692 = vmul.f32 %v2564, %v2628
        %v2693 = vmul.f32 %v2565, %v2629
        %v2694 = vmul.f32 %v2566, %v2630
        %v2695 = vmul.f32 %v2567, %v2631
        %v2696 = vmul.f32 %v2568, %v2632
        %v2697 = vmul.f32 %v2569, %v2633
        %v2698 = vmul.f32 %v2570, %v2634
        %v2699 = vmul.f32 %v2571, %v2635
        %v2700 = vmul.f32 %v2572, %v2636
        %v2701 = vmul.f32 %v2573, %v2637
        %v2702 = vmul.f32 %v2574, %v2638
        %v2703 = vmul.f32 %v2575, %v2639
        %v2704 = vmul.f32 %v2576, %v2640
        %v2705 = vmul.f32 %v2577, %v2641
        %v2706 = vmul.f32 %v2578, %v2642
        %v2707 = vmul.f32 %v2579, %v2643
        %v2708 = vmul.f32 %v2580, %v2644
        %v2709 = vmul.f32 %v2581, %v2645
        %v2710 = vmul.f32 %v2582, %v2646
        %v2711 = vmul.f32 %v2583, %v2647
        %v2712 = vmul.f32 %v2584, %v2648
        %v2713 = vmul.f32 %v2585, %v2649
        %v2714 = vmul.f32 %v2586, %v2650
        %v2715 = vmul.f32 %v2587, %v2651
        %v2716 = vmul.f32 %v2588, %v2652
        %v2717 = vmul.f32 %v2589, %v2653
        %v2718 = vmul.f32 %v2590, %v2654
        %v2719 = vmul.f32 %v2591, %v2655
        %v2720 = vmul.f32 %v2592, %v2656
        %v2721 = vmul.f32 %v2593, %v2657
        %v2722 = vmul.f32 %v2594, %v2658
        %v2723 = vmul.f32 %v2595, %v2659
        %v2724 = vmul.f32 %v2596, %v2660
        %v2725 = vmul.f32 %v2597, %v2661
        %v2726 = vmul.f32 %v2598, %v2662
        %v2727 = vmul.f32 %v2599, %v2663
        %v2728 = vsub.f32 2.0, %v2664
        %v2729 = vsub.f32 2.0, %v2665
        %v2730 = vsub.f32 2.0, %v2666
        %v2731 = vsub.f32 2.0, %v2667
        %v2732 = vsub.f32 2.0, %v2668
        %v2733 = vsub.f32 2.0, %v2669
        %v2734 = vsub.f32 2.0, %v2670
        %v2735 = vsub.f32 2.0, %v2671
        %v2736 = vsub.f32 2.0, %v2672
        %v2737 = vsub.f32 2.0, %v2673
        %v2738 = vsub.f32 2.0, %v2674
        %v2739 = vsub.f32 2.0, %v2675
        %v2740 = vsub.f32 2.0, %v2676
        %v2741 = vsub.f32 2.0, %v2677
        %v2742 = vsub.f32 2.0, %v2678
        %v2743 = vsub.f32 2.0, %v2679
        %v2744 = vsub.f32 2.0, %v2680
        %v2745 = vsub.f32 2.0, %v2681
        %v2746 = vsub.f32 2.0, %v2682
        %v2747 = vsub.f32 2.0, %v2683
        %v2748 = vsub.f32 2.0, %v2684
        %v2749 = vsub.f32 2.0, %v2685
        %v2750 = vsub.f32 2.0, %v2686
        %v2751 = vsub.f32 2.0, %v2687
        %v2752 = vsub.f32 2.0, %v2688
        %v2753 = vsub.f32 2.0, %v2689
        %v2754 = vsub.f32 2.0, %v2690
        %v2755 = vsub.f32 2.0, %v2691
        %v2756 = vsub.f32 2.0, %v2692
        %v2757 = vsub.f32 2.0, %v2693
        %v2758 = vsub.f32 2.0, %v2694
        %v2759 = vsub.f32 2.0, %v2695
        %v2760 = vsub.f32 2.0, %v2696
        %v2761 = vsub.f32 2.0, %v2697
        %v2762 = vsub.f32 2.0, %v2698
        %v2763 = vsub.f32 2.0, %v2699
        %v2764 = vsub.f32 2.0, %v2700
        %v2765 = vsub.f32 2.0, %v2701
        %v2766 = vsub.f32 2.0, %v2702
        %v2767 = vsub.f32 2.0, %v2703
        %v2768 = vsub.f32 2.0, %v2704
        %v2769 = vsub.f32 2.0, %v2705
        %v2770 = vsub.f32 2.0, %v2706
        %v2771 = vsub.f32 2.0, %v2707
        %v2772 = vsub.f32 2.0, %v2708
        %v2773 = vsub.f32 2.0, %v2709
        %v2774 = vsub.f32 2.0, %v2710
        %v2775 = vsub.f32 2.0, %v2711
        %v2776 = vsub.f32 2.0, %v2712
        %v2777 = vsub.f32 2.0, %v2713
        %v2778 = vsub.f32 2.0, %v2714
        %v2779 = vsub.f32 2.0, %v2715
        %v2780 = vsub.f32 2.0, %v2716
        %v2781 = vsub.f32 2.0, %v2717
        %v2782 = vsub.f32 2.0, %v2718
        %v2783 = vsub.f32 2.0, %v2719
        %v2784 = vsub.f32 2.0, %v2720
        %v2785 = vsub.f32 2.0, %v2721
        %v2786 = vsub.f32 2.0, %v2722
        %v2787 = vsub.f32 2.0, %v2723
        %v2788 = vsub.f32 2.0, %v2724
        %v2789 = vsub.f32 2.0, %v2725
        %v2790 = vsub.f32 2.0, %v2726
        %v2791 = vsub.f32 2.0, %v2727
        %v2792 = vmul.f32 %v2600, %v2728
        %v2793 = vmul.f32 %v2601, %v2729
        %v2794 = vmul.f32 %v2602, %v2730
        %v2795 = vmul.f32 %v2603, %v2731
        %v2796 = vmul.f32 %v2604, %v2732
        %v2797 = vmul.f32 %v2605, %v2733
        %v2798 = vmul.f32 %v2606, %v2734
        %v2799 = vmul.f32 %v2607, %v2735
        %v2800 = vmul.f32 %v2608, %v2736
        %v2801 = vmul.f32 %v2609, %v2737
        %v2802 = vmul.f32 %v2610, %v2738
        %v2803 = vmul.f32 %v2611, %v2739
        %v2804 = vmul.f32 %v2612, %v2740
        %v2805 = vmul.f32 %v2613, %v2741
        %v2806 = vmul.f32 %v2614, %v2742
        %v2807 = vmul.f32 %v2615, %v2743
        %v2808 = vmul.f32 %v2616, %v2744
        %v2809 = vmul.f32 %v2617, %v2745
        %v2810 = vmul.f32 %v2618, %v2746
        %v2811 = vmul.f32 %v2619, %v2747
        %v2812 = vmul.f32 %v2620, %v2748
        %v2813 = vmul.f32 %v2621, %v2749
        %v2814 = vmul.f32 %v2622, %v2750
        %v2815 = vmul.f32 %v2623, %v2751
        %v2816 = vmul.f32 %v2624, %v2752
        %v2817 = vmul.f32 %v2625, %v2753
        %v2818 = vmul.f32 %v2626, %v2754
        %v2819 = vmul.f32 %v2627, %v2755
        %v2820 = vmul.f32 %v2628, %v2756
        %v2821 = vmul.f32 %v2629, %v2757
        %v2822 = vmul.f32 %v2630, %v2758
        %v2823 = vmul.f32 %v2631, %v2759
        %v2824 = vmul.f32 %v2632, %v2760
        %v2825 = vmul.f32 %v2633, %v2761
        %v2826 = vmul.f32 %v2634, %v2762
        %v2827 = vmul.f32 %v2635, %v2763
        %v2828 = vmul.f32 %v2636, %v2764
        %v2829 = vmul.f32 %v2637, %v2765
        %v2830 = vmul.f32 %v2638, %v2766
        %v2831 = vmul.f32 %v2639, %v2767
        %v2832 = vmul.f32 %v2640, %v2768
        %v2833 = vmul.f32 %v2641, %v2769
        %v2834 = vmul.f32 %v2642, %v2770
        %v2835 = vmul.f32 %v2643, %v2771
        %v2836 = vmul.f32 %v2644, %v2772
        %v2837 = vmul.f32 %v2645, %v2773
        %v2838 = vmul.f32 %v2646, %v2774
        %v2839 = vmul.f32 %v2647, %v2775
        %v2840 = vmul.f32 %v2648, %v2776
        %v2841 = vmul.f32 %v2649, %v2777
        %v2842 = vmul.f32 %v2650, %v2778
        %v2843 = vmul.f32 %v2651, %v2779
        %v2844 = vmul.f32 %v2652, %v2780
        %v2845 = vmul.f32 %v2653, %v2781
        %v2846 = vmul.f32 %v2654, %v2782
        %v2847 = vmul.f32 %v2655, %v2783
        %v2848 = vmul.f32 %v2656, %v2784
        %v2849 = vmul.f32 %v2657, %v2785
        %v2850 = vmul.f32 %v2658, %v2786
        %v2851 = vmul.f32 %v2659, %v2787
        %v2852 = vmul.f32 %v2660, %v2788
        %v2853 = vmul.f32 %v2661, %v2789
        %v2854 = vmul.f32 %v2662, %v2790
        %v2855 = vmul.f32 %v2663, %v2791
        %2920 = vrot.lane.b32.xlu0 %v2792, 96
        %v2921 = vpop.permute.xlu0 %2920
        %2922 = vrot.lane.b32.xlu0 %v2793, 96
        %v2923 = vpop.permute.xlu0 %2922
        %2924 = vrot.lane.b32.xlu0 %v2794, 96
        %v2925 = vpop.permute.xlu0 %2924
        %2926 = vrot.lane.b32.xlu0 %v2795, 96
        %v2927 = vpop.permute.xlu0 %2926
        %2928 = vrot.lane.b32.xlu0 %v2796, 96
        %v2929 = vpop.permute.xlu0 %2928
        %2930 = vrot.lane.b32.xlu0 %v2797, 96
        %v2931 = vpop.permute.xlu0 %2930
        %2932 = vrot.lane.b32.xlu0 %v2798, 96
        %v2933 = vpop.permute.xlu0 %2932
        %2934 = vrot.lane.b32.xlu0 %v2799, 96
        %v2935 = vpop.permute.xlu0 %2934
        %2936 = vrot.lane.b32.xlu0 %v2800, 96
        %v2937 = vpop.permute.xlu0 %2936
        %2938 = vrot.lane.b32.xlu0 %v2801, 96
        %v2939 = vpop.permute.xlu0 %2938
        %2940 = vrot.lane.b32.xlu0 %v2802, 96
        %v2941 = vpop.permute.xlu0 %2940
        %2942 = vrot.lane.b32.xlu0 %v2803, 96
        %v2943 = vpop.permute.xlu0 %2942
        %2944 = vrot.lane.b32.xlu0 %v2804, 96
        %v2945 = vpop.permute.xlu0 %2944
        %2946 = vrot.lane.b32.xlu0 %v2805, 96
        %v2947 = vpop.permute.xlu0 %2946
        %2948 = vrot.lane.b32.xlu0 %v2806, 96
        %v2949 = vpop.permute.xlu0 %2948
        %2950 = vrot.lane.b32.xlu0 %v2807, 96
        %v2951 = vpop.permute.xlu0 %2950
        %2952 = vrot.lane.b32.xlu0 %v2808, 96
        %v2953 = vpop.permute.xlu0 %2952
        %2954 = vrot.lane.b32.xlu0 %v2809, 96
        %v2955 = vpop.permute.xlu0 %2954
        %2956 = vrot.lane.b32.xlu0 %v2810, 96
        %v2957 = vpop.permute.xlu0 %2956
        %2958 = vrot.lane.b32.xlu0 %v2811, 96
        %v2959 = vpop.permute.xlu0 %2958
        %2960 = vrot.lane.b32.xlu0 %v2812, 96
        %v2961 = vpop.permute.xlu0 %2960
        %2962 = vrot.lane.b32.xlu0 %v2813, 96
        %v2963 = vpop.permute.xlu0 %2962
        %2964 = vrot.lane.b32.xlu0 %v2814, 96
        %v2965 = vpop.permute.xlu0 %2964
        %2966 = vrot.lane.b32.xlu0 %v2815, 96
        %v2967 = vpop.permute.xlu0 %2966
        %2968 = vrot.lane.b32.xlu0 %v2816, 96
        %v2969 = vpop.permute.xlu0 %2968
        %2970 = vrot.lane.b32.xlu0 %v2817, 96
        %v2971 = vpop.permute.xlu0 %2970
        %2972 = vrot.lane.b32.xlu0 %v2818, 96
        %v2973 = vpop.permute.xlu0 %2972
        %2974 = vrot.lane.b32.xlu0 %v2819, 96
        %v2975 = vpop.permute.xlu0 %2974
        %2976 = vrot.lane.b32.xlu0 %v2820, 96
        %v2977 = vpop.permute.xlu0 %2976
        %2978 = vrot.lane.b32.xlu0 %v2821, 96
        %v2979 = vpop.permute.xlu0 %2978
        %2980 = vrot.lane.b32.xlu0 %v2822, 96
        %v2981 = vpop.permute.xlu0 %2980
        %2982 = vrot.lane.b32.xlu0 %v2823, 96
        %v2983 = vpop.permute.xlu0 %2982
        %2984 = vrot.lane.b32.xlu0 %v2824, 96
        %v2985 = vpop.permute.xlu0 %2984
        %2986 = vrot.lane.b32.xlu0 %v2825, 96
        %v2987 = vpop.permute.xlu0 %2986
        %2988 = vrot.lane.b32.xlu0 %v2826, 96
        %v2989 = vpop.permute.xlu0 %2988
        %2990 = vrot.lane.b32.xlu0 %v2827, 96
        %v2991 = vpop.permute.xlu0 %2990
        %2992 = vrot.lane.b32.xlu0 %v2828, 96
        %v2993 = vpop.permute.xlu0 %2992
        %2994 = vrot.lane.b32.xlu0 %v2829, 96
        %v2995 = vpop.permute.xlu0 %2994
        %2996 = vrot.lane.b32.xlu0 %v2830, 96
        %v2997 = vpop.permute.xlu0 %2996
        %2998 = vrot.lane.b32.xlu0 %v2831, 96
        %v2999 = vpop.permute.xlu0 %2998
        %3000 = vrot.lane.b32.xlu0 %v2832, 96
        %v3001 = vpop.permute.xlu0 %3000
        %3002 = vrot.lane.b32.xlu0 %v2833, 96
        %v3003 = vpop.permute.xlu0 %3002
        %3004 = vrot.lane.b32.xlu0 %v2834, 96
        %v3005 = vpop.permute.xlu0 %3004
        %3006 = vrot.lane.b32.xlu0 %v2835, 96
        %v3007 = vpop.permute.xlu0 %3006
        %3008 = vrot.lane.b32.xlu0 %v2836, 96
        %v3009 = vpop.permute.xlu0 %3008
        %3010 = vrot.lane.b32.xlu0 %v2837, 96
        %v3011 = vpop.permute.xlu0 %3010
        %3012 = vrot.lane.b32.xlu0 %v2838, 96
        %v3013 = vpop.permute.xlu0 %3012
        %3014 = vrot.lane.b32.xlu0 %v2839, 96
        %v3015 = vpop.permute.xlu0 %3014
        %3016 = vrot.lane.b32.xlu0 %v2840, 96
        %v3017 = vpop.permute.xlu0 %3016
        %3018 = vrot.lane.b32.xlu0 %v2841, 96
        %v3019 = vpop.permute.xlu0 %3018
        %3020 = vrot.lane.b32.xlu0 %v2842, 96
        %v3021 = vpop.permute.xlu0 %3020
        %3022 = vrot.lane.b32.xlu0 %v2843, 96
        %v3023 = vpop.permute.xlu0 %3022
        %3024 = vrot.lane.b32.xlu0 %v2844, 96
        %v3025 = vpop.permute.xlu0 %3024
        %3026 = vrot.lane.b32.xlu0 %v2845, 96
        %v3027 = vpop.permute.xlu0 %3026
        %3028 = vrot.lane.b32.xlu0 %v2846, 96
        %v3029 = vpop.permute.xlu0 %3028
        %3030 = vrot.lane.b32.xlu0 %v2847, 96
        %v3031 = vpop.permute.xlu0 %3030
        %3032 = vrot.lane.b32.xlu0 %v2848, 96
        %v3033 = vpop.permute.xlu0 %3032
        %3034 = vrot.lane.b32.xlu0 %v2849, 96
        %v3035 = vpop.permute.xlu0 %3034
        %3036 = vrot.lane.b32.xlu0 %v2850, 96
        %v3037 = vpop.permute.xlu0 %3036
        %3038 = vrot.lane.b32.xlu0 %v2851, 96
        %v3039 = vpop.permute.xlu0 %3038
        %3040 = vrot.lane.b32.xlu0 %v2852, 96
        %v3041 = vpop.permute.xlu0 %3040
        %3042 = vrot.lane.b32.xlu0 %v2853, 96
        %v3043 = vpop.permute.xlu0 %3042
        %3044 = vrot.lane.b32.xlu0 %v2854, 96
        %v3045 = vpop.permute.xlu0 %3044
        %3046 = vrot.lane.b32.xlu0 %v2855, 96
        %v3047 = vpop.permute.xlu0 %3046
        %v3112 = vmul.f32 %v2344, %v2921
        %v3113 = vmul.f32 %v2345, %v2923
        %v3114 = vmul.f32 %v2346, %v2925
        %v3115 = vmul.f32 %v2347, %v2927
        %v3116 = vmul.f32 %v2348, %v2929
        %v3117 = vmul.f32 %v2349, %v2931
        %v3118 = vmul.f32 %v2350, %v2933
        %v3119 = vmul.f32 %v2351, %v2935
        %v3120 = vmul.f32 %v2352, %v2937
        %v3121 = vmul.f32 %v2353, %v2939
        %v3122 = vmul.f32 %v2354, %v2941
        %v3123 = vmul.f32 %v2355, %v2943
        %v3124 = vmul.f32 %v2356, %v2945
        %v3125 = vmul.f32 %v2357, %v2947
        %v3126 = vmul.f32 %v2358, %v2949
        %v3127 = vmul.f32 %v2359, %v2951
        %v3128 = vmul.f32 %v2360, %v2953
        %v3129 = vmul.f32 %v2361, %v2955
        %v3130 = vmul.f32 %v2362, %v2957
        %v3131 = vmul.f32 %v2363, %v2959
        %v3132 = vmul.f32 %v2364, %v2961
        %v3133 = vmul.f32 %v2365, %v2963
        %v3134 = vmul.f32 %v2366, %v2965
        %v3135 = vmul.f32 %v2367, %v2967
        %v3136 = vmul.f32 %v2368, %v2969
        %v3137 = vmul.f32 %v2369, %v2971
        %v3138 = vmul.f32 %v2370, %v2973
        %v3139 = vmul.f32 %v2371, %v2975
        %v3140 = vmul.f32 %v2372, %v2977
        %v3141 = vmul.f32 %v2373, %v2979
        %v3142 = vmul.f32 %v2374, %v2981
        %v3143 = vmul.f32 %v2375, %v2983
        %v3144 = vmul.f32 %v2376, %v2985
        %v3145 = vmul.f32 %v2377, %v2987
        %v3146 = vmul.f32 %v2378, %v2989
        %v3147 = vmul.f32 %v2379, %v2991
        %v3148 = vmul.f32 %v2380, %v2993
        %v3149 = vmul.f32 %v2381, %v2995
        %v3150 = vmul.f32 %v2382, %v2997
        %v3151 = vmul.f32 %v2383, %v2999
        %v3152 = vmul.f32 %v2384, %v3001
        %v3153 = vmul.f32 %v2385, %v3003
        %v3154 = vmul.f32 %v2386, %v3005
        %v3155 = vmul.f32 %v2387, %v3007
        %v3156 = vmul.f32 %v2388, %v3009
        %v3157 = vmul.f32 %v2389, %v3011
        %v3158 = vmul.f32 %v2390, %v3013
        %v3159 = vmul.f32 %v2391, %v3015
        %v3160 = vmul.f32 %v2392, %v3017
        %v3161 = vmul.f32 %v2393, %v3019
        %v3162 = vmul.f32 %v2394, %v3021
        %v3163 = vmul.f32 %v2395, %v3023
        %v3164 = vmul.f32 %v2396, %v3025
        %v3165 = vmul.f32 %v2397, %v3027
        %v3166 = vmul.f32 %v2398, %v3029
        %v3167 = vmul.f32 %v2399, %v3031
        %v3168 = vmul.f32 %v2400, %v3033
        %v3169 = vmul.f32 %v2401, %v3035
        %v3170 = vmul.f32 %v2402, %v3037
        %v3171 = vmul.f32 %v2403, %v3039
        %v3172 = vmul.f32 %v2404, %v3041
        %v3173 = vmul.f32 %v2405, %v3043
        %v3174 = vmul.f32 %v2406, %v3045
        %v3175 = vmul.f32 %v2407, %v3047
        %vm3176 = vcmp.ge.f32.partialorder %v2344, 0.0
        %vm3177 = vcmp.ge.f32.partialorder %v2345, 0.0
        %vm3178 = vcmp.ge.f32.partialorder %v2346, 0.0
        %vm3179 = vcmp.ge.f32.partialorder %v2347, 0.0
        %vm3180 = vcmp.ge.f32.partialorder %v2348, 0.0
        %vm3181 = vcmp.ge.f32.partialorder %v2349, 0.0
        %vm3182 = vcmp.ge.f32.partialorder %v2350, 0.0
        %vm3183 = vcmp.ge.f32.partialorder %v2351, 0.0
        %vm3184 = vcmp.ge.f32.partialorder %v2352, 0.0
        %vm3185 = vcmp.ge.f32.partialorder %v2353, 0.0
        %vm3186 = vcmp.ge.f32.partialorder %v2354, 0.0
        %vm3187 = vcmp.ge.f32.partialorder %v2355, 0.0
        %vm3188 = vcmp.ge.f32.partialorder %v2356, 0.0
        %vm3189 = vcmp.ge.f32.partialorder %v2357, 0.0
        %vm3190 = vcmp.ge.f32.partialorder %v2358, 0.0
        %vm3191 = vcmp.ge.f32.partialorder %v2359, 0.0
        %vm3192 = vcmp.ge.f32.partialorder %v2360, 0.0
        %vm3193 = vcmp.ge.f32.partialorder %v2361, 0.0
        %vm3194 = vcmp.ge.f32.partialorder %v2362, 0.0
        %vm3195 = vcmp.ge.f32.partialorder %v2363, 0.0
        %vm3196 = vcmp.ge.f32.partialorder %v2364, 0.0
        %vm3197 = vcmp.ge.f32.partialorder %v2365, 0.0
        %vm3198 = vcmp.ge.f32.partialorder %v2366, 0.0
        %vm3199 = vcmp.ge.f32.partialorder %v2367, 0.0
        %vm3200 = vcmp.ge.f32.partialorder %v2368, 0.0
        %vm3201 = vcmp.ge.f32.partialorder %v2369, 0.0
        %vm3202 = vcmp.ge.f32.partialorder %v2370, 0.0
        %vm3203 = vcmp.ge.f32.partialorder %v2371, 0.0
        %vm3204 = vcmp.ge.f32.partialorder %v2372, 0.0
        %vm3205 = vcmp.ge.f32.partialorder %v2373, 0.0
        %vm3206 = vcmp.ge.f32.partialorder %v2374, 0.0
        %vm3207 = vcmp.ge.f32.partialorder %v2375, 0.0
        %vm3208 = vcmp.ge.f32.partialorder %v2376, 0.0
        %vm3209 = vcmp.ge.f32.partialorder %v2377, 0.0
        %vm3210 = vcmp.ge.f32.partialorder %v2378, 0.0
        %vm3211 = vcmp.ge.f32.partialorder %v2379, 0.0
        %vm3212 = vcmp.ge.f32.partialorder %v2380, 0.0
        %vm3213 = vcmp.ge.f32.partialorder %v2381, 0.0
        %vm3214 = vcmp.ge.f32.partialorder %v2382, 0.0
        %vm3215 = vcmp.ge.f32.partialorder %v2383, 0.0
        %vm3216 = vcmp.ge.f32.partialorder %v2384, 0.0
        %vm3217 = vcmp.ge.f32.partialorder %v2385, 0.0
        %vm3218 = vcmp.ge.f32.partialorder %v2386, 0.0
        %vm3219 = vcmp.ge.f32.partialorder %v2387, 0.0
        %vm3220 = vcmp.ge.f32.partialorder %v2388, 0.0
        %vm3221 = vcmp.ge.f32.partialorder %v2389, 0.0
        %vm3222 = vcmp.ge.f32.partialorder %v2390, 0.0
        %vm3223 = vcmp.ge.f32.partialorder %v2391, 0.0
        %vm3224 = vcmp.ge.f32.partialorder %v2392, 0.0
        %vm3225 = vcmp.ge.f32.partialorder %v2393, 0.0
        %vm3226 = vcmp.ge.f32.partialorder %v2394, 0.0
        %vm3227 = vcmp.ge.f32.partialorder %v2395, 0.0
        %vm3228 = vcmp.ge.f32.partialorder %v2396, 0.0
        %vm3229 = vcmp.ge.f32.partialorder %v2397, 0.0
        %vm3230 = vcmp.ge.f32.partialorder %v2398, 0.0
        %vm3231 = vcmp.ge.f32.partialorder %v2399, 0.0
        %vm3232 = vcmp.ge.f32.partialorder %v2400, 0.0
        %vm3233 = vcmp.ge.f32.partialorder %v2401, 0.0
        %vm3234 = vcmp.ge.f32.partialorder %v2402, 0.0
        %vm3235 = vcmp.ge.f32.partialorder %v2403, 0.0
        %vm3236 = vcmp.ge.f32.partialorder %v2404, 0.0
        %vm3237 = vcmp.ge.f32.partialorder %v2405, 0.0
        %vm3238 = vcmp.ge.f32.partialorder %v2406, 0.0
        %vm3239 = vcmp.ge.f32.partialorder %v2407, 0.0
        %v3240 = vmul.f32 %v3112, %v2089
        %v3241 = vmul.f32 %v3113, %v2091
        %v3242 = vmul.f32 %v3114, %v2093
        %v3243 = vmul.f32 %v3115, %v2095
        %v3244 = vmul.f32 %v3116, %v2097
        %v3245 = vmul.f32 %v3117, %v2099
        %v3246 = vmul.f32 %v3118, %v2101
        %v3247 = vmul.f32 %v3119, %v2103
        %v3248 = vmul.f32 %v3120, %v2105
        %v3249 = vmul.f32 %v3121, %v2107
        %v3250 = vmul.f32 %v3122, %v2109
        %v3251 = vmul.f32 %v3123, %v2111
        %v3252 = vmul.f32 %v3124, %v2113
        %v3253 = vmul.f32 %v3125, %v2115
        %v3254 = vmul.f32 %v3126, %v2117
        %v3255 = vmul.f32 %v3127, %v2119
        %v3256 = vmul.f32 %v3128, %v2121
        %v3257 = vmul.f32 %v3129, %v2123
        %v3258 = vmul.f32 %v3130, %v2125
        %v3259 = vmul.f32 %v3131, %v2127
        %v3260 = vmul.f32 %v3132, %v2129
        %v3261 = vmul.f32 %v3133, %v2131
        %v3262 = vmul.f32 %v3134, %v2133
        %v3263 = vmul.f32 %v3135, %v2135
        %v3264 = vmul.f32 %v3136, %v2137
        %v3265 = vmul.f32 %v3137, %v2139
        %v3266 = vmul.f32 %v3138, %v2141
        %v3267 = vmul.f32 %v3139, %v2143
        %v3268 = vmul.f32 %v3140, %v2145
        %v3269 = vmul.f32 %v3141, %v2147
        %v3270 = vmul.f32 %v3142, %v2149
        %v3271 = vmul.f32 %v3143, %v2151
        %v3272 = vmul.f32 %v3144, %v2153
        %v3273 = vmul.f32 %v3145, %v2155
        %v3274 = vmul.f32 %v3146, %v2157
        %v3275 = vmul.f32 %v3147, %v2159
        %v3276 = vmul.f32 %v3148, %v2161
        %v3277 = vmul.f32 %v3149, %v2163
        %v3278 = vmul.f32 %v3150, %v2165
        %v3279 = vmul.f32 %v3151, %v2167
        %v3280 = vmul.f32 %v3152, %v2169
        %v3281 = vmul.f32 %v3153, %v2171
        %v3282 = vmul.f32 %v3154, %v2173
        %v3283 = vmul.f32 %v3155, %v2175
        %v3284 = vmul.f32 %v3156, %v2177
        %v3285 = vmul.f32 %v3157, %v2179
        %v3286 = vmul.f32 %v3158, %v2181
        %v3287 = vmul.f32 %v3159, %v2183
        %v3288 = vmul.f32 %v3160, %v2185
        %v3289 = vmul.f32 %v3161, %v2187
        %v3290 = vmul.f32 %v3162, %v2189
        %v3291 = vmul.f32 %v3163, %v2191
        %v3292 = vmul.f32 %v3164, %v2193
        %v3293 = vmul.f32 %v3165, %v2195
        %v3294 = vmul.f32 %v3166, %v2197
        %v3295 = vmul.f32 %v3167, %v2199
        %v3296 = vmul.f32 %v3168, %v2201
        %v3297 = vmul.f32 %v3169, %v2203
        %v3298 = vmul.f32 %v3170, %v2205
        %v3299 = vmul.f32 %v3171, %v2207
        %v3300 = vmul.f32 %v3172, %v2209
        %v3301 = vmul.f32 %v3173, %v2211
        %v3302 = vmul.f32 %v3174, %v2213
        %v3303 = vmul.f32 %v3175, %v2215
        %v3304 = vsub.f32 %v1769, %v3240
        %v3305 = vsub.f32 %v1772, %v3241
        %v3306 = vsub.f32 %v1775, %v3242
        %v3307 = vsub.f32 %v1778, %v3243
        %v3308 = vsub.f32 %v1781, %v3244
        %v3309 = vsub.f32 %v1784, %v3245
        %v3310 = vsub.f32 %v1787, %v3246
        %v3311 = vsub.f32 %v1790, %v3247
        %v3312 = vsub.f32 %v1793, %v3248
        %v3313 = vsub.f32 %v1796, %v3249
        %v3314 = vsub.f32 %v1799, %v3250
        %v3315 = vsub.f32 %v1802, %v3251
        %v3316 = vsub.f32 %v1805, %v3252
        %v3317 = vsub.f32 %v1808, %v3253
        %v3318 = vsub.f32 %v1811, %v3254
        %v3319 = vsub.f32 %v1814, %v3255
        %v3320 = vsub.f32 %v1817, %v3256
        %v3321 = vsub.f32 %v1820, %v3257
        %v3322 = vsub.f32 %v1823, %v3258
        %v3323 = vsub.f32 %v1826, %v3259
        %v3324 = vsub.f32 %v1829, %v3260
        %v3325 = vsub.f32 %v1832, %v3261
        %v3326 = vsub.f32 %v1835, %v3262
        %v3327 = vsub.f32 %v1838, %v3263
        %v3328 = vsub.f32 %v1841, %v3264
        %v3329 = vsub.f32 %v1844, %v3265
        %v3330 = vsub.f32 %v1847, %v3266
        %v3331 = vsub.f32 %v1850, %v3267
        %v3332 = vsub.f32 %v1853, %v3268
        %v3333 = vsub.f32 %v1856, %v3269
        %v3334 = vsub.f32 %v1859, %v3270
        %v3335 = vsub.f32 %v1862, %v3271
        %v3336 = vsub.f32 %v1865, %v3272
        %v3337 = vsub.f32 %v1868, %v3273
        %v3338 = vsub.f32 %v1871, %v3274
        %v3339 = vsub.f32 %v1874, %v3275
        %v3340 = vsub.f32 %v1877, %v3276
        %v3341 = vsub.f32 %v1880, %v3277
        %v3342 = vsub.f32 %v1883, %v3278
        %v3343 = vsub.f32 %v1886, %v3279
        %v3344 = vsub.f32 %v1889, %v3280
        %v3345 = vsub.f32 %v1892, %v3281
        %v3346 = vsub.f32 %v1895, %v3282
        %v3347 = vsub.f32 %v1898, %v3283
        %v3348 = vsub.f32 %v1901, %v3284
        %v3349 = vsub.f32 %v1904, %v3285
        %v3350 = vsub.f32 %v1907, %v3286
        %v3351 = vsub.f32 %v1910, %v3287
        %v3352 = vsub.f32 %v1913, %v3288
        %v3353 = vsub.f32 %v1916, %v3289
        %v3354 = vsub.f32 %v1919, %v3290
        %v3355 = vsub.f32 %v1922, %v3291
        %v3356 = vsub.f32 %v1925, %v3292
        %v3357 = vsub.f32 %v1928, %v3293
        %v3358 = vsub.f32 %v1931, %v3294
        %v3359 = vsub.f32 %v1934, %v3295
        %v3360 = vsub.f32 %v1937, %v3296
        %v3361 = vsub.f32 %v1940, %v3297
        %v3362 = vsub.f32 %v1943, %v3298
        %v3363 = vsub.f32 %v1946, %v3299
        %v3364 = vsub.f32 %v1949, %v3300
        %v3365 = vsub.f32 %v1952, %v3301
        %v3366 = vsub.f32 %v1955, %v3302
        %v3367 = vsub.f32 %v1958, %v3303
        %v3368 = vsel %vm3176, %v1769, %v3304
        %v3369 = vsel %vm3177, %v1772, %v3305
        %v3370 = vsel %vm3178, %v1775, %v3306
        %v3371 = vsel %vm3179, %v1778, %v3307
        %v3372 = vsel %vm3180, %v1781, %v3308
        %v3373 = vsel %vm3181, %v1784, %v3309
        %v3374 = vsel %vm3182, %v1787, %v3310
        %v3375 = vsel %vm3183, %v1790, %v3311
        %v3376 = vsel %vm3184, %v1793, %v3312
        %v3377 = vsel %vm3185, %v1796, %v3313
        %v3378 = vsel %vm3186, %v1799, %v3314
        %v3379 = vsel %vm3187, %v1802, %v3315
        %v3380 = vsel %vm3188, %v1805, %v3316
        %v3381 = vsel %vm3189, %v1808, %v3317
        %v3382 = vsel %vm3190, %v1811, %v3318
        %v3383 = vsel %vm3191, %v1814, %v3319
        %v3384 = vsel %vm3192, %v1817, %v3320
        %v3385 = vsel %vm3193, %v1820, %v3321
        %v3386 = vsel %vm3194, %v1823, %v3322
        %v3387 = vsel %vm3195, %v1826, %v3323
        %v3388 = vsel %vm3196, %v1829, %v3324
        %v3389 = vsel %vm3197, %v1832, %v3325
        %v3390 = vsel %vm3198, %v1835, %v3326
        %v3391 = vsel %vm3199, %v1838, %v3327
        %v3392 = vsel %vm3200, %v1841, %v3328
        %v3393 = vsel %vm3201, %v1844, %v3329
        %v3394 = vsel %vm3202, %v1847, %v3330
        %v3395 = vsel %vm3203, %v1850, %v3331
        %v3396 = vsel %vm3204, %v1853, %v3332
        %v3397 = vsel %vm3205, %v1856, %v3333
        %v3398 = vsel %vm3206, %v1859, %v3334
        %v3399 = vsel %vm3207, %v1862, %v3335
        %v3400 = vsel %vm3208, %v1865, %v3336
        %v3401 = vsel %vm3209, %v1868, %v3337
        %v3402 = vsel %vm3210, %v1871, %v3338
        %v3403 = vsel %vm3211, %v1874, %v3339
        %v3404 = vsel %vm3212, %v1877, %v3340
        %v3405 = vsel %vm3213, %v1880, %v3341
        %v3406 = vsel %vm3214, %v1883, %v3342
        %v3407 = vsel %vm3215, %v1886, %v3343
        %v3408 = vsel %vm3216, %v1889, %v3344
        %v3409 = vsel %vm3217, %v1892, %v3345
        %v3410 = vsel %vm3218, %v1895, %v3346
        %v3411 = vsel %vm3219, %v1898, %v3347
        %v3412 = vsel %vm3220, %v1901, %v3348
        %v3413 = vsel %vm3221, %v1904, %v3349
        %v3414 = vsel %vm3222, %v1907, %v3350
        %v3415 = vsel %vm3223, %v1910, %v3351
        %v3416 = vsel %vm3224, %v1913, %v3352
        %v3417 = vsel %vm3225, %v1916, %v3353
        %v3418 = vsel %vm3226, %v1919, %v3354
        %v3419 = vsel %vm3227, %v1922, %v3355
        %v3420 = vsel %vm3228, %v1925, %v3356
        %v3421 = vsel %vm3229, %v1928, %v3357
        %v3422 = vsel %vm3230, %v1931, %v3358
        %v3423 = vsel %vm3231, %v1934, %v3359
        %v3424 = vsel %vm3232, %v1937, %v3360
        %v3425 = vsel %vm3233, %v1940, %v3361
        %v3426 = vsel %vm3234, %v1943, %v3362
        %v3427 = vsel %vm3235, %v1946, %v3363
        %v3428 = vsel %vm3236, %v1949, %v3364
        %v3429 = vsel %vm3237, %v1952, %v3365
        %v3430 = vsel %vm3238, %v1955, %v3366
        %v3431 = vsel %vm3239, %v1958, %v3367
        %v3432 = vmul.f32 %v1769, 0.2
        %v3433 = vmul.f32 %v1772, 0.2
        %v3434 = vmul.f32 %v1775, 0.2
        %v3435 = vmul.f32 %v1778, 0.2
        %v3436 = vmul.f32 %v1781, 0.2
        %v3437 = vmul.f32 %v1784, 0.2
        %v3438 = vmul.f32 %v1787, 0.2
        %v3439 = vmul.f32 %v1790, 0.2
        %v3440 = vmul.f32 %v1793, 0.2
        %v3441 = vmul.f32 %v1796, 0.2
        %v3442 = vmul.f32 %v1799, 0.2
        %v3443 = vmul.f32 %v1802, 0.2
        %v3444 = vmul.f32 %v1805, 0.2
        %v3445 = vmul.f32 %v1808, 0.2
        %v3446 = vmul.f32 %v1811, 0.2
        %v3447 = vmul.f32 %v1814, 0.2
        %v3448 = vmul.f32 %v1817, 0.2
        %v3449 = vmul.f32 %v1820, 0.2
        %v3450 = vmul.f32 %v1823, 0.2
        %v3451 = vmul.f32 %v1826, 0.2
        %v3452 = vmul.f32 %v1829, 0.2
        %v3453 = vmul.f32 %v1832, 0.2
        %v3454 = vmul.f32 %v1835, 0.2
        %v3455 = vmul.f32 %v1838, 0.2
        %v3456 = vmul.f32 %v1841, 0.2
        %v3457 = vmul.f32 %v1844, 0.2
        %v3458 = vmul.f32 %v1847, 0.2
        %v3459 = vmul.f32 %v1850, 0.2
        %v3460 = vmul.f32 %v1853, 0.2
        %v3461 = vmul.f32 %v1856, 0.2
        %v3462 = vmul.f32 %v1859, 0.2
        %v3463 = vmul.f32 %v1862, 0.2
        %v3464 = vmul.f32 %v1865, 0.2
        %v3465 = vmul.f32 %v1868, 0.2
        %v3466 = vmul.f32 %v1871, 0.2
        %v3467 = vmul.f32 %v1874, 0.2
        %v3468 = vmul.f32 %v1877, 0.2
        %v3469 = vmul.f32 %v1880, 0.2
        %v3470 = vmul.f32 %v1883, 0.2
        %v3471 = vmul.f32 %v1886, 0.2
        %v3472 = vmul.f32 %v1889, 0.2
        %v3473 = vmul.f32 %v1892, 0.2
        %v3474 = vmul.f32 %v1895, 0.2
        %v3475 = vmul.f32 %v1898, 0.2
        %v3476 = vmul.f32 %v1901, 0.2
        %v3477 = vmul.f32 %v1904, 0.2
        %v3478 = vmul.f32 %v1907, 0.2
        %v3479 = vmul.f32 %v1910, 0.2
        %v3480 = vmul.f32 %v1913, 0.2
        %v3481 = vmul.f32 %v1916, 0.2
        %v3482 = vmul.f32 %v1919, 0.2
        %v3483 = vmul.f32 %v1922, 0.2
        %v3484 = vmul.f32 %v1925, 0.2
        %v3485 = vmul.f32 %v1928, 0.2
        %v3486 = vmul.f32 %v1931, 0.2
        %v3487 = vmul.f32 %v1934, 0.2
        %v3488 = vmul.f32 %v1937, 0.2
        %v3489 = vmul.f32 %v1940, 0.2
        %v3490 = vmul.f32 %v1943, 0.2
        %v3491 = vmul.f32 %v1946, 0.2
        %v3492 = vmul.f32 %v1949, 0.2
        %v3493 = vmul.f32 %v1952, 0.2
        %v3494 = vmul.f32 %v1955, 0.2
        %v3495 = vmul.f32 %v1958, 0.2
        %v3496 = vmul.f32 %v3368, 0.8
        %v3497 = vmul.f32 %v3369, 0.8
        %v3498 = vmul.f32 %v3370, 0.8
        %v3499 = vmul.f32 %v3371, 0.8
        %v3500 = vmul.f32 %v3372, 0.8
        %v3501 = vmul.f32 %v3373, 0.8
        %v3502 = vmul.f32 %v3374, 0.8
        %v3503 = vmul.f32 %v3375, 0.8
        %v3504 = vmul.f32 %v3376, 0.8
        %v3505 = vmul.f32 %v3377, 0.8
        %v3506 = vmul.f32 %v3378, 0.8
        %v3507 = vmul.f32 %v3379, 0.8
        %v3508 = vmul.f32 %v3380, 0.8
        %v3509 = vmul.f32 %v3381, 0.8
        %v3510 = vmul.f32 %v3382, 0.8
        %v3511 = vmul.f32 %v3383, 0.8
        %v3512 = vmul.f32 %v3384, 0.8
        %v3513 = vmul.f32 %v3385, 0.8
        %v3514 = vmul.f32 %v3386, 0.8
        %v3515 = vmul.f32 %v3387, 0.8
        %v3516 = vmul.f32 %v3388, 0.8
        %v3517 = vmul.f32 %v3389, 0.8
        %v3518 = vmul.f32 %v3390, 0.8
        %v3519 = vmul.f32 %v3391, 0.8
        %v3520 = vmul.f32 %v3392, 0.8
        %v3521 = vmul.f32 %v3393, 0.8
        %v3522 = vmul.f32 %v3394, 0.8
        %v3523 = vmul.f32 %v3395, 0.8
        %v3524 = vmul.f32 %v3396, 0.8
        %v3525 = vmul.f32 %v3397, 0.8
        %v3526 = vmul.f32 %v3398, 0.8
        %v3527 = vmul.f32 %v3399, 0.8
        %v3528 = vmul.f32 %v3400, 0.8
        %v3529 = vmul.f32 %v3401, 0.8
        %v3530 = vmul.f32 %v3402, 0.8
        %v3531 = vmul.f32 %v3403, 0.8
        %v3532 = vmul.f32 %v3404, 0.8
        %v3533 = vmul.f32 %v3405, 0.8
        %v3534 = vmul.f32 %v3406, 0.8
        %v3535 = vmul.f32 %v3407, 0.8
        %v3536 = vmul.f32 %v3408, 0.8
        %v3537 = vmul.f32 %v3409, 0.8
        %v3538 = vmul.f32 %v3410, 0.8
        %v3539 = vmul.f32 %v3411, 0.8
        %v3540 = vmul.f32 %v3412, 0.8
        %v3541 = vmul.f32 %v3413, 0.8
        %v3542 = vmul.f32 %v3414, 0.8
        %v3543 = vmul.f32 %v3415, 0.8
        %v3544 = vmul.f32 %v3416, 0.8
        %v3545 = vmul.f32 %v3417, 0.8
        %v3546 = vmul.f32 %v3418, 0.8
        %v3547 = vmul.f32 %v3419, 0.8
        %v3548 = vmul.f32 %v3420, 0.8
        %v3549 = vmul.f32 %v3421, 0.8
        %v3550 = vmul.f32 %v3422, 0.8
        %v3551 = vmul.f32 %v3423, 0.8
        %v3552 = vmul.f32 %v3424, 0.8
        %v3553 = vmul.f32 %v3425, 0.8
        %v3554 = vmul.f32 %v3426, 0.8
        %v3555 = vmul.f32 %v3427, 0.8
        %v3556 = vmul.f32 %v3428, 0.8
        %v3557 = vmul.f32 %v3429, 0.8
        %v3558 = vmul.f32 %v3430, 0.8
        %v3559 = vmul.f32 %v3431, 0.8
        %v3560 = vadd.f32 %v3432, %v3496
        %v3561 = vadd.f32 %v3433, %v3497
        %v3562 = vadd.f32 %v3434, %v3498
        %v3563 = vadd.f32 %v3435, %v3499
        %v3564 = vadd.f32 %v3436, %v3500
        %v3565 = vadd.f32 %v3437, %v3501
        %v3566 = vadd.f32 %v3438, %v3502
        %v3567 = vadd.f32 %v3439, %v3503
        %v3568 = vadd.f32 %v3440, %v3504
        %v3569 = vadd.f32 %v3441, %v3505
        %v3570 = vadd.f32 %v3442, %v3506
        %v3571 = vadd.f32 %v3443, %v3507
        %v3572 = vadd.f32 %v3444, %v3508
        %v3573 = vadd.f32 %v3445, %v3509
        %v3574 = vadd.f32 %v3446, %v3510
        %v3575 = vadd.f32 %v3447, %v3511
        %v3576 = vadd.f32 %v3448, %v3512
        %v3577 = vadd.f32 %v3449, %v3513
        %v3578 = vadd.f32 %v3450, %v3514
        %v3579 = vadd.f32 %v3451, %v3515
        %v3580 = vadd.f32 %v3452, %v3516
        %v3581 = vadd.f32 %v3453, %v3517
        %v3582 = vadd.f32 %v3454, %v3518
        %v3583 = vadd.f32 %v3455, %v3519
        %v3584 = vadd.f32 %v3456, %v3520
        %v3585 = vadd.f32 %v3457, %v3521
        %v3586 = vadd.f32 %v3458, %v3522
        %v3587 = vadd.f32 %v3459, %v3523
        %v3588 = vadd.f32 %v3460, %v3524
        %v3589 = vadd.f32 %v3461, %v3525
        %v3590 = vadd.f32 %v3462, %v3526
        %v3591 = vadd.f32 %v3463, %v3527
        %v3592 = vadd.f32 %v3464, %v3528
        %v3593 = vadd.f32 %v3465, %v3529
        %v3594 = vadd.f32 %v3466, %v3530
        %v3595 = vadd.f32 %v3467, %v3531
        %v3596 = vadd.f32 %v3468, %v3532
        %v3597 = vadd.f32 %v3469, %v3533
        %v3598 = vadd.f32 %v3470, %v3534
        %v3599 = vadd.f32 %v3471, %v3535
        %v3600 = vadd.f32 %v3472, %v3536
        %v3601 = vadd.f32 %v3473, %v3537
        %v3602 = vadd.f32 %v3474, %v3538
        %v3603 = vadd.f32 %v3475, %v3539
        %v3604 = vadd.f32 %v3476, %v3540
        %v3605 = vadd.f32 %v3477, %v3541
        %v3606 = vadd.f32 %v3478, %v3542
        %v3607 = vadd.f32 %v3479, %v3543
        %v3608 = vadd.f32 %v3480, %v3544
        %v3609 = vadd.f32 %v3481, %v3545
        %v3610 = vadd.f32 %v3482, %v3546
        %v3611 = vadd.f32 %v3483, %v3547
        %v3612 = vadd.f32 %v3484, %v3548
        %v3613 = vadd.f32 %v3485, %v3549
        %v3614 = vadd.f32 %v3486, %v3550
        %v3615 = vadd.f32 %v3487, %v3551
        %v3616 = vadd.f32 %v3488, %v3552
        %v3617 = vadd.f32 %v3489, %v3553
        %v3618 = vadd.f32 %v3490, %v3554
        %v3619 = vadd.f32 %v3491, %v3555
        %v3620 = vadd.f32 %v3492, %v3556
        %v3621 = vadd.f32 %v3493, %v3557
        %v3622 = vadd.f32 %v3494, %v3558
        %v3623 = vadd.f32 %v3495, %v3559
        %v3624 = vmul.f32 %v458, %v3560
        %v3625 = vmul.f32 %v461, %v3561
        %v3626 = vmul.f32 %v464, %v3562
        %v3627 = vmul.f32 %v467, %v3563
        %v3628 = vmul.f32 %v470, %v3564
        %v3629 = vmul.f32 %v473, %v3565
        %v3630 = vmul.f32 %v476, %v3566
        %v3631 = vmul.f32 %v479, %v3567
        %v3632 = vmul.f32 %v482, %v3568
        %v3633 = vmul.f32 %v485, %v3569
        %v3634 = vmul.f32 %v488, %v3570
        %v3635 = vmul.f32 %v491, %v3571
        %v3636 = vmul.f32 %v494, %v3572
        %v3637 = vmul.f32 %v497, %v3573
        %v3638 = vmul.f32 %v500, %v3574
        %v3639 = vmul.f32 %v503, %v3575
        %v3640 = vmul.f32 %v506, %v3576
        %v3641 = vmul.f32 %v509, %v3577
        %v3642 = vmul.f32 %v512, %v3578
        %v3643 = vmul.f32 %v515, %v3579
        %v3644 = vmul.f32 %v518, %v3580
        %v3645 = vmul.f32 %v521, %v3581
        %v3646 = vmul.f32 %v524, %v3582
        %v3647 = vmul.f32 %v527, %v3583
        %v3648 = vmul.f32 %v530, %v3584
        %v3649 = vmul.f32 %v533, %v3585
        %v3650 = vmul.f32 %v536, %v3586
        %v3651 = vmul.f32 %v539, %v3587
        %v3652 = vmul.f32 %v542, %v3588
        %v3653 = vmul.f32 %v545, %v3589
        %v3654 = vmul.f32 %v548, %v3590
        %v3655 = vmul.f32 %v551, %v3591
        %v3656 = vmul.f32 %v554, %v3592
        %v3657 = vmul.f32 %v557, %v3593
        %v3658 = vmul.f32 %v560, %v3594
        %v3659 = vmul.f32 %v563, %v3595
        %v3660 = vmul.f32 %v566, %v3596
        %v3661 = vmul.f32 %v569, %v3597
        %v3662 = vmul.f32 %v572, %v3598
        %v3663 = vmul.f32 %v575, %v3599
        %v3664 = vmul.f32 %v578, %v3600
        %v3665 = vmul.f32 %v581, %v3601
        %v3666 = vmul.f32 %v584, %v3602
        %v3667 = vmul.f32 %v587, %v3603
        %v3668 = vmul.f32 %v590, %v3604
        %v3669 = vmul.f32 %v593, %v3605
        %v3670 = vmul.f32 %v596, %v3606
        %v3671 = vmul.f32 %v599, %v3607
        %v3672 = vmul.f32 %v602, %v3608
        %v3673 = vmul.f32 %v605, %v3609
        %v3674 = vmul.f32 %v608, %v3610
        %v3675 = vmul.f32 %v611, %v3611
        %v3676 = vmul.f32 %v614, %v3612
        %v3677 = vmul.f32 %v617, %v3613
        %v3678 = vmul.f32 %v620, %v3614
        %v3679 = vmul.f32 %v623, %v3615
        %v3680 = vmul.f32 %v626, %v3616
        %v3681 = vmul.f32 %v629, %v3617
        %v3682 = vmul.f32 %v632, %v3618
        %v3683 = vmul.f32 %v635, %v3619
        %v3684 = vmul.f32 %v638, %v3620
        %v3685 = vmul.f32 %v641, %v3621
        %v3686 = vmul.f32 %v644, %v3622
        %v3687 = vmul.f32 %v647, %v3623
        %v3688 = vld [vmem:[#allocation2] sm:$0x1]
        %v3689 = vsel %vm1558, %v3624, 0.0
        %v3690 = vsel %vm1558, %v3625, 0.0
        %v3691 = vadd.f32 %v3689, %v3690
        %v3692 = vsel %vm1558, %v3626, 0.0
        %v3693 = vadd.f32 %v3691, %v3692
        %v3694 = vsel %vm1558, %v3627, 0.0
        %v3695 = vadd.f32 %v3693, %v3694
        %v3696 = vsel %vm1558, %v3628, 0.0
        %v3697 = vadd.f32 %v3695, %v3696
        %v3698 = vsel %vm1558, %v3629, 0.0
        %v3699 = vadd.f32 %v3697, %v3698
        %v3700 = vsel %vm1558, %v3630, 0.0
        %v3701 = vadd.f32 %v3699, %v3700
        %v3702 = vsel %vm1558, %v3631, 0.0
        %v3703 = vadd.f32 %v3701, %v3702
        %v3704 = vsel %vm1558, %v3632, 0.0
        %v3705 = vadd.f32 %v3703, %v3704
        %v3706 = vsel %vm1558, %v3633, 0.0
        %v3707 = vadd.f32 %v3705, %v3706
        %v3708 = vsel %vm1558, %v3634, 0.0
        %v3709 = vadd.f32 %v3707, %v3708
        %v3710 = vsel %vm1558, %v3635, 0.0
        %v3711 = vadd.f32 %v3709, %v3710
        %v3712 = vsel %vm1558, %v3636, 0.0
        %v3713 = vadd.f32 %v3711, %v3712
        %v3714 = vsel %vm1558, %v3637, 0.0
        %v3715 = vadd.f32 %v3713, %v3714
        %v3716 = vsel %vm1558, %v3638, 0.0
        %v3717 = vadd.f32 %v3715, %v3716
        %v3718 = vsel %vm1558, %v3639, 0.0
        %v3719 = vadd.f32 %v3717, %v3718
        %v3720 = vsel %vm1558, %v3640, 0.0
        %v3721 = vadd.f32 %v3719, %v3720
        %v3722 = vsel %vm1558, %v3641, 0.0
        %v3723 = vadd.f32 %v3721, %v3722
        %v3724 = vsel %vm1558, %v3642, 0.0
        %v3725 = vadd.f32 %v3723, %v3724
        %v3726 = vsel %vm1558, %v3643, 0.0
        %v3727 = vadd.f32 %v3725, %v3726
        %v3728 = vsel %vm1558, %v3644, 0.0
        %v3729 = vadd.f32 %v3727, %v3728
        %v3730 = vsel %vm1558, %v3645, 0.0
        %v3731 = vadd.f32 %v3729, %v3730
        %v3732 = vsel %vm1558, %v3646, 0.0
        %v3733 = vadd.f32 %v3731, %v3732
        %v3734 = vsel %vm1558, %v3647, 0.0
        %v3735 = vadd.f32 %v3733, %v3734
        %v3736 = vsel %vm1558, %v3648, 0.0
        %v3737 = vadd.f32 %v3735, %v3736
        %v3738 = vsel %vm1558, %v3649, 0.0
        %v3739 = vadd.f32 %v3737, %v3738
        %v3740 = vsel %vm1558, %v3650, 0.0
        %v3741 = vadd.f32 %v3739, %v3740
        %v3742 = vsel %vm1558, %v3651, 0.0
        %v3743 = vadd.f32 %v3741, %v3742
        %v3744 = vsel %vm1558, %v3652, 0.0
        %v3745 = vadd.f32 %v3743, %v3744
        %v3746 = vsel %vm1558, %v3653, 0.0
        %v3747 = vadd.f32 %v3745, %v3746
        %v3748 = vsel %vm1558, %v3654, 0.0
        %v3749 = vadd.f32 %v3747, %v3748
        %v3750 = vsel %vm1558, %v3655, 0.0
        %v3751 = vadd.f32 %v3749, %v3750
        %v3752 = vsel %vm1558, %v3656, 0.0
        %v3753 = vadd.f32 %v3751, %v3752
        %v3754 = vsel %vm1558, %v3657, 0.0
        %v3755 = vadd.f32 %v3753, %v3754
        %v3756 = vsel %vm1558, %v3658, 0.0
        %v3757 = vadd.f32 %v3755, %v3756
        %v3758 = vsel %vm1558, %v3659, 0.0
        %v3759 = vadd.f32 %v3757, %v3758
        %v3760 = vsel %vm1558, %v3660, 0.0
        %v3761 = vadd.f32 %v3759, %v3760
        %v3762 = vsel %vm1558, %v3661, 0.0
        %v3763 = vadd.f32 %v3761, %v3762
        %v3764 = vsel %vm1558, %v3662, 0.0
        %v3765 = vadd.f32 %v3763, %v3764
        %v3766 = vsel %vm1558, %v3663, 0.0
        %v3767 = vadd.f32 %v3765, %v3766
        %v3768 = vsel %vm1558, %v3664, 0.0
        %v3769 = vadd.f32 %v3767, %v3768
        %v3770 = vsel %vm1558, %v3665, 0.0
        %v3771 = vadd.f32 %v3769, %v3770
        %v3772 = vsel %vm1558, %v3666, 0.0
        %v3773 = vadd.f32 %v3771, %v3772
        %v3774 = vsel %vm1558, %v3667, 0.0
        %v3775 = vadd.f32 %v3773, %v3774
        %v3776 = vsel %vm1558, %v3668, 0.0
        %v3777 = vadd.f32 %v3775, %v3776
        %v3778 = vsel %vm1558, %v3669, 0.0
        %v3779 = vadd.f32 %v3777, %v3778
        %v3780 = vsel %vm1558, %v3670, 0.0
        %v3781 = vadd.f32 %v3779, %v3780
        %v3782 = vsel %vm1558, %v3671, 0.0
        %v3783 = vadd.f32 %v3781, %v3782
        %v3784 = vsel %vm1558, %v3672, 0.0
        %v3785 = vadd.f32 %v3783, %v3784
        %v3786 = vsel %vm1558, %v3673, 0.0
        %v3787 = vadd.f32 %v3785, %v3786
        %v3788 = vsel %vm1558, %v3674, 0.0
        %v3789 = vadd.f32 %v3787, %v3788
        %v3790 = vsel %vm1558, %v3675, 0.0
        %v3791 = vadd.f32 %v3789, %v3790
        %v3792 = vsel %vm1558, %v3676, 0.0
        %v3793 = vadd.f32 %v3791, %v3792
        %v3794 = vsel %vm1558, %v3677, 0.0
        %v3795 = vadd.f32 %v3793, %v3794
        %v3796 = vsel %vm1558, %v3678, 0.0
        %v3797 = vadd.f32 %v3795, %v3796
        %v3798 = vsel %vm1558, %v3679, 0.0
        %v3799 = vadd.f32 %v3797, %v3798
        %v3800 = vsel %vm1558, %v3680, 0.0
        %v3801 = vadd.f32 %v3799, %v3800
        %v3802 = vsel %vm1558, %v3681, 0.0
        %v3803 = vadd.f32 %v3801, %v3802
        %v3804 = vsel %vm1558, %v3682, 0.0
        %v3805 = vadd.f32 %v3803, %v3804
        %v3806 = vsel %vm1558, %v3683, 0.0
        %v3807 = vadd.f32 %v3805, %v3806
        %v3808 = vsel %vm1558, %v3684, 0.0
        %v3809 = vadd.f32 %v3807, %v3808
        %v3810 = vsel %vm1558, %v3685, 0.0
        %v3811 = vadd.f32 %v3809, %v3810
        %v3812 = vsel %vm1558, %v3686, 0.0
        %v3813 = vadd.f32 %v3811, %v3812
        %v3814 = vsel %vm1558, %v3687, 0.0
        %v3815 = vadd.f32 %v3813, %v3814
        %v3816 = vrot.slane %v3815, 4
        %v3817 = vadd.f32 %v3815, %v3816
        %v3818 = vrot.slane %v3817, 2
        %v3819 = vadd.f32 %v3817, %v3818
        %v3820 = vrot.slane %v3819, 1
        %v3821 = vadd.f32 %v3819, %v3820
        %v3822 = vadd.f32 %v3688, %v3821
        %vm3823 = vcmask 253952
        %3824 = vst.msk [vmem:[#allocation2] sm:$0x1] %vm3823, %v3822
        %p3825 = scmp.eq.s32.totalorder %s21, 1
        // Predicated region
        $region61: #{tpu_custom_call.1} parent=55 // pred_check
          %p3826 = pneg %p3825
        $region62: #{tpu_custom_call.1} parent=55 // pred_check_branch
          %3828 = sbr.rel (%p3826) target = $region64
        $region63: #{tpu_custom_call.1} parent=55 // pred_region
          %v3829 = vld [vmem:[#allocation2] sm:$0x1]
          %v3830 = vmul.f32 %v3829, 0.0009765625
          %v3831 = vld [vmem:[%s3] sm:$0xff]
          %v3832 = vld [vmem:[%s3 + $0x8] sm:$0xff]
          %v3833 = vld [vmem:[%s3 + $0x10] sm:$0xff]
          %v3834 = vld [vmem:[%s3 + $0x18] sm:$0xff]
          %v3835 = vld [vmem:[%s4] sm:$0x1]
          %v3837 = vsel %vm1558, %v3830, 0
          %3839 = vmatpush.msra.mxu0 0.0
          %3840 = vmatpush.msra.mxu0 0.0
          %3841 = vmatpush.msra.mxu0 0.0
          %3842 = vmatpush.msra.mxu0 0.0
          %3843 = vmatpush.msra.mxu0 0.0
          %3844 = vmatpush.msra.mxu0 0.0
          %3845 = vmatpush.msra.mxu0 0.0
          %3846 = vmatpush.msra.mxu0 0.0
          %3847 = vmatpush.msra.mxu0 0.0
          %3848 = vmatpush.msra.mxu0 0.0
          %3849 = vmatpush.msra.mxu0 0.0
          %3850 = vmatpush.msra.mxu0 0.0
          %3851 = vmatpush.msra.mxu0 %v3834
          %3852 = vmatpush.msra.mxu0 %v3833
          %3853 = vmatpush.msra.mxu0 %v3832
          %3854 = vmatpush.msra.mxu0 %v3831
          %3855 = vmatmul.f32.gmra.mxu0 %v3837
          %v3856 = vpop.f32.mrf.mxu0
          %v3857 = vadd.f32 %v3835, %v3856
          %3858 = vdwg.mxu0
          %v3859 = vmax.f32 %v3857, 0.0
          %v3860 = vld [vmem:[%s5] sm:$0xff]
          %v3861 = vld [vmem:[%s5 + $0x8] sm:$0xff]
          %v3862 = vld [vmem:[%s5 + $0x10] sm:$0xff]
          %v3863 = vld [vmem:[%s5 + $0x18] sm:$0xff]
          %v3864 = vld [vmem:[%s6] sm:$0x1]
          %v3866 = vsel %vm1558, %v3859, 0
          %3868 = vmatpush.msra.mxu0 0.0
          %3869 = vmatpush.msra.mxu0 0.0
          %3870 = vmatpush.msra.mxu0 0.0
          %3871 = vmatpush.msra.mxu0 0.0
          %3872 = vmatpush.msra.mxu0 0.0
          %3873 = vmatpush.msra.mxu0 0.0
          %3874 = vmatpush.msra.mxu0 0.0
          %3875 = vmatpush.msra.mxu0 0.0
          %3876 = vmatpush.msra.mxu0 0.0
          %3877 = vmatpush.msra.mxu0 0.0
          %3878 = vmatpush.msra.mxu0 0.0
          %3879 = vmatpush.msra.mxu0 0.0
          %3880 = vmatpush.msra.mxu0 %v3863
          %3881 = vmatpush.msra.mxu0 %v3862
          %3882 = vmatpush.msra.mxu0 %v3861
          %3883 = vmatpush.msra.mxu0 %v3860
          %3884 = vmatmul.f32.gmra.mxu0 %v3866
          %v3885 = vpop.f32.mrf.mxu0
          %v3886 = vadd.f32 %v3864, %v3885
          %3887 = vdwg.mxu0
          %v3888 = vmax.f32 %v3886, 0.0
          %v3889 = vld [vmem:[%s7] sm:$0xff]
          %v3890 = vld [vmem:[%s7 + $0x8] sm:$0xff]
          %v3891 = vld [vmem:[%s7 + $0x10] sm:$0xff]
          %v3892 = vld [vmem:[%s7 + $0x18] sm:$0xff]
          %v3893 = vld [vmem:[%s8] sm:$0x1]
          %v3895 = vsel %vm1558, %v3888, 0
          %3897 = vmatpush.msra.mxu0 0.0
          %3898 = vmatpush.msra.mxu0 0.0
          %3899 = vmatpush.msra.mxu0 0.0
          %3900 = vmatpush.msra.mxu0 0.0
          %3901 = vmatpush.msra.mxu0 0.0
          %3902 = vmatpush.msra.mxu0 0.0
          %3903 = vmatpush.msra.mxu0 0.0
          %3904 = vmatpush.msra.mxu0 0.0
          %3905 = vmatpush.msra.mxu0 0.0
          %3906 = vmatpush.msra.mxu0 0.0
          %3907 = vmatpush.msra.mxu0 0.0
          %3908 = vmatpush.msra.mxu0 0.0
          %3909 = vmatpush.msra.mxu0 %v3892
          %3910 = vmatpush.msra.mxu0 %v3891
          %3911 = vmatpush.msra.mxu0 %v3890
          %3912 = vmatpush.msra.mxu0 %v3889
          %3913 = vmatmul.f32.gmra.mxu0 %v3895
          %v3914 = vpop.f32.mrf.mxu0
          %v3915 = vadd.f32 %v3893, %v3914
          %3916 = vdwg.mxu0
          %vm3917 = vcmask 122880
          %3918 = vst.msk [vmem:[#allocation3] sm:$0x1] %vm3917, %v3915
        $region64: #{tpu_custom_call.1} parent=55 // pred_fallthru
          _
        // Predicated region
        $region65: #{tpu_custom_call.1} parent=55 // pred_check
          %p3919 = pneg %p228
        $region66: #{tpu_custom_call.1} parent=55 // pred_check_branch
          %3921 = sbr.rel (%p3919) target = $region68
        $region67: #{tpu_custom_call.1} parent=55 // pred_region
          %3923 = vsyncadd [#allocation4], 0
          %s3925 = sshll.u32 [#allocation3], 4
          %s3926 = int_to_ptr.vmem [resolvable:$true] %s3925
          %s3927 = sshll.u32 %s9, 4
          %s3928 = int_to_ptr.hbm [resolvable:$true] %s3927
          %3930 = dma.vmem_to_hbm [thread:$0]  %s3926, 16, %s3928, [#allocation4]
        $region68: #{tpu_custom_call.1} parent=55 // pred_fallthru
          _
        // Predicated region
        $region69: #{tpu_custom_call.1} parent=55 // pred_check
          %p3931 = pneg %p228
        $region70: #{tpu_custom_call.1} parent=55 // pred_check_branch
          %3933 = sbr.rel (%p3931) target = $region72
        $region71: #{tpu_custom_call.1} parent=55 // pred_region
          %3935 = dma.done [#allocation4], 16
        $region72: #{tpu_custom_call.1} parent=55 // pred_fallthru
          _
      $region56: #{tpu_custom_call.1} parent=5 // pred_fallthru
        _
      %p3936 = scmp.le.s32.totalorder 2, %s16
      // Predicated region
      $region73: #{tpu_custom_call.1} parent=5 // pred_check
        %p3937 = pneg %p3936
      $region74: #{tpu_custom_call.1} parent=5 // pred_check_branch
        %3939 = sbr.rel (%p3937) target = $region76
      $region75: #{tpu_custom_call.1} parent=5 // pred_region
        %s3940 = ssub.s32 %s16, 2
      $region76: #{tpu_custom_call.1} parent=5 // pred_fallthru
        _
    $region6: #{tpu_custom_call.1} parent=1 // loop_footer
      %s20 = sadd.s32 1, %s16
    $region7: #{tpu_custom_call.1} parent=1 // loop_footer_branch
      %15 = sbr.rel target = $region3
    $region8: #{tpu_custom_call.1} parent=1 // loop_exit
      _
    %3941 = vsyncpa [#allocation4], 1
    %s3942 = scalar_lea.sflag [#allocation4], 1
    %3943 = vsyncpa %s3942, 1

</llo_original>
